<compile_context>
chip_gen: v7x
topology: tpu7x:2x2x1
jax: 0.10.0
libtpu: 0.0.40
codegen_flags: <defaults>
</compile_context>

<pallas_src>
import numpy as np
import jax
import jax.numpy as jnp
from jax import lax
from jax.experimental import pallas as pl
from jax.experimental.pallas import tpu as pltpu

BORDER_WIDTH = 3


# ---------------------------------------------------------------------------
# Interp-matrix construction (runs as plain XLA in the wrapper, vmapped over
# the per-image boxes).
# ---------------------------------------------------------------------------
def _interp_matrix(out_size: int, in_size: int, start, crop_size):
    """(out_size, in_size) f32 matrix implementing torch bilinear
    (align_corners=False) resize of axis[start : start+crop_size] -> out_size."""
    i = jnp.arange(out_size, dtype=jnp.float32)[:, None]          # (out, 1)
    scale = crop_size.astype(jnp.float32) / float(out_size)
    src = jnp.maximum((i + 0.5) * scale - 0.5, 0.0)               # torch clamps <0 to 0
    r0f = jnp.floor(src)
    lam = src - r0f                                               # (out, 1)
    r0 = r0f.astype(jnp.int32)
    r1 = jnp.minimum(r0 + 1, crop_size - 1)
    idx0 = start + r0                                             # indices into full axis
    idx1 = start + r1
    cols = jnp.arange(in_size, dtype=jnp.int32)[None, :]          # (1, in)
    m = (jnp.where(cols == idx0, 1.0 - lam, 0.0)
         + jnp.where(cols == idx1, lam, 0.0))
    return m.astype(jnp.float32)


# ---------------------------------------------------------------------------
# Kernel: B images per grid step; per image, per channel: two tiny MXU matmuls
# (H-resize then W-resize), one lane-dense full-tile store per image.
# ---------------------------------------------------------------------------
def _upsampler_kernel(img_ref, rh_ref, rwt_ref, out_ref):
    # img_ref: (B, C*H, W)    f32  channel-folded image slab
    # rh_ref:  (B, th, H)     f32  H-resize matrix
    # rwt_ref: (B, W, twp)    f32  W-resize matrix, transposed, lane-padded
    # out_ref: (B, C*th, twp)
    B = img_ref.shape[0]
    th = rh_ref.shape[1]
    H = rh_ref.shape[2]
    C = img_ref.shape[1] // H

    def body(b, carry):
        img_b = img_ref[b].astype(jnp.float32)                    # (C*H, W)
        rh = rh_ref[b]                                            # (th, H)
        rwt = rwt_ref[b]                                          # (W, twp)
        outs = []
        for c in range(C):                                        # static unroll
            img_c = img_b[c * H:(c + 1) * H, :]                   # (H, W), 8-aligned rows
            t = jnp.dot(rh, img_c, preferred_element_type=jnp.float32)   # (th, W)
            o = jnp.dot(t, rwt, preferred_element_type=jnp.float32)      # (th, twp)
            outs.append(o)
        out_ref[b] = jnp.concatenate(outs, axis=0).astype(out_ref.dtype)  # one dense store
        return carry

    lax.fori_loop(0, B, body, 0, unroll=True)


# ---------------------------------------------------------------------------
# Wrapper
# ---------------------------------------------------------------------------
def upsampler_forward(x, f, target_dim=(40, 48), block_n=8):
    """x: (s, g, C, H, W) float32, f: (s, g, 4) int boxes -> (s, g, C, th, tw)."""
    s, g, C, H, W = x.shape
    th, tw = target_dim
    twp = ((tw + 127) // 128) * 128            # lane-dense padded output width
    N = s * g

    x_flat = x.reshape(N, C * H, W)            # channel-folded image slabs
    f_flat = f.reshape(N, 4).astype(jnp.int32)

    # Box adjust + clamp (matches the torch module: exclusive end clamped to dim-1).
    tl_x = jnp.maximum(f_flat[:, 0] - BORDER_WIDTH, 0)
    tl_y = jnp.maximum(f_flat[:, 1] - BORDER_WIDTH, 0)
    br_x = jnp.minimum(f_flat[:, 2] + BORDER_WIDTH, H - 1)
    br_y = jnp.minimum(f_flat[:, 3] + BORDER_WIDTH, W - 1)
    crop_h = jnp.maximum(br_x - tl_x, 1)       # guard degenerate boxes
    crop_w = jnp.maximum(br_y - tl_y, 1)

    # Batched interpolation matrices (hoisted out of the kernel).
    rh = jax.vmap(lambda st, cs: _interp_matrix(th, H, st, cs))(tl_x, crop_h)  # (N, th, H)
    rw = jax.vmap(lambda st, cs: _interp_matrix(tw, W, st, cs))(tl_y, crop_w)  # (N, tw, W)

    # Lane-dense W-resize: zero-pad output-width rows to twp, transpose for a
    # right-multiply: (N, W, twp). Padded columns produce exact zeros.
    rw_pad = jnp.pad(rw, ((0, 0), (0, twp - tw), (0, 0)))
    rwt = jnp.transpose(rw_pad, (0, 2, 1))

    # Batch B images per grid step; pad N up to a multiple of B.
    B = min(block_n, N)
    n_blocks = pl.cdiv(N, B)
    N_pad = n_blocks * B
    if N_pad != N:
        pad = N_pad - N
        x_flat = jnp.pad(x_flat, ((0, pad), (0, 0), (0, 0)))
        rh = jnp.pad(rh, ((0, pad), (0, 0), (0, 0)))
        rwt = jnp.pad(rwt, ((0, pad), (0, 0), (0, 0)))

    out = pl.pallas_call(
        _upsampler_kernel,
        out_shape=jax.ShapeDtypeStruct((N_pad, C * th, twp), x.dtype),
        grid=(n_blocks,),
        in_specs=[
            pl.BlockSpec((B, C * H, W), lambda n: (n, 0, 0)),
            pl.BlockSpec((B, th, H), lambda n: (n, 0, 0)),
            pl.BlockSpec((B, W, twp), lambda n: (n, 0, 0)),
        ],
        out_specs=pl.BlockSpec((B, C * th, twp), lambda n: (n, 0, 0)),
        compiler_params=pltpu.CompilerParams(
            dimension_semantics=("parallel",)),
    )(x_flat, rh, rwt)

    out = out[:N, :, :tw].reshape(N, C, th, tw)
    return out.reshape(s, g, C, th, tw)


# ---------------- pure-numpy reference (torch semantics) ----------------
def _ref_resize_np(crop, out_h, out_w):
    C, ch, cw = crop.shape

    def idx_lam(out_size, in_size):
        i = np.arange(out_size, dtype=np.float64)
        src = np.maximum((i + 0.5) * (in_size / out_size) - 0.5, 0.0)
        r0 = np.floor(src).astype(np.int64)
        lam = (src - r0).astype(np.float32)
        r1 = np.minimum(r0 + 1, in_size - 1)
        return r0, r1, lam

    r0, r1, lh = idx_lam(out_h, ch)
    c0, c1, lw = idx_lam(out_w, cw)
    a = crop[:, r0][:, :, c0] * (1 - lw) + crop[:, r0][:, :, c1] * lw
    b = crop[:, r1][:, :, c0] * (1 - lw) + crop[:, r1][:, :, c1] * lw
    return a * (1 - lh[None, :, None]) + b * lh[None, :, None]


def _ref_forward_np(x, f, target_dim):
    s, g, C, H, W = x.shape
    th, tw = target_dim
    out = np.zeros((s, g, C, th, tw), np.float32)
    for i in range(s):
        for j in range(g):
            tlx, tly, brx, bry = [int(v) for v in f[i, j]]
            tlx = max(tlx - BORDER_WIDTH, 0)
            tly = max(tly - BORDER_WIDTH, 0)
            brx = min(brx + BORDER_WIDTH, H - 1)
            bry = min(bry + BORDER_WIDTH, W - 1)
            crop = x[i, j, :, tlx:brx, tly:bry]
            out[i, j] = _ref_resize_np(crop, th, tw)
    return out


if __name__ == "__main__":
    s, g, C, H, W = 3, 4, 3, 32, 32          # N = 12 -> pads to 16, grid = (2,)
    target_dim = (40, 48)

    key = jax.random.PRNGKey(0)
    kx, ktl, kbr = jax.random.split(key, 3)
    x = jax.random.normal(kx, (s, g, C, H, W), dtype=jnp.float32)
    tl = jax.random.randint(ktl, (s, g, 2), 0, H // 2)          # tl_x, tl_y
    br = jax.random.randint(kbr, (s, g, 2), H // 2 + 2, H)      # br_x, br_y
    f = jnp.concatenate([tl, br], axis=-1).astype(jnp.int32)    # (s, g, 4)

    fwd = jax.jit(upsampler_forward, static_argnames=("target_dim", "block_n"))
    out = fwd(x, f, target_dim=target_dim)
    out = jax.block_until_ready(out)

    ref = _ref_forward_np(np.asarray(x), np.asarray(f), target_dim)
    np.testing.assert_allclose(np.asarray(out), ref, rtol=1e-5, atol=1e-5)

    print("KERNEL_OK")
</pallas_src>

<mosaic_0001>
module attributes {stable_mosaic.version = 11 : i64} {
  func.func @_upsampler_kernel(%arg0: i32, %arg1: memref<8x96x32xf32, #tpu.memory_space<vmem>>, %arg2: memref<8x40x32xf32, #tpu.memory_space<vmem>>, %arg3: memref<8x32x128xf32, #tpu.memory_space<vmem>>, %arg4: memref<8x120x128xf32, #tpu.memory_space<vmem>>) attributes {dimension_semantics = [#tpu.dimension_semantics<parallel>], iteration_bounds = array<i64: 2>, scalar_prefetch = 0 : i64, scratch_operands = 0 : i64, tpu.core_type = #tpu.core_type<tc>, window_params = [{transform_indices = @transform_0, window_bounds = array<i64: 8, 96, 32>}, {transform_indices = @transform_1, window_bounds = array<i64: 8, 40, 32>}, {transform_indices = @transform_2, window_bounds = array<i64: 8, 32, 128>}, {transform_indices = @transform_3, window_bounds = array<i64: 8, 120, 128>}]} {
    %c0_i32 = arith.constant 0 : i32
    %0 = arith.index_cast %c0_i32 : i32 to index
    %c0 = arith.constant 0 : index
    %c0_0 = arith.constant 0 : index
    %1 = vector.load %arg1[%0, %c0, %c0_0] : memref<8x96x32xf32, #tpu.memory_space<vmem>>, vector<1x96x32xf32>
    %2 = vector.shape_cast %1 : vector<1x96x32xf32> to vector<96x32xf32>
    %3 = arith.index_cast %c0_i32 : i32 to index
    %c0_1 = arith.constant 0 : index
    %c0_2 = arith.constant 0 : index
    %4 = vector.load %arg2[%3, %c0_1, %c0_2] : memref<8x40x32xf32, #tpu.memory_space<vmem>>, vector<1x40x32xf32>
    %5 = vector.shape_cast %4 : vector<1x40x32xf32> to vector<40x32xf32>
    %6 = arith.index_cast %c0_i32 : i32 to index
    %c0_3 = arith.constant 0 : index
    %c0_4 = arith.constant 0 : index
    %7 = vector.load %arg3[%6, %c0_3, %c0_4] : memref<8x32x128xf32, #tpu.memory_space<vmem>>, vector<1x32x128xf32>
    %8 = vector.shape_cast %7 : vector<1x32x128xf32> to vector<32x128xf32>
    %9 = vector.extract_strided_slice %2 {offsets = [0, 0], sizes = [32, 32], strides = [1, 1]} : vector<96x32xf32> to vector<32x32xf32>
    %cst = arith.constant dense<0.000000e+00> : vector<40x32xf32>
    %10 = tpu.matmul %5, %9, %cst {dimension_numbers = #tpu.dot_dimension_numbers<[1], [0], [0], [1], [0, 0, 1, 1], [], []>} : vector<40x32xf32>, vector<32x32xf32>, vector<40x32xf32> -> vector<40x32xf32>
    %cst_5 = arith.constant dense<0.000000e+00> : vector<40x128xf32>
    %11 = tpu.matmul %10, %8, %cst_5 {dimension_numbers = #tpu.dot_dimension_numbers<[1], [0], [0], [1], [0, 0, 1, 1], [], []>} : vector<40x32xf32>, vector<32x128xf32>, vector<40x128xf32> -> vector<40x128xf32>
    %12 = vector.extract_strided_slice %2 {offsets = [32, 0], sizes = [32, 32], strides = [1, 1]} : vector<96x32xf32> to vector<32x32xf32>
    %cst_6 = arith.constant dense<0.000000e+00> : vector<40x32xf32>
    %13 = tpu.matmul %5, %12, %cst_6 {dimension_numbers = #tpu.dot_dimension_numbers<[1], [0], [0], [1], [0, 0, 1, 1], [], []>} : vector<40x32xf32>, vector<32x32xf32>, vector<40x32xf32> -> vector<40x32xf32>
    %cst_7 = arith.constant dense<0.000000e+00> : vector<40x128xf32>
    %14 = tpu.matmul %13, %8, %cst_7 {dimension_numbers = #tpu.dot_dimension_numbers<[1], [0], [0], [1], [0, 0, 1, 1], [], []>} : vector<40x32xf32>, vector<32x128xf32>, vector<40x128xf32> -> vector<40x128xf32>
    %15 = vector.extract_strided_slice %2 {offsets = [64, 0], sizes = [32, 32], strides = [1, 1]} : vector<96x32xf32> to vector<32x32xf32>
    %cst_8 = arith.constant dense<0.000000e+00> : vector<40x32xf32>
    %16 = tpu.matmul %5, %15, %cst_8 {dimension_numbers = #tpu.dot_dimension_numbers<[1], [0], [0], [1], [0, 0, 1, 1], [], []>} : vector<40x32xf32>, vector<32x32xf32>, vector<40x32xf32> -> vector<40x32xf32>
    %cst_9 = arith.constant dense<0.000000e+00> : vector<40x128xf32>
    %17 = tpu.matmul %16, %8, %cst_9 {dimension_numbers = #tpu.dot_dimension_numbers<[1], [0], [0], [1], [0, 0, 1, 1], [], []>} : vector<40x32xf32>, vector<32x128xf32>, vector<40x128xf32> -> vector<40x128xf32>
    %18 = tpu.concatenate %11, %14, %17 in 0 : vector<40x128xf32>, vector<40x128xf32>, vector<40x128xf32> -> vector<120x128xf32>
    %19 = arith.index_cast %c0_i32 : i32 to index
    %c0_10 = arith.constant 0 : index
    %c0_11 = arith.constant 0 : index
    %20 = vector.load %arg4[%19, %c0_10, %c0_11] : memref<8x120x128xf32, #tpu.memory_space<vmem>>, vector<1x120x128xf32>
    %21 = vector.shape_cast %20 : vector<1x120x128xf32> to vector<120x128xf32>
    %22 = vector.shape_cast %18 : vector<120x128xf32> to vector<1x120x128xf32>
    tpu.vector_store %arg4[%19, %c0_10, %c0_11], %22 {strides = array<i32>} : memref<8x120x128xf32, #tpu.memory_space<vmem>>, vector<1x120x128xf32>,
    %c1_i32 = arith.constant 1 : i32
    %23 = arith.index_cast %c1_i32 : i32 to index
    %c0_12 = arith.constant 0 : index
    %c0_13 = arith.constant 0 : index
    %24 = vector.load %arg1[%23, %c0_12, %c0_13] : memref<8x96x32xf32, #tpu.memory_space<vmem>>, vector<1x96x32xf32>
    %25 = vector.shape_cast %24 : vector<1x96x32xf32> to vector<96x32xf32>
    %26 = arith.index_cast %c1_i32 : i32 to index
    %c0_14 = arith.constant 0 : index
    %c0_15 = arith.constant 0 : index
    %27 = vector.load %arg2[%26, %c0_14, %c0_15] : memref<8x40x32xf32, #tpu.memory_space<vmem>>, vector<1x40x32xf32>
    %28 = vector.shape_cast %27 : vector<1x40x32xf32> to vector<40x32xf32>
    %29 = arith.index_cast %c1_i32 : i32 to index
    %c0_16 = arith.constant 0 : index
    %c0_17 = arith.constant 0 : index
    %30 = vector.load %arg3[%29, %c0_16, %c0_17] : memref<8x32x128xf32, #tpu.memory_space<vmem>>, vector<1x32x128xf32>
    %31 = vector.shape_cast %30 : vector<1x32x128xf32> to vector<32x128xf32>
    %32 = vector.extract_strided_slice %25 {offsets = [0, 0], sizes = [32, 32], strides = [1, 1]} : vector<96x32xf32> to vector<32x32xf32>
    %cst_18 = arith.constant dense<0.000000e+00> : vector<40x32xf32>
    %33 = tpu.matmul %28, %32, %cst_18 {dimension_numbers = #tpu.dot_dimension_numbers<[1], [0], [0], [1], [0, 0, 1, 1], [], []>} : vector<40x32xf32>, vector<32x32xf32>, vector<40x32xf32> -> vector<40x32xf32>
    %cst_19 = arith.constant dense<0.000000e+00> : vector<40x128xf32>
    %34 = tpu.matmul %33, %31, %cst_19 {dimension_numbers = #tpu.dot_dimension_numbers<[1], [0], [0], [1], [0, 0, 1, 1], [], []>} : vector<40x32xf32>, vector<32x128xf32>, vector<40x128xf32> -> vector<40x128xf32>
    %35 = vector.extract_strided_slice %25 {offsets = [32, 0], sizes = [32, 32], strides = [1, 1]} : vector<96x32xf32> to vector<32x32xf32>
    %cst_20 = arith.constant dense<0.000000e+00> : vector<40x32xf32>
    %36 = tpu.matmul %28, %35, %cst_20 {dimension_numbers = #tpu.dot_dimension_numbers<[1], [0], [0], [1], [0, 0, 1, 1], [], []>} : vector<40x32xf32>, vector<32x32xf32>, vector<40x32xf32> -> vector<40x32xf32>
    %cst_21 = arith.constant dense<0.000000e+00> : vector<40x128xf32>
    %37 = tpu.matmul %36, %31, %cst_21 {dimension_numbers = #tpu.dot_dimension_numbers<[1], [0], [0], [1], [0, 0, 1, 1], [], []>} : vector<40x32xf32>, vector<32x128xf32>, vector<40x128xf32> -> vector<40x128xf32>
    %38 = vector.extract_strided_slice %25 {offsets = [64, 0], sizes = [32, 32], strides = [1, 1]} : vector<96x32xf32> to vector<32x32xf32>
    %cst_22 = arith.constant dense<0.000000e+00> : vector<40x32xf32>
    %39 = tpu.matmul %28, %38, %cst_22 {dimension_numbers = #tpu.dot_dimension_numbers<[1], [0], [0], [1], [0, 0, 1, 1], [], []>} : vector<40x32xf32>, vector<32x32xf32>, vector<40x32xf32> -> vector<40x32xf32>
    %cst_23 = arith.constant dense<0.000000e+00> : vector<40x128xf32>
    %40 = tpu.matmul %39, %31, %cst_23 {dimension_numbers = #tpu.dot_dimension_numbers<[1], [0], [0], [1], [0, 0, 1, 1], [], []>} : vector<40x32xf32>, vector<32x128xf32>, vector<40x128xf32> -> vector<40x128xf32>
    %41 = tpu.concatenate %34, %37, %40 in 0 : vector<40x128xf32>, vector<40x128xf32>, vector<40x128xf32> -> vector<120x128xf32>
    %42 = arith.index_cast %c1_i32 : i32 to index
    %c0_24 = arith.constant 0 : index
    %c0_25 = arith.constant 0 : index
    %43 = vector.load %arg4[%42, %c0_24, %c0_25] : memref<8x120x128xf32, #tpu.memory_space<vmem>>, vector<1x120x128xf32>
    %44 = vector.shape_cast %43 : vector<1x120x128xf32> to vector<120x128xf32>
    %45 = vector.shape_cast %41 : vector<120x128xf32> to vector<1x120x128xf32>
    tpu.vector_store %arg4[%42, %c0_24, %c0_25], %45 {strides = array<i32>} : memref<8x120x128xf32, #tpu.memory_space<vmem>>, vector<1x120x128xf32>,
    %c2_i32 = arith.constant 2 : i32
    %46 = arith.index_cast %c2_i32 : i32 to index
    %c0_26 = arith.constant 0 : index
    %c0_27 = arith.constant 0 : index
    %47 = vector.load %arg1[%46, %c0_26, %c0_27] : memref<8x96x32xf32, #tpu.memory_space<vmem>>, vector<1x96x32xf32>
    %48 = vector.shape_cast %47 : vector<1x96x32xf32> to vector<96x32xf32>
    %49 = arith.index_cast %c2_i32 : i32 to index
    %c0_28 = arith.constant 0 : index
    %c0_29 = arith.constant 0 : index
    %50 = vector.load %arg2[%49, %c0_28, %c0_29] : memref<8x40x32xf32, #tpu.memory_space<vmem>>, vector<1x40x32xf32>
    %51 = vector.shape_cast %50 : vector<1x40x32xf32> to vector<40x32xf32>
    %52 = arith.index_cast %c2_i32 : i32 to index
    %c0_30 = arith.constant 0 : index
    %c0_31 = arith.constant 0 : index
    %53 = vector.load %arg3[%52, %c0_30, %c0_31] : memref<8x32x128xf32, #tpu.memory_space<vmem>>, vector<1x32x128xf32>
    %54 = vector.shape_cast %53 : vector<1x32x128xf32> to vector<32x128xf32>
    %55 = vector.extract_strided_slice %48 {offsets = [0, 0], sizes = [32, 32], strides = [1, 1]} : vector<96x32xf32> to vector<32x32xf32>
    %cst_32 = arith.constant dense<0.000000e+00> : vector<40x32xf32>
    %56 = tpu.matmul %51, %55, %cst_32 {dimension_numbers = #tpu.dot_dimension_numbers<[1], [0], [0], [1], [0, 0, 1, 1], [], []>} : vector<40x32xf32>, vector<32x32xf32>, vector<40x32xf32> -> vector<40x32xf32>
    %cst_33 = arith.constant dense<0.000000e+00> : vector<40x128xf32>
    %57 = tpu.matmul %56, %54, %cst_33 {dimension_numbers = #tpu.dot_dimension_numbers<[1], [0], [0], [1], [0, 0, 1, 1], [], []>} : vector<40x32xf32>, vector<32x128xf32>, vector<40x128xf32> -> vector<40x128xf32>
    %58 = vector.extract_strided_slice %48 {offsets = [32, 0], sizes = [32, 32], strides = [1, 1]} : vector<96x32xf32> to vector<32x32xf32>
    %cst_34 = arith.constant dense<0.000000e+00> : vector<40x32xf32>
    %59 = tpu.matmul %51, %58, %cst_34 {dimension_numbers = #tpu.dot_dimension_numbers<[1], [0], [0], [1], [0, 0, 1, 1], [], []>} : vector<40x32xf32>, vector<32x32xf32>, vector<40x32xf32> -> vector<40x32xf32>
    %cst_35 = arith.constant dense<0.000000e+00> : vector<40x128xf32>
    %60 = tpu.matmul %59, %54, %cst_35 {dimension_numbers = #tpu.dot_dimension_numbers<[1], [0], [0], [1], [0, 0, 1, 1], [], []>} : vector<40x32xf32>, vector<32x128xf32>, vector<40x128xf32> -> vector<40x128xf32>
    %61 = vector.extract_strided_slice %48 {offsets = [64, 0], sizes = [32, 32], strides = [1, 1]} : vector<96x32xf32> to vector<32x32xf32>
    %cst_36 = arith.constant dense<0.000000e+00> : vector<40x32xf32>
    %62 = tpu.matmul %51, %61, %cst_36 {dimension_numbers = #tpu.dot_dimension_numbers<[1], [0], [0], [1], [0, 0, 1, 1], [], []>} : vector<40x32xf32>, vector<32x32xf32>, vector<40x32xf32> -> vector<40x32xf32>
    %cst_37 = arith.constant dense<0.000000e+00> : vector<40x128xf32>
    %63 = tpu.matmul %62, %54, %cst_37 {dimension_numbers = #tpu.dot_dimension_numbers<[1], [0], [0], [1], [0, 0, 1, 1], [], []>} : vector<40x32xf32>, vector<32x128xf32>, vector<40x128xf32> -> vector<40x128xf32>
    %64 = tpu.concatenate %57, %60, %63 in 0 : vector<40x128xf32>, vector<40x128xf32>, vector<40x128xf32> -> vector<120x128xf32>
    %65 = arith.index_cast %c2_i32 : i32 to index
    %c0_38 = arith.constant 0 : index
    %c0_39 = arith.constant 0 : index
    %66 = vector.load %arg4[%65, %c0_38, %c0_39] : memref<8x120x128xf32, #tpu.memory_space<vmem>>, vector<1x120x128xf32>
    %67 = vector.shape_cast %66 : vector<1x120x128xf32> to vector<120x128xf32>
    %68 = vector.shape_cast %64 : vector<120x128xf32> to vector<1x120x128xf32>
    tpu.vector_store %arg4[%65, %c0_38, %c0_39], %68 {strides = array<i32>} : memref<8x120x128xf32, #tpu.memory_space<vmem>>, vector<1x120x128xf32>,
    %c3_i32 = arith.constant 3 : i32
    %69 = arith.index_cast %c3_i32 : i32 to index
    %c0_40 = arith.constant 0 : index
    %c0_41 = arith.constant 0 : index
    %70 = vector.load %arg1[%69, %c0_40, %c0_41] : memref<8x96x32xf32, #tpu.memory_space<vmem>>, vector<1x96x32xf32>
    %71 = vector.shape_cast %70 : vector<1x96x32xf32> to vector<96x32xf32>
    %72 = arith.index_cast %c3_i32 : i32 to index
    %c0_42 = arith.constant 0 : index
    %c0_43 = arith.constant 0 : index
    %73 = vector.load %arg2[%72, %c0_42, %c0_43] : memref<8x40x32xf32, #tpu.memory_space<vmem>>, vector<1x40x32xf32>
    %74 = vector.shape_cast %73 : vector<1x40x32xf32> to vector<40x32xf32>
    %75 = arith.index_cast %c3_i32 : i32 to index
    %c0_44 = arith.constant 0 : index
    %c0_45 = arith.constant 0 : index
    %76 = vector.load %arg3[%75, %c0_44, %c0_45] : memref<8x32x128xf32, #tpu.memory_space<vmem>>, vector<1x32x128xf32>
    %77 = vector.shape_cast %76 : vector<1x32x128xf32> to vector<32x128xf32>
    %78 = vector.extract_strided_slice %71 {offsets = [0, 0], sizes = [32, 32], strides = [1, 1]} : vector<96x32xf32> to vector<32x32xf32>
    %cst_46 = arith.constant dense<0.000000e+00> : vector<40x32xf32>
    %79 = tpu.matmul %74, %78, %cst_46 {dimension_numbers = #tpu.dot_dimension_numbers<[1], [0], [0], [1], [0, 0, 1, 1], [], []>} : vector<40x32xf32>, vector<32x32xf32>, vector<40x32xf32> -> vector<40x32xf32>
    %cst_47 = arith.constant dense<0.000000e+00> : vector<40x128xf32>
    %80 = tpu.matmul %79, %77, %cst_47 {dimension_numbers = #tpu.dot_dimension_numbers<[1], [0], [0], [1], [0, 0, 1, 1], [], []>} : vector<40x32xf32>, vector<32x128xf32>, vector<40x128xf32> -> vector<40x128xf32>
    %81 = vector.extract_strided_slice %71 {offsets = [32, 0], sizes = [32, 32], strides = [1, 1]} : vector<96x32xf32> to vector<32x32xf32>
    %cst_48 = arith.constant dense<0.000000e+00> : vector<40x32xf32>
    %82 = tpu.matmul %74, %81, %cst_48 {dimension_numbers = #tpu.dot_dimension_numbers<[1], [0], [0], [1], [0, 0, 1, 1], [], []>} : vector<40x32xf32>, vector<32x32xf32>, vector<40x32xf32> -> vector<40x32xf32>
    %cst_49 = arith.constant dense<0.000000e+00> : vector<40x128xf32>
    %83 = tpu.matmul %82, %77, %cst_49 {dimension_numbers = #tpu.dot_dimension_numbers<[1], [0], [0], [1], [0, 0, 1, 1], [], []>} : vector<40x32xf32>, vector<32x128xf32>, vector<40x128xf32> -> vector<40x128xf32>
    %84 = vector.extract_strided_slice %71 {offsets = [64, 0], sizes = [32, 32], strides = [1, 1]} : vector<96x32xf32> to vector<32x32xf32>
    %cst_50 = arith.constant dense<0.000000e+00> : vector<40x32xf32>
    %85 = tpu.matmul %74, %84, %cst_50 {dimension_numbers = #tpu.dot_dimension_numbers<[1], [0], [0], [1], [0, 0, 1, 1], [], []>} : vector<40x32xf32>, vector<32x32xf32>, vector<40x32xf32> -> vector<40x32xf32>
    %cst_51 = arith.constant dense<0.000000e+00> : vector<40x128xf32>
    %86 = tpu.matmul %85, %77, %cst_51 {dimension_numbers = #tpu.dot_dimension_numbers<[1], [0], [0], [1], [0, 0, 1, 1], [], []>} : vector<40x32xf32>, vector<32x128xf32>, vector<40x128xf32> -> vector<40x128xf32>
    %87 = tpu.concatenate %80, %83, %86 in 0 : vector<40x128xf32>, vector<40x128xf32>, vector<40x128xf32> -> vector<120x128xf32>
    %88 = arith.index_cast %c3_i32 : i32 to index
    %c0_52 = arith.constant 0 : index
    %c0_53 = arith.constant 0 : index
    %89 = vector.load %arg4[%88, %c0_52, %c0_53] : memref<8x120x128xf32, #tpu.memory_space<vmem>>, vector<1x120x128xf32>
    %90 = vector.shape_cast %89 : vector<1x120x128xf32> to vector<120x128xf32>
    %91 = vector.shape_cast %87 : vector<120x128xf32> to vector<1x120x128xf32>
    tpu.vector_store %arg4[%88, %c0_52, %c0_53], %91 {strides = array<i32>} : memref<8x120x128xf32, #tpu.memory_space<vmem>>, vector<1x120x128xf32>,
    %c4_i32 = arith.constant 4 : i32
    %92 = arith.index_cast %c4_i32 : i32 to index
    %c0_54 = arith.constant 0 : index
    %c0_55 = arith.constant 0 : index
    %93 = vector.load %arg1[%92, %c0_54, %c0_55] : memref<8x96x32xf32, #tpu.memory_space<vmem>>, vector<1x96x32xf32>
    %94 = vector.shape_cast %93 : vector<1x96x32xf32> to vector<96x32xf32>
    %95 = arith.index_cast %c4_i32 : i32 to index
    %c0_56 = arith.constant 0 : index
    %c0_57 = arith.constant 0 : index
    %96 = vector.load %arg2[%95, %c0_56, %c0_57] : memref<8x40x32xf32, #tpu.memory_space<vmem>>, vector<1x40x32xf32>
    %97 = vector.shape_cast %96 : vector<1x40x32xf32> to vector<40x32xf32>
    %98 = arith.index_cast %c4_i32 : i32 to index
    %c0_58 = arith.constant 0 : index
    %c0_59 = arith.constant 0 : index
    %99 = vector.load %arg3[%98, %c0_58, %c0_59] : memref<8x32x128xf32, #tpu.memory_space<vmem>>, vector<1x32x128xf32>
    %100 = vector.shape_cast %99 : vector<1x32x128xf32> to vector<32x128xf32>
    %101 = vector.extract_strided_slice %94 {offsets = [0, 0], sizes = [32, 32], strides = [1, 1]} : vector<96x32xf32> to vector<32x32xf32>
    %cst_60 = arith.constant dense<0.000000e+00> : vector<40x32xf32>
    %102 = tpu.matmul %97, %101, %cst_60 {dimension_numbers = #tpu.dot_dimension_numbers<[1], [0], [0], [1], [0, 0, 1, 1], [], []>} : vector<40x32xf32>, vector<32x32xf32>, vector<40x32xf32> -> vector<40x32xf32>
    %cst_61 = arith.constant dense<0.000000e+00> : vector<40x128xf32>
    %103 = tpu.matmul %102, %100, %cst_61 {dimension_numbers = #tpu.dot_dimension_numbers<[1], [0], [0], [1], [0, 0, 1, 1], [], []>} : vector<40x32xf32>, vector<32x128xf32>, vector<40x128xf32> -> vector<40x128xf32>
    %104 = vector.extract_strided_slice %94 {offsets = [32, 0], sizes = [32, 32], strides = [1, 1]} : vector<96x32xf32> to vector<32x32xf32>
    %cst_62 = arith.constant dense<0.000000e+00> : vector<40x32xf32>
    %105 = tpu.matmul %97, %104, %cst_62 {dimension_numbers = #tpu.dot_dimension_numbers<[1], [0], [0], [1], [0, 0, 1, 1], [], []>} : vector<40x32xf32>, vector<32x32xf32>, vector<40x32xf32> -> vector<40x32xf32>
    %cst_63 = arith.constant dense<0.000000e+00> : vector<40x128xf32>
    %106 = tpu.matmul %105, %100, %cst_63 {dimension_numbers = #tpu.dot_dimension_numbers<[1], [0], [0], [1], [0, 0, 1, 1], [], []>} : vector<40x32xf32>, vector<32x128xf32>, vector<40x128xf32> -> vector<40x128xf32>
    %107 = vector.extract_strided_slice %94 {offsets = [64, 0], sizes = [32, 32], strides = [1, 1]} : vector<96x32xf32> to vector<32x32xf32>
    %cst_64 = arith.constant dense<0.000000e+00> : vector<40x32xf32>
    %108 = tpu.matmul %97, %107, %cst_64 {dimension_numbers = #tpu.dot_dimension_numbers<[1], [0], [0], [1], [0, 0, 1, 1], [], []>} : vector<40x32xf32>, vector<32x32xf32>, vector<40x32xf32> -> vector<40x32xf32>
    %cst_65 = arith.constant dense<0.000000e+00> : vector<40x128xf32>
    %109 = tpu.matmul %108, %100, %cst_65 {dimension_numbers = #tpu.dot_dimension_numbers<[1], [0], [0], [1], [0, 0, 1, 1], [], []>} : vector<40x32xf32>, vector<32x128xf32>, vector<40x128xf32> -> vector<40x128xf32>
    %110 = tpu.concatenate %103, %106, %109 in 0 : vector<40x128xf32>, vector<40x128xf32>, vector<40x128xf32> -> vector<120x128xf32>
    %111 = arith.index_cast %c4_i32 : i32 to index
    %c0_66 = arith.constant 0 : index
    %c0_67 = arith.constant 0 : index
    %112 = vector.load %arg4[%111, %c0_66, %c0_67] : memref<8x120x128xf32, #tpu.memory_space<vmem>>, vector<1x120x128xf32>
    %113 = vector.shape_cast %112 : vector<1x120x128xf32> to vector<120x128xf32>
    %114 = vector.shape_cast %110 : vector<120x128xf32> to vector<1x120x128xf32>
    tpu.vector_store %arg4[%111, %c0_66, %c0_67], %114 {strides = array<i32>} : memref<8x120x128xf32, #tpu.memory_space<vmem>>, vector<1x120x128xf32>,
    %c5_i32 = arith.constant 5 : i32
    %115 = arith.index_cast %c5_i32 : i32 to index
    %c0_68 = arith.constant 0 : index
    %c0_69 = arith.constant 0 : index
    %116 = vector.load %arg1[%115, %c0_68, %c0_69] : memref<8x96x32xf32, #tpu.memory_space<vmem>>, vector<1x96x32xf32>
    %117 = vector.shape_cast %116 : vector<1x96x32xf32> to vector<96x32xf32>
    %118 = arith.index_cast %c5_i32 : i32 to index
    %c0_70 = arith.constant 0 : index
    %c0_71 = arith.constant 0 : index
    %119 = vector.load %arg2[%118, %c0_70, %c0_71] : memref<8x40x32xf32, #tpu.memory_space<vmem>>, vector<1x40x32xf32>
    %120 = vector.shape_cast %119 : vector<1x40x32xf32> to vector<40x32xf32>
    %121 = arith.index_cast %c5_i32 : i32 to index
    %c0_72 = arith.constant 0 : index
    %c0_73 = arith.constant 0 : index
    %122 = vector.load %arg3[%121, %c0_72, %c0_73] : memref<8x32x128xf32, #tpu.memory_space<vmem>>, vector<1x32x128xf32>
    %123 = vector.shape_cast %122 : vector<1x32x128xf32> to vector<32x128xf32>
    %124 = vector.extract_strided_slice %117 {offsets = [0, 0], sizes = [32, 32], strides = [1, 1]} : vector<96x32xf32> to vector<32x32xf32>
    %cst_74 = arith.constant dense<0.000000e+00> : vector<40x32xf32>
    %125 = tpu.matmul %120, %124, %cst_74 {dimension_numbers = #tpu.dot_dimension_numbers<[1], [0], [0], [1], [0, 0, 1, 1], [], []>} : vector<40x32xf32>, vector<32x32xf32>, vector<40x32xf32> -> vector<40x32xf32>
    %cst_75 = arith.constant dense<0.000000e+00> : vector<40x128xf32>
    %126 = tpu.matmul %125, %123, %cst_75 {dimension_numbers = #tpu.dot_dimension_numbers<[1], [0], [0], [1], [0, 0, 1, 1], [], []>} : vector<40x32xf32>, vector<32x128xf32>, vector<40x128xf32> -> vector<40x128xf32>
    %127 = vector.extract_strided_slice %117 {offsets = [32, 0], sizes = [32, 32], strides = [1, 1]} : vector<96x32xf32> to vector<32x32xf32>
    %cst_76 = arith.constant dense<0.000000e+00> : vector<40x32xf32>
    %128 = tpu.matmul %120, %127, %cst_76 {dimension_numbers = #tpu.dot_dimension_numbers<[1], [0], [0], [1], [0, 0, 1, 1], [], []>} : vector<40x32xf32>, vector<32x32xf32>, vector<40x32xf32> -> vector<40x32xf32>
    %cst_77 = arith.constant dense<0.000000e+00> : vector<40x128xf32>
    %129 = tpu.matmul %128, %123, %cst_77 {dimension_numbers = #tpu.dot_dimension_numbers<[1], [0], [0], [1], [0, 0, 1, 1], [], []>} : vector<40x32xf32>, vector<32x128xf32>, vector<40x128xf32> -> vector<40x128xf32>
    %130 = vector.extract_strided_slice %117 {offsets = [64, 0], sizes = [32, 32], strides = [1, 1]} : vector<96x32xf32> to vector<32x32xf32>
    %cst_78 = arith.constant dense<0.000000e+00> : vector<40x32xf32>
    %131 = tpu.matmul %120, %130, %cst_78 {dimension_numbers = #tpu.dot_dimension_numbers<[1], [0], [0], [1], [0, 0, 1, 1], [], []>} : vector<40x32xf32>, vector<32x32xf32>, vector<40x32xf32> -> vector<40x32xf32>
    %cst_79 = arith.constant dense<0.000000e+00> : vector<40x128xf32>
    %132 = tpu.matmul %131, %123, %cst_79 {dimension_numbers = #tpu.dot_dimension_numbers<[1], [0], [0], [1], [0, 0, 1, 1], [], []>} : vector<40x32xf32>, vector<32x128xf32>, vector<40x128xf32> -> vector<40x128xf32>
    %133 = tpu.concatenate %126, %129, %132 in 0 : vector<40x128xf32>, vector<40x128xf32>, vector<40x128xf32> -> vector<120x128xf32>
    %134 = arith.index_cast %c5_i32 : i32 to index
    %c0_80 = arith.constant 0 : index
    %c0_81 = arith.constant 0 : index
    %135 = vector.load %arg4[%134, %c0_80, %c0_81] : memref<8x120x128xf32, #tpu.memory_space<vmem>>, vector<1x120x128xf32>
    %136 = vector.shape_cast %135 : vector<1x120x128xf32> to vector<120x128xf32>
    %137 = vector.shape_cast %133 : vector<120x128xf32> to vector<1x120x128xf32>
    tpu.vector_store %arg4[%134, %c0_80, %c0_81], %137 {strides = array<i32>} : memref<8x120x128xf32, #tpu.memory_space<vmem>>, vector<1x120x128xf32>,
    %c6_i32 = arith.constant 6 : i32
    %138 = arith.index_cast %c6_i32 : i32 to index
    %c0_82 = arith.constant 0 : index
    %c0_83 = arith.constant 0 : index
    %139 = vector.load %arg1[%138, %c0_82, %c0_83] : memref<8x96x32xf32, #tpu.memory_space<vmem>>, vector<1x96x32xf32>
    %140 = vector.shape_cast %139 : vector<1x96x32xf32> to vector<96x32xf32>
    %141 = arith.index_cast %c6_i32 : i32 to index
    %c0_84 = arith.constant 0 : index
    %c0_85 = arith.constant 0 : index
    %142 = vector.load %arg2[%141, %c0_84, %c0_85] : memref<8x40x32xf32, #tpu.memory_space<vmem>>, vector<1x40x32xf32>
    %143 = vector.shape_cast %142 : vector<1x40x32xf32> to vector<40x32xf32>
    %144 = arith.index_cast %c6_i32 : i32 to index
    %c0_86 = arith.constant 0 : index
    %c0_87 = arith.constant 0 : index
    %145 = vector.load %arg3[%144, %c0_86, %c0_87] : memref<8x32x128xf32, #tpu.memory_space<vmem>>, vector<1x32x128xf32>
    %146 = vector.shape_cast %145 : vector<1x32x128xf32> to vector<32x128xf32>
    %147 = vector.extract_strided_slice %140 {offsets = [0, 0], sizes = [32, 32], strides = [1, 1]} : vector<96x32xf32> to vector<32x32xf32>
    %cst_88 = arith.constant dense<0.000000e+00> : vector<40x32xf32>
    %148 = tpu.matmul %143, %147, %cst_88 {dimension_numbers = #tpu.dot_dimension_numbers<[1], [0], [0], [1], [0, 0, 1, 1], [], []>} : vector<40x32xf32>, vector<32x32xf32>, vector<40x32xf32> -> vector<40x32xf32>
    %cst_89 = arith.constant dense<0.000000e+00> : vector<40x128xf32>
    %149 = tpu.matmul %148, %146, %cst_89 {dimension_numbers = #tpu.dot_dimension_numbers<[1], [0], [0], [1], [0, 0, 1, 1], [], []>} : vector<40x32xf32>, vector<32x128xf32>, vector<40x128xf32> -> vector<40x128xf32>
    %150 = vector.extract_strided_slice %140 {offsets = [32, 0], sizes = [32, 32], strides = [1, 1]} : vector<96x32xf32> to vector<32x32xf32>
    %cst_90 = arith.constant dense<0.000000e+00> : vector<40x32xf32>
    %151 = tpu.matmul %143, %150, %cst_90 {dimension_numbers = #tpu.dot_dimension_numbers<[1], [0], [0], [1], [0, 0, 1, 1], [], []>} : vector<40x32xf32>, vector<32x32xf32>, vector<40x32xf32> -> vector<40x32xf32>
    %cst_91 = arith.constant dense<0.000000e+00> : vector<40x128xf32>
    %152 = tpu.matmul %151, %146, %cst_91 {dimension_numbers = #tpu.dot_dimension_numbers<[1], [0], [0], [1], [0, 0, 1, 1], [], []>} : vector<40x32xf32>, vector<32x128xf32>, vector<40x128xf32> -> vector<40x128xf32>
    %153 = vector.extract_strided_slice %140 {offsets = [64, 0], sizes = [32, 32], strides = [1, 1]} : vector<96x32xf32> to vector<32x32xf32>
    %cst_92 = arith.constant dense<0.000000e+00> : vector<40x32xf32>
    %154 = tpu.matmul %143, %153, %cst_92 {dimension_numbers = #tpu.dot_dimension_numbers<[1], [0], [0], [1], [0, 0, 1, 1], [], []>} : vector<40x32xf32>, vector<32x32xf32>, vector<40x32xf32> -> vector<40x32xf32>
    %cst_93 = arith.constant dense<0.000000e+00> : vector<40x128xf32>
    %155 = tpu.matmul %154, %146, %cst_93 {dimension_numbers = #tpu.dot_dimension_numbers<[1], [0], [0], [1], [0, 0, 1, 1], [], []>} : vector<40x32xf32>, vector<32x128xf32>, vector<40x128xf32> -> vector<40x128xf32>
    %156 = tpu.concatenate %149, %152, %155 in 0 : vector<40x128xf32>, vector<40x128xf32>, vector<40x128xf32> -> vector<120x128xf32>
    %157 = arith.index_cast %c6_i32 : i32 to index
    %c0_94 = arith.constant 0 : index
    %c0_95 = arith.constant 0 : index
    %158 = vector.load %arg4[%157, %c0_94, %c0_95] : memref<8x120x128xf32, #tpu.memory_space<vmem>>, vector<1x120x128xf32>
    %159 = vector.shape_cast %158 : vector<1x120x128xf32> to vector<120x128xf32>
    %160 = vector.shape_cast %156 : vector<120x128xf32> to vector<1x120x128xf32>
    tpu.vector_store %arg4[%157, %c0_94, %c0_95], %160 {strides = array<i32>} : memref<8x120x128xf32, #tpu.memory_space<vmem>>, vector<1x120x128xf32>,
    %c7_i32 = arith.constant 7 : i32
    %161 = arith.index_cast %c7_i32 : i32 to index
    %c0_96 = arith.constant 0 : index
    %c0_97 = arith.constant 0 : index
    %162 = vector.load %arg1[%161, %c0_96, %c0_97] : memref<8x96x32xf32, #tpu.memory_space<vmem>>, vector<1x96x32xf32>
    %163 = vector.shape_cast %162 : vector<1x96x32xf32> to vector<96x32xf32>
    %164 = arith.index_cast %c7_i32 : i32 to index
    %c0_98 = arith.constant 0 : index
    %c0_99 = arith.constant 0 : index
    %165 = vector.load %arg2[%164, %c0_98, %c0_99] : memref<8x40x32xf32, #tpu.memory_space<vmem>>, vector<1x40x32xf32>
    %166 = vector.shape_cast %165 : vector<1x40x32xf32> to vector<40x32xf32>
    %167 = arith.index_cast %c7_i32 : i32 to index
    %c0_100 = arith.constant 0 : index
    %c0_101 = arith.constant 0 : index
    %168 = vector.load %arg3[%167, %c0_100, %c0_101] : memref<8x32x128xf32, #tpu.memory_space<vmem>>, vector<1x32x128xf32>
    %169 = vector.shape_cast %168 : vector<1x32x128xf32> to vector<32x128xf32>
    %170 = vector.extract_strided_slice %163 {offsets = [0, 0], sizes = [32, 32], strides = [1, 1]} : vector<96x32xf32> to vector<32x32xf32>
    %cst_102 = arith.constant dense<0.000000e+00> : vector<40x32xf32>
    %171 = tpu.matmul %166, %170, %cst_102 {dimension_numbers = #tpu.dot_dimension_numbers<[1], [0], [0], [1], [0, 0, 1, 1], [], []>} : vector<40x32xf32>, vector<32x32xf32>, vector<40x32xf32> -> vector<40x32xf32>
    %cst_103 = arith.constant dense<0.000000e+00> : vector<40x128xf32>
    %172 = tpu.matmul %171, %169, %cst_103 {dimension_numbers = #tpu.dot_dimension_numbers<[1], [0], [0], [1], [0, 0, 1, 1], [], []>} : vector<40x32xf32>, vector<32x128xf32>, vector<40x128xf32> -> vector<40x128xf32>
    %173 = vector.extract_strided_slice %163 {offsets = [32, 0], sizes = [32, 32], strides = [1, 1]} : vector<96x32xf32> to vector<32x32xf32>
    %cst_104 = arith.constant dense<0.000000e+00> : vector<40x32xf32>
    %174 = tpu.matmul %166, %173, %cst_104 {dimension_numbers = #tpu.dot_dimension_numbers<[1], [0], [0], [1], [0, 0, 1, 1], [], []>} : vector<40x32xf32>, vector<32x32xf32>, vector<40x32xf32> -> vector<40x32xf32>
    %cst_105 = arith.constant dense<0.000000e+00> : vector<40x128xf32>
    %175 = tpu.matmul %174, %169, %cst_105 {dimension_numbers = #tpu.dot_dimension_numbers<[1], [0], [0], [1], [0, 0, 1, 1], [], []>} : vector<40x32xf32>, vector<32x128xf32>, vector<40x128xf32> -> vector<40x128xf32>
    %176 = vector.extract_strided_slice %163 {offsets = [64, 0], sizes = [32, 32], strides = [1, 1]} : vector<96x32xf32> to vector<32x32xf32>
    %cst_106 = arith.constant dense<0.000000e+00> : vector<40x32xf32>
    %177 = tpu.matmul %166, %176, %cst_106 {dimension_numbers = #tpu.dot_dimension_numbers<[1], [0], [0], [1], [0, 0, 1, 1], [], []>} : vector<40x32xf32>, vector<32x32xf32>, vector<40x32xf32> -> vector<40x32xf32>
    %cst_107 = arith.constant dense<0.000000e+00> : vector<40x128xf32>
    %178 = tpu.matmul %177, %169, %cst_107 {dimension_numbers = #tpu.dot_dimension_numbers<[1], [0], [0], [1], [0, 0, 1, 1], [], []>} : vector<40x32xf32>, vector<32x128xf32>, vector<40x128xf32> -> vector<40x128xf32>
    %179 = tpu.concatenate %172, %175, %178 in 0 : vector<40x128xf32>, vector<40x128xf32>, vector<40x128xf32> -> vector<120x128xf32>
    %180 = arith.index_cast %c7_i32 : i32 to index
    %c0_108 = arith.constant 0 : index
    %c0_109 = arith.constant 0 : index
    %181 = vector.load %arg4[%180, %c0_108, %c0_109] : memref<8x120x128xf32, #tpu.memory_space<vmem>>, vector<1x120x128xf32>
    %182 = vector.shape_cast %181 : vector<1x120x128xf32> to vector<120x128xf32>
    %183 = vector.shape_cast %179 : vector<120x128xf32> to vector<1x120x128xf32>
    tpu.vector_store %arg4[%180, %c0_108, %c0_109], %183 {strides = array<i32>} : memref<8x120x128xf32, #tpu.memory_space<vmem>>, vector<1x120x128xf32>,
    %c8_i32 = arith.constant 8 : i32
    return
  }
  func.func @transform_0(%arg0: i32) -> (i32, i32, i32) {
    %c0_i32 = arith.constant 0 : i32
    %c0_i32_0 = arith.constant 0 : i32
    %c0_i32_1 = arith.constant 0 : i32
    return %arg0, %c0_i32, %c0_i32_0 : i32, i32, i32
  }
  func.func @transform_1(%arg0: i32) -> (i32, i32, i32) {
    %c0_i32 = arith.constant 0 : i32
    %c0_i32_0 = arith.constant 0 : i32
    %c0_i32_1 = arith.constant 0 : i32
    return %arg0, %c0_i32, %c0_i32_0 : i32, i32, i32
  }
  func.func @transform_2(%arg0: i32) -> (i32, i32, i32) {
    %c0_i32 = arith.constant 0 : i32
    %c0_i32_0 = arith.constant 0 : i32
    %c0_i32_1 = arith.constant 0 : i32
    return %arg0, %c0_i32, %c0_i32_0 : i32, i32, i32
  }
  func.func @transform_3(%arg0: i32) -> (i32, i32, i32) {
    %c0_i32 = arith.constant 0 : i32
    %c0_i32_0 = arith.constant 0 : i32
    %c0_i32_1 = arith.constant 0 : i32
    return %arg0, %c0_i32, %c0_i32_0 : i32, i32, i32
  }
}

</mosaic_0001>

<llo_original>
// kernel: upsampler_forward.1
$region0: #{upsampler_forward.1}
  #allocation0 [shape = 'u32[]', space=smem, size = 0x4, offset = 0x4, fixed_abs, tag = 'smem constant byte address 0x4 - core index']
  #allocation1 [shape = 'u32[144,128]{1,0:T(1,128)}', space=vmem, size = 0x12000, scoped, tag = 'internal scratch']
  %s0 = inlined_call_operand.vmem [shape: f32[16,96,32], index: 0, kind: input, shape index: {}]
  %s1 = inlined_call_operand.vmem [shape: f32[16,40,32], index: 1, kind: input, shape index: {}]
  %s2 = inlined_call_operand.vmem [shape: f32[16,32,128], index: 2, kind: input, shape index: {}]
  %s3 = inlined_call_operand.vmem [shape: f32[16,120,128], index: 3, kind: output, shape index: {}]
  %s4 = sld [smem:[#allocation0]]
  $region45: #{upsampler_forward.1} parent=0
    _
  %s6 = ssub.s32 1, %s4
  %s7 = scalar_select 0, %s6, %s4
  loop: start=0, step=1, limit=4
  $region2: #{upsampler_forward.1} parent=0 // loop_pre_header
    _
  $region3: #{upsampler_forward.1} parent=0 // loop_header
    %s9 = sphi 0, %s13
    %p10 = scmp.ge.s32.totalorder %s9, 4
    %s19 = sphi 0, %s21
    %s22 = sphi 0, %s19
    %s23 = sphi 0, %s22
    %s39 = sphi 0, %s23
    %s45 = sphi 0, %s47
    %s48 = sphi 0, %s45
    %s49 = sphi 0, %s48
    %s65 = sphi 0, %s49
    %s71 = sphi 0, %s73
    %s74 = sphi 0, %s71
    %s75 = sphi 0, %s74
    %s91 = sphi 0, %s75
    %s97 = sphi 0, %s99
    %s100 = sphi 0, %s97
    %s101 = sphi 0, %s100
    %s117 = sphi 0, %s101
  $region4: #{upsampler_forward.1} parent=0 // loop_header_branch
    %12 = sbr.rel (%p10) target = $region8
  $region5: #{upsampler_forward.1} parent=0 // loop_body
    %s14 = ssub.s32 %s9, 1
    %s15 = ssub.s32 %s9, 2
    %s16 = sadd.s32 %s9, 1
    %s17 = ssub.s32 %s9, %s16
    %p18 = scmp.eq.s32.totalorder %s17, 0
    %s20 = sadd.s32 %s19, 1
    %s21 = scalar_select %p18, %s19, %s20
    %p24 = pneg %p18
    %p25 = scmp.eq.s32.totalorder %s9, 1
    %p26 = por %p24, %p25
    %p27 = scmp.ne.s32.totalorder %s19, %s22
    %p28 = scmp.eq.s32.totalorder %s9, 0
    %p29 = por %p27, %p28
    %p30 = scmp.ne.s32.totalorder %s19, %s22
    %p31 = scmp.eq.s32.totalorder %s14, 1
    %p32 = por %p30, %p31
    %p33 = scmp.ne.s32.totalorder %s22, %s23
    %p34 = scmp.eq.s32.totalorder %s14, 0
    %p35 = por %p33, %p34
    %p36 = scmp.ne.s32.totalorder %s22, %s23
    %p37 = scmp.eq.s32.totalorder %s15, 1
    %p38 = por %p36, %p37
    %p40 = scmp.ne.s32.totalorder %s23, %s39
    %p41 = scmp.eq.s32.totalorder %s15, 0
    %p42 = por %p40, %p41
    %s43 = ssub.s32 %s9, %s16
    %p44 = scmp.eq.s32.totalorder %s43, 0
    %s46 = sadd.s32 %s45, 1
    %s47 = scalar_select %p44, %s45, %s46
    %p50 = pneg %p44
    %p51 = scmp.eq.s32.totalorder %s9, 1
    %p52 = por %p50, %p51
    %p53 = scmp.ne.s32.totalorder %s45, %s48
    %p54 = scmp.eq.s32.totalorder %s9, 0
    %p55 = por %p53, %p54
    %p56 = scmp.ne.s32.totalorder %s45, %s48
    %p57 = scmp.eq.s32.totalorder %s14, 1
    %p58 = por %p56, %p57
    %p59 = scmp.ne.s32.totalorder %s48, %s49
    %p60 = scmp.eq.s32.totalorder %s14, 0
    %p61 = por %p59, %p60
    %p62 = scmp.ne.s32.totalorder %s48, %s49
    %p63 = scmp.eq.s32.totalorder %s15, 1
    %p64 = por %p62, %p63
    %p66 = scmp.ne.s32.totalorder %s49, %s65
    %p67 = scmp.eq.s32.totalorder %s15, 0
    %p68 = por %p66, %p67
    %s69 = ssub.s32 %s9, %s16
    %p70 = scmp.eq.s32.totalorder %s69, 0
    %s72 = sadd.s32 %s71, 1
    %s73 = scalar_select %p70, %s71, %s72
    %p76 = pneg %p70
    %p77 = scmp.eq.s32.totalorder %s9, 1
    %p78 = por %p76, %p77
    %p79 = scmp.ne.s32.totalorder %s71, %s74
    %p80 = scmp.eq.s32.totalorder %s9, 0
    %p81 = por %p79, %p80
    %p82 = scmp.ne.s32.totalorder %s71, %s74
    %p83 = scmp.eq.s32.totalorder %s14, 1
    %p84 = por %p82, %p83
    %p85 = scmp.ne.s32.totalorder %s74, %s75
    %p86 = scmp.eq.s32.totalorder %s14, 0
    %p87 = por %p85, %p86
    %p88 = scmp.ne.s32.totalorder %s74, %s75
    %p89 = scmp.eq.s32.totalorder %s15, 1
    %p90 = por %p88, %p89
    %p92 = scmp.ne.s32.totalorder %s75, %s91
    %p93 = scmp.eq.s32.totalorder %s15, 0
    %p94 = por %p92, %p93
    %s95 = ssub.s32 %s9, %s16
    %p96 = scmp.eq.s32.totalorder %s95, 0
    %s98 = sadd.s32 %s97, 1
    %s99 = scalar_select %p96, %s97, %s98
    %p102 = pneg %p96
    %p103 = scmp.eq.s32.totalorder %s9, 1
    %p104 = por %p102, %p103
    %p105 = scmp.ne.s32.totalorder %s97, %s100
    %p106 = scmp.eq.s32.totalorder %s9, 0
    %p107 = por %p105, %p106
    %p108 = scmp.ne.s32.totalorder %s97, %s100
    %p109 = scmp.eq.s32.totalorder %s14, 1
    %p110 = por %p108, %p109
    %p111 = scmp.ne.s32.totalorder %s100, %s101
    %p112 = scmp.eq.s32.totalorder %s14, 0
    %p113 = por %p111, %p112
    %p114 = scmp.ne.s32.totalorder %s100, %s101
    %p115 = scmp.eq.s32.totalorder %s15, 1
    %p116 = por %p114, %p115
    %p118 = scmp.ne.s32.totalorder %s101, %s117
    %p119 = scmp.eq.s32.totalorder %s15, 0
    %p120 = por %p118, %p119
    %p121 = scmp.le.s32.totalorder 1, %s9
    %p122 = scmp.lt.s32.totalorder %s9, 3
    %p123 = pnand %p121, %p122
    %p124 = pneg %p123
    // Predicated region
    $region9: #{upsampler_forward.1} parent=5 // pred_check
      _
    $region10: #{upsampler_forward.1} parent=5 // pred_check_branch
      %126 = sbr.rel (%p123) target = $region12
    $region11: #{upsampler_forward.1} parent=5 // pred_region
      %s127 = ssub.s32 %s9, 1
    $region12: #{upsampler_forward.1} parent=5 // pred_fallthru
      _
    %p128 = scmp.lt.s32.totalorder %s9, 2
    // Predicated region
    $region13: #{upsampler_forward.1} parent=5 // pred_check
      %p129 = pneg %p128
    $region14: #{upsampler_forward.1} parent=5 // pred_check_branch
      %131 = sbr.rel (%p129) target = $region16
    $region15: #{upsampler_forward.1} parent=5 // pred_region
      // Predicated region
      $region17: #{upsampler_forward.1} parent=15 // pred_check
        %p132 = pneg %p29
      $region18: #{upsampler_forward.1} parent=15 // pred_check_branch
        %134 = sbr.rel (%p132) target = $region20
      $region19: #{upsampler_forward.1} parent=15 // pred_region
        %s135 = smul.u32 8, %s9
        %p136 = scmp.lt.s32.totalorder %s135, 15
        %s137 = scalar_select %p136, %s135, 15
        %s138 = smul.addr %s137, 12
        %s139 = smul.addr %s138, 8
        %s140 = scalar_lea.vmem %s0, %s139
        %s141 = smul.u32 8, %s9
      $region20: #{upsampler_forward.1} parent=15 // pred_fallthru
        _
      // Predicated region
      $region21: #{upsampler_forward.1} parent=15 // pred_check
        %p142 = pneg %p55
      $region22: #{upsampler_forward.1} parent=15 // pred_check_branch
        %144 = sbr.rel (%p142) target = $region24
      $region23: #{upsampler_forward.1} parent=15 // pred_region
        %s145 = smul.u32 8, %s9
        %p146 = scmp.lt.s32.totalorder %s145, 15
        %s147 = scalar_select %p146, %s145, 15
        %s148 = smul.addr %s147, 5
        %s149 = smul.addr %s148, 8
        %s150 = scalar_lea.vmem %s1, %s149
        %s151 = smul.u32 8, %s9
      $region24: #{upsampler_forward.1} parent=15 // pred_fallthru
        _
      // Predicated region
      $region25: #{upsampler_forward.1} parent=15 // pred_check
        %p152 = pneg %p81
      $region26: #{upsampler_forward.1} parent=15 // pred_check_branch
        %154 = sbr.rel (%p152) target = $region28
      $region27: #{upsampler_forward.1} parent=15 // pred_region
        %s155 = smul.u32 8, %s9
        %p156 = scmp.lt.s32.totalorder %s155, 15
        %s157 = scalar_select %p156, %s155, 15
        %s158 = smul.addr %s157, 4
        %s159 = smul.addr %s158, 8
        %s160 = scalar_lea.vmem %s2, %s159
        %s161 = smul.u32 8, %s9
      $region28: #{upsampler_forward.1} parent=15 // pred_fallthru
        _
    $region16: #{upsampler_forward.1} parent=5 // pred_fallthru
      _
    %p162 = scmp.le.s32.totalorder 1, %s9
    %p163 = scmp.lt.s32.totalorder %s9, 3
    %p164 = pnand %p162, %p163
    %p165 = pneg %p164
    // Predicated region
    $region29: #{upsampler_forward.1} parent=5 // pred_check
      _
    $region30: #{upsampler_forward.1} parent=5 // pred_check_branch
      %167 = sbr.rel (%p164) target = $region32
    $region31: #{upsampler_forward.1} parent=5 // pred_region
      %s168 = ssub.s32 %s9, 1
      %s169 = smul.u32 8, %s14
      %p170 = scmp.lt.s32.totalorder %s169, 15
      %s171 = scalar_select %p170, %s169, 15
      %s172 = smul.addr %s171, 12
      %s173 = smul.addr %s172, 8
      %s174 = scalar_lea.vmem %s0, %s173
      %p175 = pneg %p35
      %p176 = pneg %p32
      %s177 = smul.u32 8, %s14
      %p178 = scmp.lt.s32.totalorder %s177, 15
      %s179 = scalar_select %p178, %s177, 15
      %s180 = smul.addr %s179, 5
      %s181 = smul.addr %s180, 8
      %s182 = scalar_lea.vmem %s1, %s181
      %p183 = pneg %p61
      %p184 = pneg %p58
      %s185 = smul.u32 8, %s14
      %p186 = scmp.lt.s32.totalorder %s185, 15
      %s187 = scalar_select %p186, %s185, 15
      %s188 = smul.addr %s187, 4
      %s189 = smul.addr %s188, 8
      %s190 = scalar_lea.vmem %s2, %s189
      %p191 = pneg %p87
      %p192 = pneg %p84
      %p193 = pneg %p113
      %p194 = pneg %p110
      %s195 = smul.u32 8, %s14
      %p196 = scmp.lt.s32.totalorder %s195, 15
      %s197 = scalar_select %p196, %s195, 15
      %s198 = smul.addr %s197, 15
      %s199 = smul.addr %s198, 8
      %s200 = scalar_lea.vmem %s3, %s199
      %s201 = smul.u32 8, %s14
      %p202 = scmp.lt.s32.totalorder %s201, 15
      %s203 = scalar_select %p202, %s201, 15
      %s204 = smul.addr %s203, 12
      %s205 = smul.addr %s204, 8
      %s206 = scalar_lea.vmem %s0, %s205
      %s207 = smul.u32 8, %s14
      %s208 = smul.u32 8, %s14
      %p209 = scmp.lt.s32.totalorder %s208, 15
      %s210 = scalar_select %p209, %s208, 15
      %s211 = smul.addr %s210, 5
      %s212 = smul.addr %s211, 8
      %s213 = scalar_lea.vmem %s1, %s212
      %s214 = smul.u32 8, %s14
      %s215 = smul.u32 8, %s14
      %p216 = scmp.lt.s32.totalorder %s215, 15
      %s217 = scalar_select %p216, %s215, 15
      %s218 = smul.addr %s217, 4
      %s219 = smul.addr %s218, 8
      %s220 = scalar_lea.vmem %s2, %s219
      %s221 = smul.u32 8, %s14
      %s222 = smul.u32 8, %s14
      %p223 = scmp.lt.s32.totalorder %s222, 15
      %s224 = scalar_select %p223, %s222, 15
      %s225 = smul.addr %s224, 15
      %s226 = smul.addr %s225, 8
      %s227 = scalar_lea.vmem %s3, %s226
      %s228 = smul.u32 8, %s14
      %v229 = vld [vmem:[%s206] sm:$0xff]
      %v230 = vld [vmem:[%s206 + $0x8] sm:$0xff]
      %v231 = vld [vmem:[%s206 + $0x10] sm:$0xff]
      %v232 = vld [vmem:[%s206 + $0x18] sm:$0xff]
      %v233 = vld [vmem:[%s206 + $0x20] sm:$0xff]
      %v234 = vld [vmem:[%s206 + $0x28] sm:$0xff]
      %v235 = vld [vmem:[%s206 + $0x30] sm:$0xff]
      %v236 = vld [vmem:[%s206 + $0x38] sm:$0xff]
      %v237 = vld [vmem:[%s206 + $0x40] sm:$0xff]
      %v238 = vld [vmem:[%s206 + $0x48] sm:$0xff]
      %v239 = vld [vmem:[%s206 + $0x50] sm:$0xff]
      %v240 = vld [vmem:[%s206 + $0x58] sm:$0xff]
      %v241 = vld [vmem:[%s213] sm:$0xff]
      %v242 = vld [vmem:[%s213 + $0x8] sm:$0xff]
      %v243 = vld [vmem:[%s213 + $0x10] sm:$0xff]
      %v244 = vld [vmem:[%s213 + $0x18] sm:$0xff]
      %v245 = vld [vmem:[%s213 + $0x20] sm:$0xff]
      %v246 = vld [vmem:[%s220] sm:$0xff]
      %v247 = vld [vmem:[%s220 + $0x8] sm:$0xff]
      %v248 = vld [vmem:[%s220 + $0x10] sm:$0xff]
      %v249 = vld [vmem:[%s220 + $0x18] sm:$0xff]
      %vm250 = vcmask 261120
      %v252 = vsel %vm250, %v241, 0
      %v255 = vsel %vm250, %v242, 0
      %v258 = vsel %vm250, %v243, 0
      %v261 = vsel %vm250, %v244, 0
      %v264 = vsel %vm250, %v245, 0
      %266 = vmatprep.subr.mxu0 0.0
      %267 = vmatpush1.msra.mxu0 %v229
      %268 = vmatprep.subr.mxu0 0.0
      %269 = vmatpush1.msra.mxu0 %v230
      %270 = vmatprep.subr.mxu0 0.0
      %271 = vmatpush1.msra.mxu0 %v231
      %272 = vmatprep.subr.mxu0 0.0
      %273 = vmatpush1.msra.mxu0 %v232
      %274 = vmatprep.subr.mxu0 0.0
      %275 = vmatpush1.msra.mxu0 0.0
      %276 = vmatprep.subr.mxu0 0.0
      %277 = vmatpush1.msra.mxu0 0.0
      %278 = vmatprep.subr.mxu0 0.0
      %279 = vmatpush1.msra.mxu0 0.0
      %280 = vmatprep.subr.mxu0 0.0
      %281 = vmatpush1.msra.mxu0 0.0
      %282 = vmatprep.subr.mxu0 0.0
      %283 = vmatpush1.msra.mxu0 0.0
      %284 = vmatprep.subr.mxu0 0.0
      %285 = vmatpush1.msra.mxu0 0.0
      %286 = vmatprep.subr.mxu0 0.0
      %287 = vmatpush1.msra.mxu0 0.0
      %288 = vmatprep.subr.mxu0 0.0
      %289 = vmatpush1.msra.mxu0 0.0
      %290 = vmatprep.subr.mxu0 0.0
      %291 = vmatpush1.msra.mxu0 0.0
      %292 = vmatprep.subr.mxu0 0.0
      %293 = vmatpush1.msra.mxu0 0.0
      %294 = vmatprep.subr.mxu0 0.0
      %295 = vmatpush1.msra.mxu0 0.0
      %296 = vmatprep.subr.mxu0 0.0
      %297 = vmatpush1.msra.mxu0 0.0
      %298 = vmatprep.subr.mxu0 0.0
      %299 = vmatpush1.msra.mxu0 0.0
      %300 = vmatprep.subr.mxu0 0.0
      %301 = vmatpush1.msra.mxu0 0.0
      %302 = vmatprep.subr.mxu0 0.0
      %303 = vmatpush1.msra.mxu0 0.0
      %304 = vmatprep.subr.mxu0 0.0
      %305 = vmatpush1.msra.mxu0 0.0
      %306 = vmatprep.subr.mxu0 0.0
      %307 = vmatpush1.msra.mxu0 0.0
      %308 = vmatprep.subr.mxu0 0.0
      %309 = vmatpush1.msra.mxu0 0.0
      %310 = vmatprep.subr.mxu0 0.0
      %311 = vmatpush1.msra.mxu0 0.0
      %312 = vmatprep.subr.mxu0 0.0
      %313 = vmatpush1.msra.mxu0 0.0
      %314 = vmatprep.subr.mxu0 0.0
      %315 = vmatpush1.msra.mxu0 0.0
      %316 = vmatprep.subr.mxu0 0.0
      %317 = vmatpush1.msra.mxu0 0.0
      %318 = vmatprep.subr.mxu0 0.0
      %319 = vmatpush1.msra.mxu0 0.0
      %320 = vmatprep.subr.mxu0 0.0
      %321 = vmatpush1.msra.mxu0 0.0
      %322 = vmatprep.subr.mxu0 0.0
      %323 = vmatpush1.msra.mxu0 0.0
      %324 = vmatprep.subr.mxu0 0.0
      %325 = vmatpush1.msra.mxu0 0.0
      %326 = vmatprep.subr.mxu0 0.0
      %327 = vmatpush1.msra.mxu0 0.0
      %328 = vmatprep.subr.mxu0 0.0
      %329 = vmatpush1.msra.mxu0 0.0
      %330 = vmatprep.mubr.f32.mxu0 0.0
      %331 = vmatmul.mubr.f32.gmra.mrb[0].mxu0 %v252
      %v332 = vpop.f32.mrb[0].mxu0
      %v333 = vadd.f32 0.0, %v332
      %v334 = vpop.f32.mrb[0].mxu0
      %335 = vmatprep.mubr.f32.mxu0 0.0
      %336 = vmatmul.mubr.f32.gmra.mrb[0].mxu0 %v255
      %v337 = vpop.f32.mrb[0].mxu0
      %v338 = vadd.f32 0.0, %v337
      %v339 = vpop.f32.mrb[0].mxu0
      %340 = vmatprep.mubr.f32.mxu0 0.0
      %341 = vmatmul.mubr.f32.gmra.mrb[0].mxu0 %v258
      %v342 = vpop.f32.mrb[0].mxu0
      %v343 = vadd.f32 0.0, %v342
      %v344 = vpop.f32.mrb[0].mxu0
      %345 = vmatprep.mubr.f32.mxu0 0.0
      %346 = vmatmul.mubr.f32.gmra.mrb[0].mxu0 %v261
      %v347 = vpop.f32.mrb[0].mxu0
      %v348 = vadd.f32 0.0, %v347
      %v349 = vpop.f32.mrb[0].mxu0
      %350 = vmatprep.mubr.f32.mxu0 0.0
      %351 = vmatmul.mubr.f32.gmra.mrb[0].mxu0 %v264
      %v352 = vpop.f32.mrb[0].mxu0
      %v353 = vadd.f32 0.0, %v352
      %v354 = vpop.f32.mrb[0].mxu0
      %355 = vdwg.mxu0
      %v357 = vsel %vm250, %v333, 0
      %v360 = vsel %vm250, %v338, 0
      %v363 = vsel %vm250, %v343, 0
      %v366 = vsel %vm250, %v348, 0
      %v369 = vsel %vm250, %v353, 0
      %371 = vmatprep.subr.mxu0 0.0
      %372 = vmatpush1.msra.mxu0 %v246
      %373 = vmatprep.subr.mxu0 0.0
      %374 = vmatpush1.msra.mxu0 %v247
      %375 = vmatprep.subr.mxu0 0.0
      %376 = vmatpush1.msra.mxu0 %v248
      %377 = vmatprep.subr.mxu0 0.0
      %378 = vmatpush1.msra.mxu0 %v249
      %379 = vmatprep.subr.mxu0 0.0
      %380 = vmatpush1.msra.mxu0 0.0
      %381 = vmatprep.subr.mxu0 0.0
      %382 = vmatpush1.msra.mxu0 0.0
      %383 = vmatprep.subr.mxu0 0.0
      %384 = vmatpush1.msra.mxu0 0.0
      %385 = vmatprep.subr.mxu0 0.0
      %386 = vmatpush1.msra.mxu0 0.0
      %387 = vmatprep.subr.mxu0 0.0
      %388 = vmatpush1.msra.mxu0 0.0
      %389 = vmatprep.subr.mxu0 0.0
      %390 = vmatpush1.msra.mxu0 0.0
      %391 = vmatprep.subr.mxu0 0.0
      %392 = vmatpush1.msra.mxu0 0.0
      %393 = vmatprep.subr.mxu0 0.0
      %394 = vmatpush1.msra.mxu0 0.0
      %395 = vmatprep.subr.mxu0 0.0
      %396 = vmatpush1.msra.mxu0 0.0
      %397 = vmatprep.subr.mxu0 0.0
      %398 = vmatpush1.msra.mxu0 0.0
      %399 = vmatprep.subr.mxu0 0.0
      %400 = vmatpush1.msra.mxu0 0.0
      %401 = vmatprep.subr.mxu0 0.0
      %402 = vmatpush1.msra.mxu0 0.0
      %403 = vmatprep.subr.mxu0 0.0
      %404 = vmatpush1.msra.mxu0 0.0
      %405 = vmatprep.subr.mxu0 0.0
      %406 = vmatpush1.msra.mxu0 0.0
      %407 = vmatprep.subr.mxu0 0.0
      %408 = vmatpush1.msra.mxu0 0.0
      %409 = vmatprep.subr.mxu0 0.0
      %410 = vmatpush1.msra.mxu0 0.0
      %411 = vmatprep.subr.mxu0 0.0
      %412 = vmatpush1.msra.mxu0 0.0
      %413 = vmatprep.subr.mxu0 0.0
      %414 = vmatpush1.msra.mxu0 0.0
      %415 = vmatprep.subr.mxu0 0.0
      %416 = vmatpush1.msra.mxu0 0.0
      %417 = vmatprep.subr.mxu0 0.0
      %418 = vmatpush1.msra.mxu0 0.0
      %419 = vmatprep.subr.mxu0 0.0
      %420 = vmatpush1.msra.mxu0 0.0
      %421 = vmatprep.subr.mxu0 0.0
      %422 = vmatpush1.msra.mxu0 0.0
      %423 = vmatprep.subr.mxu0 0.0
      %424 = vmatpush1.msra.mxu0 0.0
      %425 = vmatprep.subr.mxu0 0.0
      %426 = vmatpush1.msra.mxu0 0.0
      %427 = vmatprep.subr.mxu0 0.0
      %428 = vmatpush1.msra.mxu0 0.0
      %429 = vmatprep.subr.mxu0 0.0
      %430 = vmatpush1.msra.mxu0 0.0
      %431 = vmatprep.subr.mxu0 0.0
      %432 = vmatpush1.msra.mxu0 0.0
      %433 = vmatprep.subr.mxu0 0.0
      %434 = vmatpush1.msra.mxu0 0.0
      %435 = vmatprep.mubr.f32.mxu0 0.0
      %436 = vmatmul.mubr.f32.gmra.mrb[0].mxu0 %v357
      %v437 = vpop.f32.mrb[0].mxu0
      %v438 = vadd.f32 0.0, %v437
      %v439 = vpop.f32.mrb[0].mxu0
      %440 = vmatprep.mubr.f32.mxu0 0.0
      %441 = vmatmul.mubr.f32.gmra.mrb[0].mxu0 %v360
      %v442 = vpop.f32.mrb[0].mxu0
      %v443 = vadd.f32 0.0, %v442
      %v444 = vpop.f32.mrb[0].mxu0
      %445 = vmatprep.mubr.f32.mxu0 0.0
      %446 = vmatmul.mubr.f32.gmra.mrb[0].mxu0 %v363
      %v447 = vpop.f32.mrb[0].mxu0
      %v448 = vadd.f32 0.0, %v447
      %v449 = vpop.f32.mrb[0].mxu0
      %450 = vmatprep.mubr.f32.mxu0 0.0
      %451 = vmatmul.mubr.f32.gmra.mrb[0].mxu0 %v366
      %v452 = vpop.f32.mrb[0].mxu0
      %v453 = vadd.f32 0.0, %v452
      %v454 = vpop.f32.mrb[0].mxu0
      %455 = vmatprep.mubr.f32.mxu0 0.0
      %456 = vmatmul.mubr.f32.gmra.mrb[0].mxu0 %v369
      %v457 = vpop.f32.mrb[0].mxu0
      %v458 = vadd.f32 0.0, %v457
      %v459 = vpop.f32.mrb[0].mxu0
      %460 = vdwg.mxu0
      %461 = vmatprep.subr.mxu0 0.0
      %462 = vmatpush1.msra.mxu0 %v233
      %463 = vmatprep.subr.mxu0 0.0
      %464 = vmatpush1.msra.mxu0 %v234
      %465 = vmatprep.subr.mxu0 0.0
      %466 = vmatpush1.msra.mxu0 %v235
      %467 = vmatprep.subr.mxu0 0.0
      %468 = vmatpush1.msra.mxu0 %v236
      %469 = vmatprep.subr.mxu0 0.0
      %470 = vmatpush1.msra.mxu0 0.0
      %471 = vmatprep.subr.mxu0 0.0
      %472 = vmatpush1.msra.mxu0 0.0
      %473 = vmatprep.subr.mxu0 0.0
      %474 = vmatpush1.msra.mxu0 0.0
      %475 = vmatprep.subr.mxu0 0.0
      %476 = vmatpush1.msra.mxu0 0.0
      %477 = vmatprep.subr.mxu0 0.0
      %478 = vmatpush1.msra.mxu0 0.0
      %479 = vmatprep.subr.mxu0 0.0
      %480 = vmatpush1.msra.mxu0 0.0
      %481 = vmatprep.subr.mxu0 0.0
      %482 = vmatpush1.msra.mxu0 0.0
      %483 = vmatprep.subr.mxu0 0.0
      %484 = vmatpush1.msra.mxu0 0.0
      %485 = vmatprep.subr.mxu0 0.0
      %486 = vmatpush1.msra.mxu0 0.0
      %487 = vmatprep.subr.mxu0 0.0
      %488 = vmatpush1.msra.mxu0 0.0
      %489 = vmatprep.subr.mxu0 0.0
      %490 = vmatpush1.msra.mxu0 0.0
      %491 = vmatprep.subr.mxu0 0.0
      %492 = vmatpush1.msra.mxu0 0.0
      %493 = vmatprep.subr.mxu0 0.0
      %494 = vmatpush1.msra.mxu0 0.0
      %495 = vmatprep.subr.mxu0 0.0
      %496 = vmatpush1.msra.mxu0 0.0
      %497 = vmatprep.subr.mxu0 0.0
      %498 = vmatpush1.msra.mxu0 0.0
      %499 = vmatprep.subr.mxu0 0.0
      %500 = vmatpush1.msra.mxu0 0.0
      %501 = vmatprep.subr.mxu0 0.0
      %502 = vmatpush1.msra.mxu0 0.0
      %503 = vmatprep.subr.mxu0 0.0
      %504 = vmatpush1.msra.mxu0 0.0
      %505 = vmatprep.subr.mxu0 0.0
      %506 = vmatpush1.msra.mxu0 0.0
      %507 = vmatprep.subr.mxu0 0.0
      %508 = vmatpush1.msra.mxu0 0.0
      %509 = vmatprep.subr.mxu0 0.0
      %510 = vmatpush1.msra.mxu0 0.0
      %511 = vmatprep.subr.mxu0 0.0
      %512 = vmatpush1.msra.mxu0 0.0
      %513 = vmatprep.subr.mxu0 0.0
      %514 = vmatpush1.msra.mxu0 0.0
      %515 = vmatprep.subr.mxu0 0.0
      %516 = vmatpush1.msra.mxu0 0.0
      %517 = vmatprep.subr.mxu0 0.0
      %518 = vmatpush1.msra.mxu0 0.0
      %519 = vmatprep.subr.mxu0 0.0
      %520 = vmatpush1.msra.mxu0 0.0
      %521 = vmatprep.subr.mxu0 0.0
      %522 = vmatpush1.msra.mxu0 0.0
      %523 = vmatprep.subr.mxu0 0.0
      %524 = vmatpush1.msra.mxu0 0.0
      %525 = vmatprep.mubr.f32.mxu0 0.0
      %526 = vmatmul.mubr.f32.gmra.mrb[0].mxu0 %v252
      %v527 = vpop.f32.mrb[0].mxu0
      %v528 = vadd.f32 0.0, %v527
      %v529 = vpop.f32.mrb[0].mxu0
      %530 = vmatprep.mubr.f32.mxu0 0.0
      %531 = vmatmul.mubr.f32.gmra.mrb[0].mxu0 %v255
      %v532 = vpop.f32.mrb[0].mxu0
      %v533 = vadd.f32 0.0, %v532
      %v534 = vpop.f32.mrb[0].mxu0
      %535 = vmatprep.mubr.f32.mxu0 0.0
      %536 = vmatmul.mubr.f32.gmra.mrb[0].mxu0 %v258
      %v537 = vpop.f32.mrb[0].mxu0
      %v538 = vadd.f32 0.0, %v537
      %v539 = vpop.f32.mrb[0].mxu0
      %540 = vmatprep.mubr.f32.mxu0 0.0
      %541 = vmatmul.mubr.f32.gmra.mrb[0].mxu0 %v261
      %v542 = vpop.f32.mrb[0].mxu0
      %v543 = vadd.f32 0.0, %v542
      %v544 = vpop.f32.mrb[0].mxu0
      %545 = vmatprep.mubr.f32.mxu0 0.0
      %546 = vmatmul.mubr.f32.gmra.mrb[0].mxu0 %v264
      %v547 = vpop.f32.mrb[0].mxu0
      %v548 = vadd.f32 0.0, %v547
      %v549 = vpop.f32.mrb[0].mxu0
      %550 = vdwg.mxu0
      %v552 = vsel %vm250, %v528, 0
      %v555 = vsel %vm250, %v533, 0
      %v558 = vsel %vm250, %v538, 0
      %v561 = vsel %vm250, %v543, 0
      %v564 = vsel %vm250, %v548, 0
      %566 = vmatprep.subr.mxu0 0.0
      %567 = vmatpush1.msra.mxu0 %v246
      %568 = vmatprep.subr.mxu0 0.0
      %569 = vmatpush1.msra.mxu0 %v247
      %570 = vmatprep.subr.mxu0 0.0
      %571 = vmatpush1.msra.mxu0 %v248
      %572 = vmatprep.subr.mxu0 0.0
      %573 = vmatpush1.msra.mxu0 %v249
      %574 = vmatprep.subr.mxu0 0.0
      %575 = vmatpush1.msra.mxu0 0.0
      %576 = vmatprep.subr.mxu0 0.0
      %577 = vmatpush1.msra.mxu0 0.0
      %578 = vmatprep.subr.mxu0 0.0
      %579 = vmatpush1.msra.mxu0 0.0
      %580 = vmatprep.subr.mxu0 0.0
      %581 = vmatpush1.msra.mxu0 0.0
      %582 = vmatprep.subr.mxu0 0.0
      %583 = vmatpush1.msra.mxu0 0.0
      %584 = vmatprep.subr.mxu0 0.0
      %585 = vmatpush1.msra.mxu0 0.0
      %586 = vmatprep.subr.mxu0 0.0
      %587 = vmatpush1.msra.mxu0 0.0
      %588 = vmatprep.subr.mxu0 0.0
      %589 = vmatpush1.msra.mxu0 0.0
      %590 = vmatprep.subr.mxu0 0.0
      %591 = vmatpush1.msra.mxu0 0.0
      %592 = vmatprep.subr.mxu0 0.0
      %593 = vmatpush1.msra.mxu0 0.0
      %594 = vmatprep.subr.mxu0 0.0
      %595 = vmatpush1.msra.mxu0 0.0
      %596 = vmatprep.subr.mxu0 0.0
      %597 = vmatpush1.msra.mxu0 0.0
      %598 = vmatprep.subr.mxu0 0.0
      %599 = vmatpush1.msra.mxu0 0.0
      %600 = vmatprep.subr.mxu0 0.0
      %601 = vmatpush1.msra.mxu0 0.0
      %602 = vmatprep.subr.mxu0 0.0
      %603 = vmatpush1.msra.mxu0 0.0
      %604 = vmatprep.subr.mxu0 0.0
      %605 = vmatpush1.msra.mxu0 0.0
      %606 = vmatprep.subr.mxu0 0.0
      %607 = vmatpush1.msra.mxu0 0.0
      %608 = vmatprep.subr.mxu0 0.0
      %609 = vmatpush1.msra.mxu0 0.0
      %610 = vmatprep.subr.mxu0 0.0
      %611 = vmatpush1.msra.mxu0 0.0
      %612 = vmatprep.subr.mxu0 0.0
      %613 = vmatpush1.msra.mxu0 0.0
      %614 = vmatprep.subr.mxu0 0.0
      %615 = vmatpush1.msra.mxu0 0.0
      %616 = vmatprep.subr.mxu0 0.0
      %617 = vmatpush1.msra.mxu0 0.0
      %618 = vmatprep.subr.mxu0 0.0
      %619 = vmatpush1.msra.mxu0 0.0
      %620 = vmatprep.subr.mxu0 0.0
      %621 = vmatpush1.msra.mxu0 0.0
      %622 = vmatprep.subr.mxu0 0.0
      %623 = vmatpush1.msra.mxu0 0.0
      %624 = vmatprep.subr.mxu0 0.0
      %625 = vmatpush1.msra.mxu0 0.0
      %626 = vmatprep.subr.mxu0 0.0
      %627 = vmatpush1.msra.mxu0 0.0
      %628 = vmatprep.subr.mxu0 0.0
      %629 = vmatpush1.msra.mxu0 0.0
      %630 = vmatprep.mubr.f32.mxu0 0.0
      %631 = vmatmul.mubr.f32.gmra.mrb[0].mxu0 %v552
      %v632 = vpop.f32.mrb[0].mxu0
      %v633 = vadd.f32 0.0, %v632
      %v634 = vpop.f32.mrb[0].mxu0
      %635 = vmatprep.mubr.f32.mxu0 0.0
      %636 = vmatmul.mubr.f32.gmra.mrb[0].mxu0 %v555
      %v637 = vpop.f32.mrb[0].mxu0
      %v638 = vadd.f32 0.0, %v637
      %v639 = vpop.f32.mrb[0].mxu0
      %640 = vmatprep.mubr.f32.mxu0 0.0
      %641 = vmatmul.mubr.f32.gmra.mrb[0].mxu0 %v558
      %v642 = vpop.f32.mrb[0].mxu0
      %v643 = vadd.f32 0.0, %v642
      %v644 = vpop.f32.mrb[0].mxu0
      %645 = vmatprep.mubr.f32.mxu0 0.0
      %646 = vmatmul.mubr.f32.gmra.mrb[0].mxu0 %v561
      %v647 = vpop.f32.mrb[0].mxu0
      %v648 = vadd.f32 0.0, %v647
      %v649 = vpop.f32.mrb[0].mxu0
      %650 = vmatprep.mubr.f32.mxu0 0.0
      %651 = vmatmul.mubr.f32.gmra.mrb[0].mxu0 %v564
      %v652 = vpop.f32.mrb[0].mxu0
      %v653 = vadd.f32 0.0, %v652
      %v654 = vpop.f32.mrb[0].mxu0
      %655 = vdwg.mxu0
      %656 = vmatprep.subr.mxu0 0.0
      %657 = vmatpush1.msra.mxu0 %v237
      %658 = vmatprep.subr.mxu0 0.0
      %659 = vmatpush1.msra.mxu0 %v238
      %660 = vmatprep.subr.mxu0 0.0
      %661 = vmatpush1.msra.mxu0 %v239
      %662 = vmatprep.subr.mxu0 0.0
      %663 = vmatpush1.msra.mxu0 %v240
      %664 = vmatprep.subr.mxu0 0.0
      %665 = vmatpush1.msra.mxu0 0.0
      %666 = vmatprep.subr.mxu0 0.0
      %667 = vmatpush1.msra.mxu0 0.0
      %668 = vmatprep.subr.mxu0 0.0
      %669 = vmatpush1.msra.mxu0 0.0
      %670 = vmatprep.subr.mxu0 0.0
      %671 = vmatpush1.msra.mxu0 0.0
      %672 = vmatprep.subr.mxu0 0.0
      %673 = vmatpush1.msra.mxu0 0.0
      %674 = vmatprep.subr.mxu0 0.0
      %675 = vmatpush1.msra.mxu0 0.0
      %676 = vmatprep.subr.mxu0 0.0
      %677 = vmatpush1.msra.mxu0 0.0
      %678 = vmatprep.subr.mxu0 0.0
      %679 = vmatpush1.msra.mxu0 0.0
      %680 = vmatprep.subr.mxu0 0.0
      %681 = vmatpush1.msra.mxu0 0.0
      %682 = vmatprep.subr.mxu0 0.0
      %683 = vmatpush1.msra.mxu0 0.0
      %684 = vmatprep.subr.mxu0 0.0
      %685 = vmatpush1.msra.mxu0 0.0
      %686 = vmatprep.subr.mxu0 0.0
      %687 = vmatpush1.msra.mxu0 0.0
      %688 = vmatprep.subr.mxu0 0.0
      %689 = vmatpush1.msra.mxu0 0.0
      %690 = vmatprep.subr.mxu0 0.0
      %691 = vmatpush1.msra.mxu0 0.0
      %692 = vmatprep.subr.mxu0 0.0
      %693 = vmatpush1.msra.mxu0 0.0
      %694 = vmatprep.subr.mxu0 0.0
      %695 = vmatpush1.msra.mxu0 0.0
      %696 = vmatprep.subr.mxu0 0.0
      %697 = vmatpush1.msra.mxu0 0.0
      %698 = vmatprep.subr.mxu0 0.0
      %699 = vmatpush1.msra.mxu0 0.0
      %700 = vmatprep.subr.mxu0 0.0
      %701 = vmatpush1.msra.mxu0 0.0
      %702 = vmatprep.subr.mxu0 0.0
      %703 = vmatpush1.msra.mxu0 0.0
      %704 = vmatprep.subr.mxu0 0.0
      %705 = vmatpush1.msra.mxu0 0.0
      %706 = vmatprep.subr.mxu0 0.0
      %707 = vmatpush1.msra.mxu0 0.0
      %708 = vmatprep.subr.mxu0 0.0
      %709 = vmatpush1.msra.mxu0 0.0
      %710 = vmatprep.subr.mxu0 0.0
      %711 = vmatpush1.msra.mxu0 0.0
      %712 = vmatprep.subr.mxu0 0.0
      %713 = vmatpush1.msra.mxu0 0.0
      %714 = vmatprep.subr.mxu0 0.0
      %715 = vmatpush1.msra.mxu0 0.0
      %716 = vmatprep.subr.mxu0 0.0
      %717 = vmatpush1.msra.mxu0 0.0
      %718 = vmatprep.subr.mxu0 0.0
      %719 = vmatpush1.msra.mxu0 0.0
      %720 = vmatprep.mubr.f32.mxu0 0.0
      %721 = vmatmul.mubr.f32.gmra.mrb[0].mxu0 %v252
      %v722 = vpop.f32.mrb[0].mxu0
      %v723 = vadd.f32 0.0, %v722
      %v724 = vpop.f32.mrb[0].mxu0
      %725 = vmatprep.mubr.f32.mxu0 0.0
      %726 = vmatmul.mubr.f32.gmra.mrb[0].mxu0 %v255
      %v727 = vpop.f32.mrb[0].mxu0
      %v728 = vadd.f32 0.0, %v727
      %v729 = vpop.f32.mrb[0].mxu0
      %730 = vmatprep.mubr.f32.mxu0 0.0
      %731 = vmatmul.mubr.f32.gmra.mrb[0].mxu0 %v258
      %v732 = vpop.f32.mrb[0].mxu0
      %v733 = vadd.f32 0.0, %v732
      %v734 = vpop.f32.mrb[0].mxu0
      %735 = vmatprep.mubr.f32.mxu0 0.0
      %736 = vmatmul.mubr.f32.gmra.mrb[0].mxu0 %v261
      %v737 = vpop.f32.mrb[0].mxu0
      %v738 = vadd.f32 0.0, %v737
      %v739 = vpop.f32.mrb[0].mxu0
      %740 = vmatprep.mubr.f32.mxu0 0.0
      %741 = vmatmul.mubr.f32.gmra.mrb[0].mxu0 %v264
      %v742 = vpop.f32.mrb[0].mxu0
      %v743 = vadd.f32 0.0, %v742
      %v744 = vpop.f32.mrb[0].mxu0
      %745 = vdwg.mxu0
      %v747 = vsel %vm250, %v723, 0
      %v750 = vsel %vm250, %v728, 0
      %v753 = vsel %vm250, %v733, 0
      %v756 = vsel %vm250, %v738, 0
      %v759 = vsel %vm250, %v743, 0
      %761 = vmatprep.subr.mxu0 0.0
      %762 = vmatpush1.msra.mxu0 %v246
      %763 = vmatprep.subr.mxu0 0.0
      %764 = vmatpush1.msra.mxu0 %v247
      %765 = vmatprep.subr.mxu0 0.0
      %766 = vmatpush1.msra.mxu0 %v248
      %767 = vmatprep.subr.mxu0 0.0
      %768 = vmatpush1.msra.mxu0 %v249
      %769 = vmatprep.subr.mxu0 0.0
      %770 = vmatpush1.msra.mxu0 0.0
      %771 = vmatprep.subr.mxu0 0.0
      %772 = vmatpush1.msra.mxu0 0.0
      %773 = vmatprep.subr.mxu0 0.0
      %774 = vmatpush1.msra.mxu0 0.0
      %775 = vmatprep.subr.mxu0 0.0
      %776 = vmatpush1.msra.mxu0 0.0
      %777 = vmatprep.subr.mxu0 0.0
      %778 = vmatpush1.msra.mxu0 0.0
      %779 = vmatprep.subr.mxu0 0.0
      %780 = vmatpush1.msra.mxu0 0.0
      %781 = vmatprep.subr.mxu0 0.0
      %782 = vmatpush1.msra.mxu0 0.0
      %783 = vmatprep.subr.mxu0 0.0
      %784 = vmatpush1.msra.mxu0 0.0
      %785 = vmatprep.subr.mxu0 0.0
      %786 = vmatpush1.msra.mxu0 0.0
      %787 = vmatprep.subr.mxu0 0.0
      %788 = vmatpush1.msra.mxu0 0.0
      %789 = vmatprep.subr.mxu0 0.0
      %790 = vmatpush1.msra.mxu0 0.0
      %791 = vmatprep.subr.mxu0 0.0
      %792 = vmatpush1.msra.mxu0 0.0
      %793 = vmatprep.subr.mxu0 0.0
      %794 = vmatpush1.msra.mxu0 0.0
      %795 = vmatprep.subr.mxu0 0.0
      %796 = vmatpush1.msra.mxu0 0.0
      %797 = vmatprep.subr.mxu0 0.0
      %798 = vmatpush1.msra.mxu0 0.0
      %799 = vmatprep.subr.mxu0 0.0
      %800 = vmatpush1.msra.mxu0 0.0
      %801 = vmatprep.subr.mxu0 0.0
      %802 = vmatpush1.msra.mxu0 0.0
      %803 = vmatprep.subr.mxu0 0.0
      %804 = vmatpush1.msra.mxu0 0.0
      %805 = vmatprep.subr.mxu0 0.0
      %806 = vmatpush1.msra.mxu0 0.0
      %807 = vmatprep.subr.mxu0 0.0
      %808 = vmatpush1.msra.mxu0 0.0
      %809 = vmatprep.subr.mxu0 0.0
      %810 = vmatpush1.msra.mxu0 0.0
      %811 = vmatprep.subr.mxu0 0.0
      %812 = vmatpush1.msra.mxu0 0.0
      %813 = vmatprep.subr.mxu0 0.0
      %814 = vmatpush1.msra.mxu0 0.0
      %815 = vmatprep.subr.mxu0 0.0
      %816 = vmatpush1.msra.mxu0 0.0
      %817 = vmatprep.subr.mxu0 0.0
      %818 = vmatpush1.msra.mxu0 0.0
      %819 = vmatprep.subr.mxu0 0.0
      %820 = vmatpush1.msra.mxu0 0.0
      %821 = vmatprep.subr.mxu0 0.0
      %822 = vmatpush1.msra.mxu0 0.0
      %823 = vmatprep.subr.mxu0 0.0
      %824 = vmatpush1.msra.mxu0 0.0
      %825 = vmatprep.mubr.f32.mxu0 0.0
      %826 = vmatmul.mubr.f32.gmra.mrb[0].mxu0 %v747
      %v827 = vpop.f32.mrb[0].mxu0
      %v828 = vadd.f32 0.0, %v827
      %v829 = vpop.f32.mrb[0].mxu0
      %830 = vmatprep.mubr.f32.mxu0 0.0
      %831 = vmatmul.mubr.f32.gmra.mrb[0].mxu0 %v750
      %v832 = vpop.f32.mrb[0].mxu0
      %v833 = vadd.f32 0.0, %v832
      %v834 = vpop.f32.mrb[0].mxu0
      %835 = vmatprep.mubr.f32.mxu0 0.0
      %836 = vmatmul.mubr.f32.gmra.mrb[0].mxu0 %v753
      %v837 = vpop.f32.mrb[0].mxu0
      %v838 = vadd.f32 0.0, %v837
      %v839 = vpop.f32.mrb[0].mxu0
      %840 = vmatprep.mubr.f32.mxu0 0.0
      %841 = vmatmul.mubr.f32.gmra.mrb[0].mxu0 %v756
      %v842 = vpop.f32.mrb[0].mxu0
      %v843 = vadd.f32 0.0, %v842
      %v844 = vpop.f32.mrb[0].mxu0
      %845 = vmatprep.mubr.f32.mxu0 0.0
      %846 = vmatmul.mubr.f32.gmra.mrb[0].mxu0 %v759
      %v847 = vpop.f32.mrb[0].mxu0
      %v848 = vadd.f32 0.0, %v847
      %v849 = vpop.f32.mrb[0].mxu0
      %850 = vdwg.mxu0
      %851 = vst [vmem:[%s227] sm:$0xff] %v438
      %852 = vst [vmem:[%s227 + $0x8] sm:$0xff] %v443
      %853 = vst [vmem:[%s227 + $0x10] sm:$0xff] %v448
      %854 = vst [vmem:[%s227 + $0x18] sm:$0xff] %v453
      %855 = vst [vmem:[%s227 + $0x20] sm:$0xff] %v458
      %856 = vst [vmem:[%s227 + $0x28] sm:$0xff] %v633
      %857 = vst [vmem:[%s227 + $0x30] sm:$0xff] %v638
      %858 = vst [vmem:[%s227 + $0x38] sm:$0xff] %v643
      %859 = vst [vmem:[%s227 + $0x40] sm:$0xff] %v648
      %860 = vst [vmem:[%s227 + $0x48] sm:$0xff] %v653
      %861 = vst [vmem:[%s227 + $0x50] sm:$0xff] %v828
      %862 = vst [vmem:[%s227 + $0x58] sm:$0xff] %v833
      %863 = vst [vmem:[%s227 + $0x60] sm:$0xff] %v838
      %864 = vst [vmem:[%s227 + $0x68] sm:$0xff] %v843
      %865 = vst [vmem:[%s227 + $0x70] sm:$0xff] %v848
      %s866 = scalar_lea.vmem %s206, 96
      %v867 = vld [vmem:[%s866] sm:$0xff]
      %v868 = vld [vmem:[%s866 + $0x8] sm:$0xff]
      %v869 = vld [vmem:[%s866 + $0x10] sm:$0xff]
      %v870 = vld [vmem:[%s866 + $0x18] sm:$0xff]
      %v871 = vld [vmem:[%s866 + $0x20] sm:$0xff]
      %v872 = vld [vmem:[%s866 + $0x28] sm:$0xff]
      %v873 = vld [vmem:[%s866 + $0x30] sm:$0xff]
      %v874 = vld [vmem:[%s866 + $0x38] sm:$0xff]
      %v875 = vld [vmem:[%s866 + $0x40] sm:$0xff]
      %v876 = vld [vmem:[%s866 + $0x48] sm:$0xff]
      %v877 = vld [vmem:[%s866 + $0x50] sm:$0xff]
      %v878 = vld [vmem:[%s866 + $0x58] sm:$0xff]
      %s879 = scalar_lea.vmem %s213, 40
      %v880 = vld [vmem:[%s879] sm:$0xff]
      %v881 = vld [vmem:[%s879 + $0x8] sm:$0xff]
      %v882 = vld [vmem:[%s879 + $0x10] sm:$0xff]
      %v883 = vld [vmem:[%s879 + $0x18] sm:$0xff]
      %v884 = vld [vmem:[%s879 + $0x20] sm:$0xff]
      %s885 = scalar_lea.vmem %s220, 32
      %v886 = vld [vmem:[%s885] sm:$0xff]
      %v887 = vld [vmem:[%s885 + $0x8] sm:$0xff]
      %v888 = vld [vmem:[%s885 + $0x10] sm:$0xff]
      %v889 = vld [vmem:[%s885 + $0x18] sm:$0xff]
      %v891 = vsel %vm250, %v880, 0
      %v894 = vsel %vm250, %v881, 0
      %v897 = vsel %vm250, %v882, 0
      %v900 = vsel %vm250, %v883, 0
      %v903 = vsel %vm250, %v884, 0
      %905 = vmatprep.subr.mxu0 0.0
      %906 = vmatpush1.msra.mxu0 %v867
      %907 = vmatprep.subr.mxu0 0.0
      %908 = vmatpush1.msra.mxu0 %v868
      %909 = vmatprep.subr.mxu0 0.0
      %910 = vmatpush1.msra.mxu0 %v869
      %911 = vmatprep.subr.mxu0 0.0
      %912 = vmatpush1.msra.mxu0 %v870
      %913 = vmatprep.subr.mxu0 0.0
      %914 = vmatpush1.msra.mxu0 0.0
      %915 = vmatprep.subr.mxu0 0.0
      %916 = vmatpush1.msra.mxu0 0.0
      %917 = vmatprep.subr.mxu0 0.0
      %918 = vmatpush1.msra.mxu0 0.0
      %919 = vmatprep.subr.mxu0 0.0
      %920 = vmatpush1.msra.mxu0 0.0
      %921 = vmatprep.subr.mxu0 0.0
      %922 = vmatpush1.msra.mxu0 0.0
      %923 = vmatprep.subr.mxu0 0.0
      %924 = vmatpush1.msra.mxu0 0.0
      %925 = vmatprep.subr.mxu0 0.0
      %926 = vmatpush1.msra.mxu0 0.0
      %927 = vmatprep.subr.mxu0 0.0
      %928 = vmatpush1.msra.mxu0 0.0
      %929 = vmatprep.subr.mxu0 0.0
      %930 = vmatpush1.msra.mxu0 0.0
      %931 = vmatprep.subr.mxu0 0.0
      %932 = vmatpush1.msra.mxu0 0.0
      %933 = vmatprep.subr.mxu0 0.0
      %934 = vmatpush1.msra.mxu0 0.0
      %935 = vmatprep.subr.mxu0 0.0
      %936 = vmatpush1.msra.mxu0 0.0
      %937 = vmatprep.subr.mxu0 0.0
      %938 = vmatpush1.msra.mxu0 0.0
      %939 = vmatprep.subr.mxu0 0.0
      %940 = vmatpush1.msra.mxu0 0.0
      %941 = vmatprep.subr.mxu0 0.0
      %942 = vmatpush1.msra.mxu0 0.0
      %943 = vmatprep.subr.mxu0 0.0
      %944 = vmatpush1.msra.mxu0 0.0
      %945 = vmatprep.subr.mxu0 0.0
      %946 = vmatpush1.msra.mxu0 0.0
      %947 = vmatprep.subr.mxu0 0.0
      %948 = vmatpush1.msra.mxu0 0.0
      %949 = vmatprep.subr.mxu0 0.0
      %950 = vmatpush1.msra.mxu0 0.0
      %951 = vmatprep.subr.mxu0 0.0
      %952 = vmatpush1.msra.mxu0 0.0
      %953 = vmatprep.subr.mxu0 0.0
      %954 = vmatpush1.msra.mxu0 0.0
      %955 = vmatprep.subr.mxu0 0.0
      %956 = vmatpush1.msra.mxu0 0.0
      %957 = vmatprep.subr.mxu0 0.0
      %958 = vmatpush1.msra.mxu0 0.0
      %959 = vmatprep.subr.mxu0 0.0
      %960 = vmatpush1.msra.mxu0 0.0
      %961 = vmatprep.subr.mxu0 0.0
      %962 = vmatpush1.msra.mxu0 0.0
      %963 = vmatprep.subr.mxu0 0.0
      %964 = vmatpush1.msra.mxu0 0.0
      %965 = vmatprep.subr.mxu0 0.0
      %966 = vmatpush1.msra.mxu0 0.0
      %967 = vmatprep.subr.mxu0 0.0
      %968 = vmatpush1.msra.mxu0 0.0
      %969 = vmatprep.mubr.f32.mxu0 0.0
      %970 = vmatmul.mubr.f32.gmra.mrb[0].mxu0 %v891
      %v971 = vpop.f32.mrb[0].mxu0
      %v972 = vadd.f32 0.0, %v971
      %v973 = vpop.f32.mrb[0].mxu0
      %974 = vmatprep.mubr.f32.mxu0 0.0
      %975 = vmatmul.mubr.f32.gmra.mrb[0].mxu0 %v894
      %v976 = vpop.f32.mrb[0].mxu0
      %v977 = vadd.f32 0.0, %v976
      %v978 = vpop.f32.mrb[0].mxu0
      %979 = vmatprep.mubr.f32.mxu0 0.0
      %980 = vmatmul.mubr.f32.gmra.mrb[0].mxu0 %v897
      %v981 = vpop.f32.mrb[0].mxu0
      %v982 = vadd.f32 0.0, %v981
      %v983 = vpop.f32.mrb[0].mxu0
      %984 = vmatprep.mubr.f32.mxu0 0.0
      %985 = vmatmul.mubr.f32.gmra.mrb[0].mxu0 %v900
      %v986 = vpop.f32.mrb[0].mxu0
      %v987 = vadd.f32 0.0, %v986
      %v988 = vpop.f32.mrb[0].mxu0
      %989 = vmatprep.mubr.f32.mxu0 0.0
      %990 = vmatmul.mubr.f32.gmra.mrb[0].mxu0 %v903
      %v991 = vpop.f32.mrb[0].mxu0
      %v992 = vadd.f32 0.0, %v991
      %v993 = vpop.f32.mrb[0].mxu0
      %994 = vdwg.mxu0
      %v996 = vsel %vm250, %v972, 0
      %v999 = vsel %vm250, %v977, 0
      %v1002 = vsel %vm250, %v982, 0
      %v1005 = vsel %vm250, %v987, 0
      %v1008 = vsel %vm250, %v992, 0
      %1010 = vmatprep.subr.mxu0 0.0
      %1011 = vmatpush1.msra.mxu0 %v886
      %1012 = vmatprep.subr.mxu0 0.0
      %1013 = vmatpush1.msra.mxu0 %v887
      %1014 = vmatprep.subr.mxu0 0.0
      %1015 = vmatpush1.msra.mxu0 %v888
      %1016 = vmatprep.subr.mxu0 0.0
      %1017 = vmatpush1.msra.mxu0 %v889
      %1018 = vmatprep.subr.mxu0 0.0
      %1019 = vmatpush1.msra.mxu0 0.0
      %1020 = vmatprep.subr.mxu0 0.0
      %1021 = vmatpush1.msra.mxu0 0.0
      %1022 = vmatprep.subr.mxu0 0.0
      %1023 = vmatpush1.msra.mxu0 0.0
      %1024 = vmatprep.subr.mxu0 0.0
      %1025 = vmatpush1.msra.mxu0 0.0
      %1026 = vmatprep.subr.mxu0 0.0
      %1027 = vmatpush1.msra.mxu0 0.0
      %1028 = vmatprep.subr.mxu0 0.0
      %1029 = vmatpush1.msra.mxu0 0.0
      %1030 = vmatprep.subr.mxu0 0.0
      %1031 = vmatpush1.msra.mxu0 0.0
      %1032 = vmatprep.subr.mxu0 0.0
      %1033 = vmatpush1.msra.mxu0 0.0
      %1034 = vmatprep.subr.mxu0 0.0
      %1035 = vmatpush1.msra.mxu0 0.0
      %1036 = vmatprep.subr.mxu0 0.0
      %1037 = vmatpush1.msra.mxu0 0.0
      %1038 = vmatprep.subr.mxu0 0.0
      %1039 = vmatpush1.msra.mxu0 0.0
      %1040 = vmatprep.subr.mxu0 0.0
      %1041 = vmatpush1.msra.mxu0 0.0
      %1042 = vmatprep.subr.mxu0 0.0
      %1043 = vmatpush1.msra.mxu0 0.0
      %1044 = vmatprep.subr.mxu0 0.0
      %1045 = vmatpush1.msra.mxu0 0.0
      %1046 = vmatprep.subr.mxu0 0.0
      %1047 = vmatpush1.msra.mxu0 0.0
      %1048 = vmatprep.subr.mxu0 0.0
      %1049 = vmatpush1.msra.mxu0 0.0
      %1050 = vmatprep.subr.mxu0 0.0
      %1051 = vmatpush1.msra.mxu0 0.0
      %1052 = vmatprep.subr.mxu0 0.0
      %1053 = vmatpush1.msra.mxu0 0.0
      %1054 = vmatprep.subr.mxu0 0.0
      %1055 = vmatpush1.msra.mxu0 0.0
      %1056 = vmatprep.subr.mxu0 0.0
      %1057 = vmatpush1.msra.mxu0 0.0
      %1058 = vmatprep.subr.mxu0 0.0
      %1059 = vmatpush1.msra.mxu0 0.0
      %1060 = vmatprep.subr.mxu0 0.0
      %1061 = vmatpush1.msra.mxu0 0.0
      %1062 = vmatprep.subr.mxu0 0.0
      %1063 = vmatpush1.msra.mxu0 0.0
      %1064 = vmatprep.subr.mxu0 0.0
      %1065 = vmatpush1.msra.mxu0 0.0
      %1066 = vmatprep.subr.mxu0 0.0
      %1067 = vmatpush1.msra.mxu0 0.0
      %1068 = vmatprep.subr.mxu0 0.0
      %1069 = vmatpush1.msra.mxu0 0.0
      %1070 = vmatprep.subr.mxu0 0.0
      %1071 = vmatpush1.msra.mxu0 0.0
      %1072 = vmatprep.subr.mxu0 0.0
      %1073 = vmatpush1.msra.mxu0 0.0
      %1074 = vmatprep.mubr.f32.mxu0 0.0
      %1075 = vmatmul.mubr.f32.gmra.mrb[0].mxu0 %v996
      %v1076 = vpop.f32.mrb[0].mxu0
      %v1077 = vadd.f32 0.0, %v1076
      %v1078 = vpop.f32.mrb[0].mxu0
      %1079 = vmatprep.mubr.f32.mxu0 0.0
      %1080 = vmatmul.mubr.f32.gmra.mrb[0].mxu0 %v999
      %v1081 = vpop.f32.mrb[0].mxu0
      %v1082 = vadd.f32 0.0, %v1081
      %v1083 = vpop.f32.mrb[0].mxu0
      %1084 = vmatprep.mubr.f32.mxu0 0.0
      %1085 = vmatmul.mubr.f32.gmra.mrb[0].mxu0 %v1002
      %v1086 = vpop.f32.mrb[0].mxu0
      %v1087 = vadd.f32 0.0, %v1086
      %v1088 = vpop.f32.mrb[0].mxu0
      %1089 = vmatprep.mubr.f32.mxu0 0.0
      %1090 = vmatmul.mubr.f32.gmra.mrb[0].mxu0 %v1005
      %v1091 = vpop.f32.mrb[0].mxu0
      %v1092 = vadd.f32 0.0, %v1091
      %v1093 = vpop.f32.mrb[0].mxu0
      %1094 = vmatprep.mubr.f32.mxu0 0.0
      %1095 = vmatmul.mubr.f32.gmra.mrb[0].mxu0 %v1008
      %v1096 = vpop.f32.mrb[0].mxu0
      %v1097 = vadd.f32 0.0, %v1096
      %v1098 = vpop.f32.mrb[0].mxu0
      %1099 = vdwg.mxu0
      %1100 = vmatprep.subr.mxu0 0.0
      %1101 = vmatpush1.msra.mxu0 %v871
      %1102 = vmatprep.subr.mxu0 0.0
      %1103 = vmatpush1.msra.mxu0 %v872
      %1104 = vmatprep.subr.mxu0 0.0
      %1105 = vmatpush1.msra.mxu0 %v873
      %1106 = vmatprep.subr.mxu0 0.0
      %1107 = vmatpush1.msra.mxu0 %v874
      %1108 = vmatprep.subr.mxu0 0.0
      %1109 = vmatpush1.msra.mxu0 0.0
      %1110 = vmatprep.subr.mxu0 0.0
      %1111 = vmatpush1.msra.mxu0 0.0
      %1112 = vmatprep.subr.mxu0 0.0
      %1113 = vmatpush1.msra.mxu0 0.0
      %1114 = vmatprep.subr.mxu0 0.0
      %1115 = vmatpush1.msra.mxu0 0.0
      %1116 = vmatprep.subr.mxu0 0.0
      %1117 = vmatpush1.msra.mxu0 0.0
      %1118 = vmatprep.subr.mxu0 0.0
      %1119 = vmatpush1.msra.mxu0 0.0
      %1120 = vmatprep.subr.mxu0 0.0
      %1121 = vmatpush1.msra.mxu0 0.0
      %1122 = vmatprep.subr.mxu0 0.0
      %1123 = vmatpush1.msra.mxu0 0.0
      %1124 = vmatprep.subr.mxu0 0.0
      %1125 = vmatpush1.msra.mxu0 0.0
      %1126 = vmatprep.subr.mxu0 0.0
      %1127 = vmatpush1.msra.mxu0 0.0
      %1128 = vmatprep.subr.mxu0 0.0
      %1129 = vmatpush1.msra.mxu0 0.0
      %1130 = vmatprep.subr.mxu0 0.0
      %1131 = vmatpush1.msra.mxu0 0.0
      %1132 = vmatprep.subr.mxu0 0.0
      %1133 = vmatpush1.msra.mxu0 0.0
      %1134 = vmatprep.subr.mxu0 0.0
      %1135 = vmatpush1.msra.mxu0 0.0
      %1136 = vmatprep.subr.mxu0 0.0
      %1137 = vmatpush1.msra.mxu0 0.0
      %1138 = vmatprep.subr.mxu0 0.0
      %1139 = vmatpush1.msra.mxu0 0.0
      %1140 = vmatprep.subr.mxu0 0.0
      %1141 = vmatpush1.msra.mxu0 0.0
      %1142 = vmatprep.subr.mxu0 0.0
      %1143 = vmatpush1.msra.mxu0 0.0
      %1144 = vmatprep.subr.mxu0 0.0
      %1145 = vmatpush1.msra.mxu0 0.0
      %1146 = vmatprep.subr.mxu0 0.0
      %1147 = vmatpush1.msra.mxu0 0.0
      %1148 = vmatprep.subr.mxu0 0.0
      %1149 = vmatpush1.msra.mxu0 0.0
      %1150 = vmatprep.subr.mxu0 0.0
      %1151 = vmatpush1.msra.mxu0 0.0
      %1152 = vmatprep.subr.mxu0 0.0
      %1153 = vmatpush1.msra.mxu0 0.0
      %1154 = vmatprep.subr.mxu0 0.0
      %1155 = vmatpush1.msra.mxu0 0.0
      %1156 = vmatprep.subr.mxu0 0.0
      %1157 = vmatpush1.msra.mxu0 0.0
      %1158 = vmatprep.subr.mxu0 0.0
      %1159 = vmatpush1.msra.mxu0 0.0
      %1160 = vmatprep.subr.mxu0 0.0
      %1161 = vmatpush1.msra.mxu0 0.0
      %1162 = vmatprep.subr.mxu0 0.0
      %1163 = vmatpush1.msra.mxu0 0.0
      %1164 = vmatprep.mubr.f32.mxu0 0.0
      %1165 = vmatmul.mubr.f32.gmra.mrb[0].mxu0 %v891
      %v1166 = vpop.f32.mrb[0].mxu0
      %v1167 = vadd.f32 0.0, %v1166
      %v1168 = vpop.f32.mrb[0].mxu0
      %1169 = vmatprep.mubr.f32.mxu0 0.0
      %1170 = vmatmul.mubr.f32.gmra.mrb[0].mxu0 %v894
      %v1171 = vpop.f32.mrb[0].mxu0
      %v1172 = vadd.f32 0.0, %v1171
      %v1173 = vpop.f32.mrb[0].mxu0
      %1174 = vmatprep.mubr.f32.mxu0 0.0
      %1175 = vmatmul.mubr.f32.gmra.mrb[0].mxu0 %v897
      %v1176 = vpop.f32.mrb[0].mxu0
      %v1177 = vadd.f32 0.0, %v1176
      %v1178 = vpop.f32.mrb[0].mxu0
      %1179 = vmatprep.mubr.f32.mxu0 0.0
      %1180 = vmatmul.mubr.f32.gmra.mrb[0].mxu0 %v900
      %v1181 = vpop.f32.mrb[0].mxu0
      %v1182 = vadd.f32 0.0, %v1181
      %v1183 = vpop.f32.mrb[0].mxu0
      %1184 = vmatprep.mubr.f32.mxu0 0.0
      %1185 = vmatmul.mubr.f32.gmra.mrb[0].mxu0 %v903
      %v1186 = vpop.f32.mrb[0].mxu0
      %v1187 = vadd.f32 0.0, %v1186
      %v1188 = vpop.f32.mrb[0].mxu0
      %1189 = vdwg.mxu0
      %v1191 = vsel %vm250, %v1167, 0
      %v1194 = vsel %vm250, %v1172, 0
      %v1197 = vsel %vm250, %v1177, 0
      %v1200 = vsel %vm250, %v1182, 0
      %v1203 = vsel %vm250, %v1187, 0
      %1205 = vmatprep.subr.mxu0 0.0
      %1206 = vmatpush1.msra.mxu0 %v886
      %1207 = vmatprep.subr.mxu0 0.0
      %1208 = vmatpush1.msra.mxu0 %v887
      %1209 = vmatprep.subr.mxu0 0.0
      %1210 = vmatpush1.msra.mxu0 %v888
      %1211 = vmatprep.subr.mxu0 0.0
      %1212 = vmatpush1.msra.mxu0 %v889
      %1213 = vmatprep.subr.mxu0 0.0
      %1214 = vmatpush1.msra.mxu0 0.0
      %1215 = vmatprep.subr.mxu0 0.0
      %1216 = vmatpush1.msra.mxu0 0.0
      %1217 = vmatprep.subr.mxu0 0.0
      %1218 = vmatpush1.msra.mxu0 0.0
      %1219 = vmatprep.subr.mxu0 0.0
      %1220 = vmatpush1.msra.mxu0 0.0
      %1221 = vmatprep.subr.mxu0 0.0
      %1222 = vmatpush1.msra.mxu0 0.0
      %1223 = vmatprep.subr.mxu0 0.0
      %1224 = vmatpush1.msra.mxu0 0.0
      %1225 = vmatprep.subr.mxu0 0.0
      %1226 = vmatpush1.msra.mxu0 0.0
      %1227 = vmatprep.subr.mxu0 0.0
      %1228 = vmatpush1.msra.mxu0 0.0
      %1229 = vmatprep.subr.mxu0 0.0
      %1230 = vmatpush1.msra.mxu0 0.0
      %1231 = vmatprep.subr.mxu0 0.0
      %1232 = vmatpush1.msra.mxu0 0.0
      %1233 = vmatprep.subr.mxu0 0.0
      %1234 = vmatpush1.msra.mxu0 0.0
      %1235 = vmatprep.subr.mxu0 0.0
      %1236 = vmatpush1.msra.mxu0 0.0
      %1237 = vmatprep.subr.mxu0 0.0
      %1238 = vmatpush1.msra.mxu0 0.0
      %1239 = vmatprep.subr.mxu0 0.0
      %1240 = vmatpush1.msra.mxu0 0.0
      %1241 = vmatprep.subr.mxu0 0.0
      %1242 = vmatpush1.msra.mxu0 0.0
      %1243 = vmatprep.subr.mxu0 0.0
      %1244 = vmatpush1.msra.mxu0 0.0
      %1245 = vmatprep.subr.mxu0 0.0
      %1246 = vmatpush1.msra.mxu0 0.0
      %1247 = vmatprep.subr.mxu0 0.0
      %1248 = vmatpush1.msra.mxu0 0.0
      %1249 = vmatprep.subr.mxu0 0.0
      %1250 = vmatpush1.msra.mxu0 0.0
      %1251 = vmatprep.subr.mxu0 0.0
      %1252 = vmatpush1.msra.mxu0 0.0
      %1253 = vmatprep.subr.mxu0 0.0
      %1254 = vmatpush1.msra.mxu0 0.0
      %1255 = vmatprep.subr.mxu0 0.0
      %1256 = vmatpush1.msra.mxu0 0.0
      %1257 = vmatprep.subr.mxu0 0.0
      %1258 = vmatpush1.msra.mxu0 0.0
      %1259 = vmatprep.subr.mxu0 0.0
      %1260 = vmatpush1.msra.mxu0 0.0
      %1261 = vmatprep.subr.mxu0 0.0
      %1262 = vmatpush1.msra.mxu0 0.0
      %1263 = vmatprep.subr.mxu0 0.0
      %1264 = vmatpush1.msra.mxu0 0.0
      %1265 = vmatprep.subr.mxu0 0.0
      %1266 = vmatpush1.msra.mxu0 0.0
      %1267 = vmatprep.subr.mxu0 0.0
      %1268 = vmatpush1.msra.mxu0 0.0
      %1269 = vmatprep.mubr.f32.mxu0 0.0
      %1270 = vmatmul.mubr.f32.gmra.mrb[0].mxu0 %v1191
      %v1271 = vpop.f32.mrb[0].mxu0
      %v1272 = vadd.f32 0.0, %v1271
      %v1273 = vpop.f32.mrb[0].mxu0
      %1274 = vmatprep.mubr.f32.mxu0 0.0
      %1275 = vmatmul.mubr.f32.gmra.mrb[0].mxu0 %v1194
      %v1276 = vpop.f32.mrb[0].mxu0
      %v1277 = vadd.f32 0.0, %v1276
      %v1278 = vpop.f32.mrb[0].mxu0
      %1279 = vmatprep.mubr.f32.mxu0 0.0
      %1280 = vmatmul.mubr.f32.gmra.mrb[0].mxu0 %v1197
      %v1281 = vpop.f32.mrb[0].mxu0
      %v1282 = vadd.f32 0.0, %v1281
      %v1283 = vpop.f32.mrb[0].mxu0
      %1284 = vmatprep.mubr.f32.mxu0 0.0
      %1285 = vmatmul.mubr.f32.gmra.mrb[0].mxu0 %v1200
      %v1286 = vpop.f32.mrb[0].mxu0
      %v1287 = vadd.f32 0.0, %v1286
      %v1288 = vpop.f32.mrb[0].mxu0
      %1289 = vmatprep.mubr.f32.mxu0 0.0
      %1290 = vmatmul.mubr.f32.gmra.mrb[0].mxu0 %v1203
      %v1291 = vpop.f32.mrb[0].mxu0
      %v1292 = vadd.f32 0.0, %v1291
      %v1293 = vpop.f32.mrb[0].mxu0
      %1294 = vdwg.mxu0
      %1295 = vmatprep.subr.mxu0 0.0
      %1296 = vmatpush1.msra.mxu0 %v875
      %1297 = vmatprep.subr.mxu0 0.0
      %1298 = vmatpush1.msra.mxu0 %v876
      %1299 = vmatprep.subr.mxu0 0.0
      %1300 = vmatpush1.msra.mxu0 %v877
      %1301 = vmatprep.subr.mxu0 0.0
      %1302 = vmatpush1.msra.mxu0 %v878
      %1303 = vmatprep.subr.mxu0 0.0
      %1304 = vmatpush1.msra.mxu0 0.0
      %1305 = vmatprep.subr.mxu0 0.0
      %1306 = vmatpush1.msra.mxu0 0.0
      %1307 = vmatprep.subr.mxu0 0.0
      %1308 = vmatpush1.msra.mxu0 0.0
      %1309 = vmatprep.subr.mxu0 0.0
      %1310 = vmatpush1.msra.mxu0 0.0
      %1311 = vmatprep.subr.mxu0 0.0
      %1312 = vmatpush1.msra.mxu0 0.0
      %1313 = vmatprep.subr.mxu0 0.0
      %1314 = vmatpush1.msra.mxu0 0.0
      %1315 = vmatprep.subr.mxu0 0.0
      %1316 = vmatpush1.msra.mxu0 0.0
      %1317 = vmatprep.subr.mxu0 0.0
      %1318 = vmatpush1.msra.mxu0 0.0
      %1319 = vmatprep.subr.mxu0 0.0
      %1320 = vmatpush1.msra.mxu0 0.0
      %1321 = vmatprep.subr.mxu0 0.0
      %1322 = vmatpush1.msra.mxu0 0.0
      %1323 = vmatprep.subr.mxu0 0.0
      %1324 = vmatpush1.msra.mxu0 0.0
      %1325 = vmatprep.subr.mxu0 0.0
      %1326 = vmatpush1.msra.mxu0 0.0
      %1327 = vmatprep.subr.mxu0 0.0
      %1328 = vmatpush1.msra.mxu0 0.0
      %1329 = vmatprep.subr.mxu0 0.0
      %1330 = vmatpush1.msra.mxu0 0.0
      %1331 = vmatprep.subr.mxu0 0.0
      %1332 = vmatpush1.msra.mxu0 0.0
      %1333 = vmatprep.subr.mxu0 0.0
      %1334 = vmatpush1.msra.mxu0 0.0
      %1335 = vmatprep.subr.mxu0 0.0
      %1336 = vmatpush1.msra.mxu0 0.0
      %1337 = vmatprep.subr.mxu0 0.0
      %1338 = vmatpush1.msra.mxu0 0.0
      %1339 = vmatprep.subr.mxu0 0.0
      %1340 = vmatpush1.msra.mxu0 0.0
      %1341 = vmatprep.subr.mxu0 0.0
      %1342 = vmatpush1.msra.mxu0 0.0
      %1343 = vmatprep.subr.mxu0 0.0
      %1344 = vmatpush1.msra.mxu0 0.0
      %1345 = vmatprep.subr.mxu0 0.0
      %1346 = vmatpush1.msra.mxu0 0.0
      %1347 = vmatprep.subr.mxu0 0.0
      %1348 = vmatpush1.msra.mxu0 0.0
      %1349 = vmatprep.subr.mxu0 0.0
      %1350 = vmatpush1.msra.mxu0 0.0
      %1351 = vmatprep.subr.mxu0 0.0
      %1352 = vmatpush1.msra.mxu0 0.0
      %1353 = vmatprep.subr.mxu0 0.0
      %1354 = vmatpush1.msra.mxu0 0.0
      %1355 = vmatprep.subr.mxu0 0.0
      %1356 = vmatpush1.msra.mxu0 0.0
      %1357 = vmatprep.subr.mxu0 0.0
      %1358 = vmatpush1.msra.mxu0 0.0
      %1359 = vmatprep.mubr.f32.mxu0 0.0
      %1360 = vmatmul.mubr.f32.gmra.mrb[0].mxu0 %v891
      %v1361 = vpop.f32.mrb[0].mxu0
      %v1362 = vadd.f32 0.0, %v1361
      %v1363 = vpop.f32.mrb[0].mxu0
      %1364 = vmatprep.mubr.f32.mxu0 0.0
      %1365 = vmatmul.mubr.f32.gmra.mrb[0].mxu0 %v894
      %v1366 = vpop.f32.mrb[0].mxu0
      %v1367 = vadd.f32 0.0, %v1366
      %v1368 = vpop.f32.mrb[0].mxu0
      %1369 = vmatprep.mubr.f32.mxu0 0.0
      %1370 = vmatmul.mubr.f32.gmra.mrb[0].mxu0 %v897
      %v1371 = vpop.f32.mrb[0].mxu0
      %v1372 = vadd.f32 0.0, %v1371
      %v1373 = vpop.f32.mrb[0].mxu0
      %1374 = vmatprep.mubr.f32.mxu0 0.0
      %1375 = vmatmul.mubr.f32.gmra.mrb[0].mxu0 %v900
      %v1376 = vpop.f32.mrb[0].mxu0
      %v1377 = vadd.f32 0.0, %v1376
      %v1378 = vpop.f32.mrb[0].mxu0
      %1379 = vmatprep.mubr.f32.mxu0 0.0
      %1380 = vmatmul.mubr.f32.gmra.mrb[0].mxu0 %v903
      %v1381 = vpop.f32.mrb[0].mxu0
      %v1382 = vadd.f32 0.0, %v1381
      %v1383 = vpop.f32.mrb[0].mxu0
      %1384 = vdwg.mxu0
      %v1386 = vsel %vm250, %v1362, 0
      %v1389 = vsel %vm250, %v1367, 0
      %v1392 = vsel %vm250, %v1372, 0
      %v1395 = vsel %vm250, %v1377, 0
      %v1398 = vsel %vm250, %v1382, 0
      %1400 = vmatprep.subr.mxu0 0.0
      %1401 = vmatpush1.msra.mxu0 %v886
      %1402 = vmatprep.subr.mxu0 0.0
      %1403 = vmatpush1.msra.mxu0 %v887
      %1404 = vmatprep.subr.mxu0 0.0
      %1405 = vmatpush1.msra.mxu0 %v888
      %1406 = vmatprep.subr.mxu0 0.0
      %1407 = vmatpush1.msra.mxu0 %v889
      %1408 = vmatprep.subr.mxu0 0.0
      %1409 = vmatpush1.msra.mxu0 0.0
      %1410 = vmatprep.subr.mxu0 0.0
      %1411 = vmatpush1.msra.mxu0 0.0
      %1412 = vmatprep.subr.mxu0 0.0
      %1413 = vmatpush1.msra.mxu0 0.0
      %1414 = vmatprep.subr.mxu0 0.0
      %1415 = vmatpush1.msra.mxu0 0.0
      %1416 = vmatprep.subr.mxu0 0.0
      %1417 = vmatpush1.msra.mxu0 0.0
      %1418 = vmatprep.subr.mxu0 0.0
      %1419 = vmatpush1.msra.mxu0 0.0
      %1420 = vmatprep.subr.mxu0 0.0
      %1421 = vmatpush1.msra.mxu0 0.0
      %1422 = vmatprep.subr.mxu0 0.0
      %1423 = vmatpush1.msra.mxu0 0.0
      %1424 = vmatprep.subr.mxu0 0.0
      %1425 = vmatpush1.msra.mxu0 0.0
      %1426 = vmatprep.subr.mxu0 0.0
      %1427 = vmatpush1.msra.mxu0 0.0
      %1428 = vmatprep.subr.mxu0 0.0
      %1429 = vmatpush1.msra.mxu0 0.0
      %1430 = vmatprep.subr.mxu0 0.0
      %1431 = vmatpush1.msra.mxu0 0.0
      %1432 = vmatprep.subr.mxu0 0.0
      %1433 = vmatpush1.msra.mxu0 0.0
      %1434 = vmatprep.subr.mxu0 0.0
      %1435 = vmatpush1.msra.mxu0 0.0
      %1436 = vmatprep.subr.mxu0 0.0
      %1437 = vmatpush1.msra.mxu0 0.0
      %1438 = vmatprep.subr.mxu0 0.0
      %1439 = vmatpush1.msra.mxu0 0.0
      %1440 = vmatprep.subr.mxu0 0.0
      %1441 = vmatpush1.msra.mxu0 0.0
      %1442 = vmatprep.subr.mxu0 0.0
      %1443 = vmatpush1.msra.mxu0 0.0
      %1444 = vmatprep.subr.mxu0 0.0
      %1445 = vmatpush1.msra.mxu0 0.0
      %1446 = vmatprep.subr.mxu0 0.0
      %1447 = vmatpush1.msra.mxu0 0.0
      %1448 = vmatprep.subr.mxu0 0.0
      %1449 = vmatpush1.msra.mxu0 0.0
      %1450 = vmatprep.subr.mxu0 0.0
      %1451 = vmatpush1.msra.mxu0 0.0
      %1452 = vmatprep.subr.mxu0 0.0
      %1453 = vmatpush1.msra.mxu0 0.0
      %1454 = vmatprep.subr.mxu0 0.0
      %1455 = vmatpush1.msra.mxu0 0.0
      %1456 = vmatprep.subr.mxu0 0.0
      %1457 = vmatpush1.msra.mxu0 0.0
      %1458 = vmatprep.subr.mxu0 0.0
      %1459 = vmatpush1.msra.mxu0 0.0
      %1460 = vmatprep.subr.mxu0 0.0
      %1461 = vmatpush1.msra.mxu0 0.0
      %1462 = vmatprep.subr.mxu0 0.0
      %1463 = vmatpush1.msra.mxu0 0.0
      %1464 = vmatprep.mubr.f32.mxu0 0.0
      %1465 = vmatmul.mubr.f32.gmra.mrb[0].mxu0 %v1386
      %v1466 = vpop.f32.mrb[0].mxu0
      %v1467 = vadd.f32 0.0, %v1466
      %v1468 = vpop.f32.mrb[0].mxu0
      %1469 = vmatprep.mubr.f32.mxu0 0.0
      %1470 = vmatmul.mubr.f32.gmra.mrb[0].mxu0 %v1389
      %v1471 = vpop.f32.mrb[0].mxu0
      %v1472 = vadd.f32 0.0, %v1471
      %v1473 = vpop.f32.mrb[0].mxu0
      %1474 = vmatprep.mubr.f32.mxu0 0.0
      %1475 = vmatmul.mubr.f32.gmra.mrb[0].mxu0 %v1392
      %v1476 = vpop.f32.mrb[0].mxu0
      %v1477 = vadd.f32 0.0, %v1476
      %v1478 = vpop.f32.mrb[0].mxu0
      %1479 = vmatprep.mubr.f32.mxu0 0.0
      %1480 = vmatmul.mubr.f32.gmra.mrb[0].mxu0 %v1395
      %v1481 = vpop.f32.mrb[0].mxu0
      %v1482 = vadd.f32 0.0, %v1481
      %v1483 = vpop.f32.mrb[0].mxu0
      %1484 = vmatprep.mubr.f32.mxu0 0.0
      %1485 = vmatmul.mubr.f32.gmra.mrb[0].mxu0 %v1398
      %v1486 = vpop.f32.mrb[0].mxu0
      %v1487 = vadd.f32 0.0, %v1486
      %v1488 = vpop.f32.mrb[0].mxu0
      %1489 = vdwg.mxu0
      %s1490 = scalar_lea.vmem %s227, 120
      %1491 = vst [vmem:[%s1490] sm:$0xff] %v1077
      %1492 = vst [vmem:[%s1490 + $0x8] sm:$0xff] %v1082
      %1493 = vst [vmem:[%s1490 + $0x10] sm:$0xff] %v1087
      %1494 = vst [vmem:[%s1490 + $0x18] sm:$0xff] %v1092
      %1495 = vst [vmem:[%s1490 + $0x20] sm:$0xff] %v1097
      %1496 = vst [vmem:[%s1490 + $0x28] sm:$0xff] %v1272
      %1497 = vst [vmem:[%s1490 + $0x30] sm:$0xff] %v1277
      %1498 = vst [vmem:[%s1490 + $0x38] sm:$0xff] %v1282
      %1499 = vst [vmem:[%s1490 + $0x40] sm:$0xff] %v1287
      %1500 = vst [vmem:[%s1490 + $0x48] sm:$0xff] %v1292
      %1501 = vst [vmem:[%s1490 + $0x50] sm:$0xff] %v1467
      %1502 = vst [vmem:[%s1490 + $0x58] sm:$0xff] %v1472
      %1503 = vst [vmem:[%s1490 + $0x60] sm:$0xff] %v1477
      %1504 = vst [vmem:[%s1490 + $0x68] sm:$0xff] %v1482
      %1505 = vst [vmem:[%s1490 + $0x70] sm:$0xff] %v1487
      %s1506 = scalar_lea.vmem %s206, 192
      %v1507 = vld [vmem:[%s1506] sm:$0xff]
      %v1508 = vld [vmem:[%s1506 + $0x8] sm:$0xff]
      %v1509 = vld [vmem:[%s1506 + $0x10] sm:$0xff]
      %v1510 = vld [vmem:[%s1506 + $0x18] sm:$0xff]
      %v1511 = vld [vmem:[%s1506 + $0x20] sm:$0xff]
      %v1512 = vld [vmem:[%s1506 + $0x28] sm:$0xff]
      %v1513 = vld [vmem:[%s1506 + $0x30] sm:$0xff]
      %v1514 = vld [vmem:[%s1506 + $0x38] sm:$0xff]
      %v1515 = vld [vmem:[%s1506 + $0x40] sm:$0xff]
      %v1516 = vld [vmem:[%s1506 + $0x48] sm:$0xff]
      %v1517 = vld [vmem:[%s1506 + $0x50] sm:$0xff]
      %v1518 = vld [vmem:[%s1506 + $0x58] sm:$0xff]
      %s1519 = scalar_lea.vmem %s213, 80
      %v1520 = vld [vmem:[%s1519] sm:$0xff]
      %v1521 = vld [vmem:[%s1519 + $0x8] sm:$0xff]
      %v1522 = vld [vmem:[%s1519 + $0x10] sm:$0xff]
      %v1523 = vld [vmem:[%s1519 + $0x18] sm:$0xff]
      %v1524 = vld [vmem:[%s1519 + $0x20] sm:$0xff]
      %s1525 = scalar_lea.vmem %s220, 64
      %v1526 = vld [vmem:[%s1525] sm:$0xff]
      %v1527 = vld [vmem:[%s1525 + $0x8] sm:$0xff]
      %v1528 = vld [vmem:[%s1525 + $0x10] sm:$0xff]
      %v1529 = vld [vmem:[%s1525 + $0x18] sm:$0xff]
      %v1531 = vsel %vm250, %v1520, 0
      %v1534 = vsel %vm250, %v1521, 0
      %v1537 = vsel %vm250, %v1522, 0
      %v1540 = vsel %vm250, %v1523, 0
      %v1543 = vsel %vm250, %v1524, 0
      %1545 = vmatprep.subr.mxu0 0.0
      %1546 = vmatpush1.msra.mxu0 %v1507
      %1547 = vmatprep.subr.mxu0 0.0
      %1548 = vmatpush1.msra.mxu0 %v1508
      %1549 = vmatprep.subr.mxu0 0.0
      %1550 = vmatpush1.msra.mxu0 %v1509
      %1551 = vmatprep.subr.mxu0 0.0
      %1552 = vmatpush1.msra.mxu0 %v1510
      %1553 = vmatprep.subr.mxu0 0.0
      %1554 = vmatpush1.msra.mxu0 0.0
      %1555 = vmatprep.subr.mxu0 0.0
      %1556 = vmatpush1.msra.mxu0 0.0
      %1557 = vmatprep.subr.mxu0 0.0
      %1558 = vmatpush1.msra.mxu0 0.0
      %1559 = vmatprep.subr.mxu0 0.0
      %1560 = vmatpush1.msra.mxu0 0.0
      %1561 = vmatprep.subr.mxu0 0.0
      %1562 = vmatpush1.msra.mxu0 0.0
      %1563 = vmatprep.subr.mxu0 0.0
      %1564 = vmatpush1.msra.mxu0 0.0
      %1565 = vmatprep.subr.mxu0 0.0
      %1566 = vmatpush1.msra.mxu0 0.0
      %1567 = vmatprep.subr.mxu0 0.0
      %1568 = vmatpush1.msra.mxu0 0.0
      %1569 = vmatprep.subr.mxu0 0.0
      %1570 = vmatpush1.msra.mxu0 0.0
      %1571 = vmatprep.subr.mxu0 0.0
      %1572 = vmatpush1.msra.mxu0 0.0
      %1573 = vmatprep.subr.mxu0 0.0
      %1574 = vmatpush1.msra.mxu0 0.0
      %1575 = vmatprep.subr.mxu0 0.0
      %1576 = vmatpush1.msra.mxu0 0.0
      %1577 = vmatprep.subr.mxu0 0.0
      %1578 = vmatpush1.msra.mxu0 0.0
      %1579 = vmatprep.subr.mxu0 0.0
      %1580 = vmatpush1.msra.mxu0 0.0
      %1581 = vmatprep.subr.mxu0 0.0
      %1582 = vmatpush1.msra.mxu0 0.0
      %1583 = vmatprep.subr.mxu0 0.0
      %1584 = vmatpush1.msra.mxu0 0.0
      %1585 = vmatprep.subr.mxu0 0.0
      %1586 = vmatpush1.msra.mxu0 0.0
      %1587 = vmatprep.subr.mxu0 0.0
      %1588 = vmatpush1.msra.mxu0 0.0
      %1589 = vmatprep.subr.mxu0 0.0
      %1590 = vmatpush1.msra.mxu0 0.0
      %1591 = vmatprep.subr.mxu0 0.0
      %1592 = vmatpush1.msra.mxu0 0.0
      %1593 = vmatprep.subr.mxu0 0.0
      %1594 = vmatpush1.msra.mxu0 0.0
      %1595 = vmatprep.subr.mxu0 0.0
      %1596 = vmatpush1.msra.mxu0 0.0
      %1597 = vmatprep.subr.mxu0 0.0
      %1598 = vmatpush1.msra.mxu0 0.0
      %1599 = vmatprep.subr.mxu0 0.0
      %1600 = vmatpush1.msra.mxu0 0.0
      %1601 = vmatprep.subr.mxu0 0.0
      %1602 = vmatpush1.msra.mxu0 0.0
      %1603 = vmatprep.subr.mxu0 0.0
      %1604 = vmatpush1.msra.mxu0 0.0
      %1605 = vmatprep.subr.mxu0 0.0
      %1606 = vmatpush1.msra.mxu0 0.0
      %1607 = vmatprep.subr.mxu0 0.0
      %1608 = vmatpush1.msra.mxu0 0.0
      %1609 = vmatprep.mubr.f32.mxu0 0.0
      %1610 = vmatmul.mubr.f32.gmra.mrb[0].mxu0 %v1531
      %v1611 = vpop.f32.mrb[0].mxu0
      %v1612 = vadd.f32 0.0, %v1611
      %v1613 = vpop.f32.mrb[0].mxu0
      %1614 = vmatprep.mubr.f32.mxu0 0.0
      %1615 = vmatmul.mubr.f32.gmra.mrb[0].mxu0 %v1534
      %v1616 = vpop.f32.mrb[0].mxu0
      %v1617 = vadd.f32 0.0, %v1616
      %v1618 = vpop.f32.mrb[0].mxu0
      %1619 = vmatprep.mubr.f32.mxu0 0.0
      %1620 = vmatmul.mubr.f32.gmra.mrb[0].mxu0 %v1537
      %v1621 = vpop.f32.mrb[0].mxu0
      %v1622 = vadd.f32 0.0, %v1621
      %v1623 = vpop.f32.mrb[0].mxu0
      %1624 = vmatprep.mubr.f32.mxu0 0.0
      %1625 = vmatmul.mubr.f32.gmra.mrb[0].mxu0 %v1540
      %v1626 = vpop.f32.mrb[0].mxu0
      %v1627 = vadd.f32 0.0, %v1626
      %v1628 = vpop.f32.mrb[0].mxu0
      %1629 = vmatprep.mubr.f32.mxu0 0.0
      %1630 = vmatmul.mubr.f32.gmra.mrb[0].mxu0 %v1543
      %v1631 = vpop.f32.mrb[0].mxu0
      %v1632 = vadd.f32 0.0, %v1631
      %v1633 = vpop.f32.mrb[0].mxu0
      %1634 = vdwg.mxu0
      %v1636 = vsel %vm250, %v1612, 0
      %v1639 = vsel %vm250, %v1617, 0
      %v1642 = vsel %vm250, %v1622, 0
      %v1645 = vsel %vm250, %v1627, 0
      %v1648 = vsel %vm250, %v1632, 0
      %1650 = vmatprep.subr.mxu0 0.0
      %1651 = vmatpush1.msra.mxu0 %v1526
      %1652 = vmatprep.subr.mxu0 0.0
      %1653 = vmatpush1.msra.mxu0 %v1527
      %1654 = vmatprep.subr.mxu0 0.0
      %1655 = vmatpush1.msra.mxu0 %v1528
      %1656 = vmatprep.subr.mxu0 0.0
      %1657 = vmatpush1.msra.mxu0 %v1529
      %1658 = vmatprep.subr.mxu0 0.0
      %1659 = vmatpush1.msra.mxu0 0.0
      %1660 = vmatprep.subr.mxu0 0.0
      %1661 = vmatpush1.msra.mxu0 0.0
      %1662 = vmatprep.subr.mxu0 0.0
      %1663 = vmatpush1.msra.mxu0 0.0
      %1664 = vmatprep.subr.mxu0 0.0
      %1665 = vmatpush1.msra.mxu0 0.0
      %1666 = vmatprep.subr.mxu0 0.0
      %1667 = vmatpush1.msra.mxu0 0.0
      %1668 = vmatprep.subr.mxu0 0.0
      %1669 = vmatpush1.msra.mxu0 0.0
      %1670 = vmatprep.subr.mxu0 0.0
      %1671 = vmatpush1.msra.mxu0 0.0
      %1672 = vmatprep.subr.mxu0 0.0
      %1673 = vmatpush1.msra.mxu0 0.0
      %1674 = vmatprep.subr.mxu0 0.0
      %1675 = vmatpush1.msra.mxu0 0.0
      %1676 = vmatprep.subr.mxu0 0.0
      %1677 = vmatpush1.msra.mxu0 0.0
      %1678 = vmatprep.subr.mxu0 0.0
      %1679 = vmatpush1.msra.mxu0 0.0
      %1680 = vmatprep.subr.mxu0 0.0
      %1681 = vmatpush1.msra.mxu0 0.0
      %1682 = vmatprep.subr.mxu0 0.0
      %1683 = vmatpush1.msra.mxu0 0.0
      %1684 = vmatprep.subr.mxu0 0.0
      %1685 = vmatpush1.msra.mxu0 0.0
      %1686 = vmatprep.subr.mxu0 0.0
      %1687 = vmatpush1.msra.mxu0 0.0
      %1688 = vmatprep.subr.mxu0 0.0
      %1689 = vmatpush1.msra.mxu0 0.0
      %1690 = vmatprep.subr.mxu0 0.0
      %1691 = vmatpush1.msra.mxu0 0.0
      %1692 = vmatprep.subr.mxu0 0.0
      %1693 = vmatpush1.msra.mxu0 0.0
      %1694 = vmatprep.subr.mxu0 0.0
      %1695 = vmatpush1.msra.mxu0 0.0
      %1696 = vmatprep.subr.mxu0 0.0
      %1697 = vmatpush1.msra.mxu0 0.0
      %1698 = vmatprep.subr.mxu0 0.0
      %1699 = vmatpush1.msra.mxu0 0.0
      %1700 = vmatprep.subr.mxu0 0.0
      %1701 = vmatpush1.msra.mxu0 0.0
      %1702 = vmatprep.subr.mxu0 0.0
      %1703 = vmatpush1.msra.mxu0 0.0
      %1704 = vmatprep.subr.mxu0 0.0
      %1705 = vmatpush1.msra.mxu0 0.0
      %1706 = vmatprep.subr.mxu0 0.0
      %1707 = vmatpush1.msra.mxu0 0.0
      %1708 = vmatprep.subr.mxu0 0.0
      %1709 = vmatpush1.msra.mxu0 0.0
      %1710 = vmatprep.subr.mxu0 0.0
      %1711 = vmatpush1.msra.mxu0 0.0
      %1712 = vmatprep.subr.mxu0 0.0
      %1713 = vmatpush1.msra.mxu0 0.0
      %1714 = vmatprep.mubr.f32.mxu0 0.0
      %1715 = vmatmul.mubr.f32.gmra.mrb[0].mxu0 %v1636
      %v1716 = vpop.f32.mrb[0].mxu0
      %v1717 = vadd.f32 0.0, %v1716
      %v1718 = vpop.f32.mrb[0].mxu0
      %1719 = vmatprep.mubr.f32.mxu0 0.0
      %1720 = vmatmul.mubr.f32.gmra.mrb[0].mxu0 %v1639
      %v1721 = vpop.f32.mrb[0].mxu0
      %v1722 = vadd.f32 0.0, %v1721
      %v1723 = vpop.f32.mrb[0].mxu0
      %1724 = vmatprep.mubr.f32.mxu0 0.0
      %1725 = vmatmul.mubr.f32.gmra.mrb[0].mxu0 %v1642
      %v1726 = vpop.f32.mrb[0].mxu0
      %v1727 = vadd.f32 0.0, %v1726
      %v1728 = vpop.f32.mrb[0].mxu0
      %1729 = vmatprep.mubr.f32.mxu0 0.0
      %1730 = vmatmul.mubr.f32.gmra.mrb[0].mxu0 %v1645
      %v1731 = vpop.f32.mrb[0].mxu0
      %v1732 = vadd.f32 0.0, %v1731
      %v1733 = vpop.f32.mrb[0].mxu0
      %1734 = vmatprep.mubr.f32.mxu0 0.0
      %1735 = vmatmul.mubr.f32.gmra.mrb[0].mxu0 %v1648
      %v1736 = vpop.f32.mrb[0].mxu0
      %v1737 = vadd.f32 0.0, %v1736
      %v1738 = vpop.f32.mrb[0].mxu0
      %1739 = vdwg.mxu0
      %1740 = vmatprep.subr.mxu0 0.0
      %1741 = vmatpush1.msra.mxu0 %v1511
      %1742 = vmatprep.subr.mxu0 0.0
      %1743 = vmatpush1.msra.mxu0 %v1512
      %1744 = vmatprep.subr.mxu0 0.0
      %1745 = vmatpush1.msra.mxu0 %v1513
      %1746 = vmatprep.subr.mxu0 0.0
      %1747 = vmatpush1.msra.mxu0 %v1514
      %1748 = vmatprep.subr.mxu0 0.0
      %1749 = vmatpush1.msra.mxu0 0.0
      %1750 = vmatprep.subr.mxu0 0.0
      %1751 = vmatpush1.msra.mxu0 0.0
      %1752 = vmatprep.subr.mxu0 0.0
      %1753 = vmatpush1.msra.mxu0 0.0
      %1754 = vmatprep.subr.mxu0 0.0
      %1755 = vmatpush1.msra.mxu0 0.0
      %1756 = vmatprep.subr.mxu0 0.0
      %1757 = vmatpush1.msra.mxu0 0.0
      %1758 = vmatprep.subr.mxu0 0.0
      %1759 = vmatpush1.msra.mxu0 0.0
      %1760 = vmatprep.subr.mxu0 0.0
      %1761 = vmatpush1.msra.mxu0 0.0
      %1762 = vmatprep.subr.mxu0 0.0
      %1763 = vmatpush1.msra.mxu0 0.0
      %1764 = vmatprep.subr.mxu0 0.0
      %1765 = vmatpush1.msra.mxu0 0.0
      %1766 = vmatprep.subr.mxu0 0.0
      %1767 = vmatpush1.msra.mxu0 0.0
      %1768 = vmatprep.subr.mxu0 0.0
      %1769 = vmatpush1.msra.mxu0 0.0
      %1770 = vmatprep.subr.mxu0 0.0
      %1771 = vmatpush1.msra.mxu0 0.0
      %1772 = vmatprep.subr.mxu0 0.0
      %1773 = vmatpush1.msra.mxu0 0.0
      %1774 = vmatprep.subr.mxu0 0.0
      %1775 = vmatpush1.msra.mxu0 0.0
      %1776 = vmatprep.subr.mxu0 0.0
      %1777 = vmatpush1.msra.mxu0 0.0
      %1778 = vmatprep.subr.mxu0 0.0
      %1779 = vmatpush1.msra.mxu0 0.0
      %1780 = vmatprep.subr.mxu0 0.0
      %1781 = vmatpush1.msra.mxu0 0.0
      %1782 = vmatprep.subr.mxu0 0.0
      %1783 = vmatpush1.msra.mxu0 0.0
      %1784 = vmatprep.subr.mxu0 0.0
      %1785 = vmatpush1.msra.mxu0 0.0
      %1786 = vmatprep.subr.mxu0 0.0
      %1787 = vmatpush1.msra.mxu0 0.0
      %1788 = vmatprep.subr.mxu0 0.0
      %1789 = vmatpush1.msra.mxu0 0.0
      %1790 = vmatprep.subr.mxu0 0.0
      %1791 = vmatpush1.msra.mxu0 0.0
      %1792 = vmatprep.subr.mxu0 0.0
      %1793 = vmatpush1.msra.mxu0 0.0
      %1794 = vmatprep.subr.mxu0 0.0
      %1795 = vmatpush1.msra.mxu0 0.0
      %1796 = vmatprep.subr.mxu0 0.0
      %1797 = vmatpush1.msra.mxu0 0.0
      %1798 = vmatprep.subr.mxu0 0.0
      %1799 = vmatpush1.msra.mxu0 0.0
      %1800 = vmatprep.subr.mxu0 0.0
      %1801 = vmatpush1.msra.mxu0 0.0
      %1802 = vmatprep.subr.mxu0 0.0
      %1803 = vmatpush1.msra.mxu0 0.0
      %1804 = vmatprep.mubr.f32.mxu0 0.0
      %1805 = vmatmul.mubr.f32.gmra.mrb[0].mxu0 %v1531
      %v1806 = vpop.f32.mrb[0].mxu0
      %v1807 = vadd.f32 0.0, %v1806
      %v1808 = vpop.f32.mrb[0].mxu0
      %1809 = vmatprep.mubr.f32.mxu0 0.0
      %1810 = vmatmul.mubr.f32.gmra.mrb[0].mxu0 %v1534
      %v1811 = vpop.f32.mrb[0].mxu0
      %v1812 = vadd.f32 0.0, %v1811
      %v1813 = vpop.f32.mrb[0].mxu0
      %1814 = vmatprep.mubr.f32.mxu0 0.0
      %1815 = vmatmul.mubr.f32.gmra.mrb[0].mxu0 %v1537
      %v1816 = vpop.f32.mrb[0].mxu0
      %v1817 = vadd.f32 0.0, %v1816
      %v1818 = vpop.f32.mrb[0].mxu0
      %1819 = vmatprep.mubr.f32.mxu0 0.0
      %1820 = vmatmul.mubr.f32.gmra.mrb[0].mxu0 %v1540
      %v1821 = vpop.f32.mrb[0].mxu0
      %v1822 = vadd.f32 0.0, %v1821
      %v1823 = vpop.f32.mrb[0].mxu0
      %1824 = vmatprep.mubr.f32.mxu0 0.0
      %1825 = vmatmul.mubr.f32.gmra.mrb[0].mxu0 %v1543
      %v1826 = vpop.f32.mrb[0].mxu0
      %v1827 = vadd.f32 0.0, %v1826
      %v1828 = vpop.f32.mrb[0].mxu0
      %1829 = vdwg.mxu0
      %v1831 = vsel %vm250, %v1807, 0
      %v1834 = vsel %vm250, %v1812, 0
      %v1837 = vsel %vm250, %v1817, 0
      %v1840 = vsel %vm250, %v1822, 0
      %v1843 = vsel %vm250, %v1827, 0
      %1845 = vmatprep.subr.mxu0 0.0
      %1846 = vmatpush1.msra.mxu0 %v1526
      %1847 = vmatprep.subr.mxu0 0.0
      %1848 = vmatpush1.msra.mxu0 %v1527
      %1849 = vmatprep.subr.mxu0 0.0
      %1850 = vmatpush1.msra.mxu0 %v1528
      %1851 = vmatprep.subr.mxu0 0.0
      %1852 = vmatpush1.msra.mxu0 %v1529
      %1853 = vmatprep.subr.mxu0 0.0
      %1854 = vmatpush1.msra.mxu0 0.0
      %1855 = vmatprep.subr.mxu0 0.0
      %1856 = vmatpush1.msra.mxu0 0.0
      %1857 = vmatprep.subr.mxu0 0.0
      %1858 = vmatpush1.msra.mxu0 0.0
      %1859 = vmatprep.subr.mxu0 0.0
      %1860 = vmatpush1.msra.mxu0 0.0
      %1861 = vmatprep.subr.mxu0 0.0
      %1862 = vmatpush1.msra.mxu0 0.0
      %1863 = vmatprep.subr.mxu0 0.0
      %1864 = vmatpush1.msra.mxu0 0.0
      %1865 = vmatprep.subr.mxu0 0.0
      %1866 = vmatpush1.msra.mxu0 0.0
      %1867 = vmatprep.subr.mxu0 0.0
      %1868 = vmatpush1.msra.mxu0 0.0
      %1869 = vmatprep.subr.mxu0 0.0
      %1870 = vmatpush1.msra.mxu0 0.0
      %1871 = vmatprep.subr.mxu0 0.0
      %1872 = vmatpush1.msra.mxu0 0.0
      %1873 = vmatprep.subr.mxu0 0.0
      %1874 = vmatpush1.msra.mxu0 0.0
      %1875 = vmatprep.subr.mxu0 0.0
      %1876 = vmatpush1.msra.mxu0 0.0
      %1877 = vmatprep.subr.mxu0 0.0
      %1878 = vmatpush1.msra.mxu0 0.0
      %1879 = vmatprep.subr.mxu0 0.0
      %1880 = vmatpush1.msra.mxu0 0.0
      %1881 = vmatprep.subr.mxu0 0.0
      %1882 = vmatpush1.msra.mxu0 0.0
      %1883 = vmatprep.subr.mxu0 0.0
      %1884 = vmatpush1.msra.mxu0 0.0
      %1885 = vmatprep.subr.mxu0 0.0
      %1886 = vmatpush1.msra.mxu0 0.0
      %1887 = vmatprep.subr.mxu0 0.0
      %1888 = vmatpush1.msra.mxu0 0.0
      %1889 = vmatprep.subr.mxu0 0.0
      %1890 = vmatpush1.msra.mxu0 0.0
      %1891 = vmatprep.subr.mxu0 0.0
      %1892 = vmatpush1.msra.mxu0 0.0
      %1893 = vmatprep.subr.mxu0 0.0
      %1894 = vmatpush1.msra.mxu0 0.0
      %1895 = vmatprep.subr.mxu0 0.0
      %1896 = vmatpush1.msra.mxu0 0.0
      %1897 = vmatprep.subr.mxu0 0.0
      %1898 = vmatpush1.msra.mxu0 0.0
      %1899 = vmatprep.subr.mxu0 0.0
      %1900 = vmatpush1.msra.mxu0 0.0
      %1901 = vmatprep.subr.mxu0 0.0
      %1902 = vmatpush1.msra.mxu0 0.0
      %1903 = vmatprep.subr.mxu0 0.0
      %1904 = vmatpush1.msra.mxu0 0.0
      %1905 = vmatprep.subr.mxu0 0.0
      %1906 = vmatpush1.msra.mxu0 0.0
      %1907 = vmatprep.subr.mxu0 0.0
      %1908 = vmatpush1.msra.mxu0 0.0
      %1909 = vmatprep.mubr.f32.mxu0 0.0
      %1910 = vmatmul.mubr.f32.gmra.mrb[0].mxu0 %v1831
      %v1911 = vpop.f32.mrb[0].mxu0
      %v1912 = vadd.f32 0.0, %v1911
      %v1913 = vpop.f32.mrb[0].mxu0
      %1914 = vmatprep.mubr.f32.mxu0 0.0
      %1915 = vmatmul.mubr.f32.gmra.mrb[0].mxu0 %v1834
      %v1916 = vpop.f32.mrb[0].mxu0
      %v1917 = vadd.f32 0.0, %v1916
      %v1918 = vpop.f32.mrb[0].mxu0
      %1919 = vmatprep.mubr.f32.mxu0 0.0
      %1920 = vmatmul.mubr.f32.gmra.mrb[0].mxu0 %v1837
      %v1921 = vpop.f32.mrb[0].mxu0
      %v1922 = vadd.f32 0.0, %v1921
      %v1923 = vpop.f32.mrb[0].mxu0
      %1924 = vmatprep.mubr.f32.mxu0 0.0
      %1925 = vmatmul.mubr.f32.gmra.mrb[0].mxu0 %v1840
      %v1926 = vpop.f32.mrb[0].mxu0
      %v1927 = vadd.f32 0.0, %v1926
      %v1928 = vpop.f32.mrb[0].mxu0
      %1929 = vmatprep.mubr.f32.mxu0 0.0
      %1930 = vmatmul.mubr.f32.gmra.mrb[0].mxu0 %v1843
      %v1931 = vpop.f32.mrb[0].mxu0
      %v1932 = vadd.f32 0.0, %v1931
      %v1933 = vpop.f32.mrb[0].mxu0
      %1934 = vdwg.mxu0
      %1935 = vmatprep.subr.mxu0 0.0
      %1936 = vmatpush1.msra.mxu0 %v1515
      %1937 = vmatprep.subr.mxu0 0.0
      %1938 = vmatpush1.msra.mxu0 %v1516
      %1939 = vmatprep.subr.mxu0 0.0
      %1940 = vmatpush1.msra.mxu0 %v1517
      %1941 = vmatprep.subr.mxu0 0.0
      %1942 = vmatpush1.msra.mxu0 %v1518
      %1943 = vmatprep.subr.mxu0 0.0
      %1944 = vmatpush1.msra.mxu0 0.0
      %1945 = vmatprep.subr.mxu0 0.0
      %1946 = vmatpush1.msra.mxu0 0.0
      %1947 = vmatprep.subr.mxu0 0.0
      %1948 = vmatpush1.msra.mxu0 0.0
      %1949 = vmatprep.subr.mxu0 0.0
      %1950 = vmatpush1.msra.mxu0 0.0
      %1951 = vmatprep.subr.mxu0 0.0
      %1952 = vmatpush1.msra.mxu0 0.0
      %1953 = vmatprep.subr.mxu0 0.0
      %1954 = vmatpush1.msra.mxu0 0.0
      %1955 = vmatprep.subr.mxu0 0.0
      %1956 = vmatpush1.msra.mxu0 0.0
      %1957 = vmatprep.subr.mxu0 0.0
      %1958 = vmatpush1.msra.mxu0 0.0
      %1959 = vmatprep.subr.mxu0 0.0
      %1960 = vmatpush1.msra.mxu0 0.0
      %1961 = vmatprep.subr.mxu0 0.0
      %1962 = vmatpush1.msra.mxu0 0.0
      %1963 = vmatprep.subr.mxu0 0.0
      %1964 = vmatpush1.msra.mxu0 0.0
      %1965 = vmatprep.subr.mxu0 0.0
      %1966 = vmatpush1.msra.mxu0 0.0
      %1967 = vmatprep.subr.mxu0 0.0
      %1968 = vmatpush1.msra.mxu0 0.0
      %1969 = vmatprep.subr.mxu0 0.0
      %1970 = vmatpush1.msra.mxu0 0.0
      %1971 = vmatprep.subr.mxu0 0.0
      %1972 = vmatpush1.msra.mxu0 0.0
      %1973 = vmatprep.subr.mxu0 0.0
      %1974 = vmatpush1.msra.mxu0 0.0
      %1975 = vmatprep.subr.mxu0 0.0
      %1976 = vmatpush1.msra.mxu0 0.0
      %1977 = vmatprep.subr.mxu0 0.0
      %1978 = vmatpush1.msra.mxu0 0.0
      %1979 = vmatprep.subr.mxu0 0.0
      %1980 = vmatpush1.msra.mxu0 0.0
      %1981 = vmatprep.subr.mxu0 0.0
      %1982 = vmatpush1.msra.mxu0 0.0
      %1983 = vmatprep.subr.mxu0 0.0
      %1984 = vmatpush1.msra.mxu0 0.0
      %1985 = vmatprep.subr.mxu0 0.0
      %1986 = vmatpush1.msra.mxu0 0.0
      %1987 = vmatprep.subr.mxu0 0.0
      %1988 = vmatpush1.msra.mxu0 0.0
      %1989 = vmatprep.subr.mxu0 0.0
      %1990 = vmatpush1.msra.mxu0 0.0
      %1991 = vmatprep.subr.mxu0 0.0
      %1992 = vmatpush1.msra.mxu0 0.0
      %1993 = vmatprep.subr.mxu0 0.0
      %1994 = vmatpush1.msra.mxu0 0.0
      %1995 = vmatprep.subr.mxu0 0.0
      %1996 = vmatpush1.msra.mxu0 0.0
      %1997 = vmatprep.subr.mxu0 0.0
      %1998 = vmatpush1.msra.mxu0 0.0
      %1999 = vmatprep.mubr.f32.mxu0 0.0
      %2000 = vmatmul.mubr.f32.gmra.mrb[0].mxu0 %v1531
      %v2001 = vpop.f32.mrb[0].mxu0
      %v2002 = vadd.f32 0.0, %v2001
      %v2003 = vpop.f32.mrb[0].mxu0
      %2004 = vmatprep.mubr.f32.mxu0 0.0
      %2005 = vmatmul.mubr.f32.gmra.mrb[0].mxu0 %v1534
      %v2006 = vpop.f32.mrb[0].mxu0
      %v2007 = vadd.f32 0.0, %v2006
      %v2008 = vpop.f32.mrb[0].mxu0
      %2009 = vmatprep.mubr.f32.mxu0 0.0
      %2010 = vmatmul.mubr.f32.gmra.mrb[0].mxu0 %v1537
      %v2011 = vpop.f32.mrb[0].mxu0
      %v2012 = vadd.f32 0.0, %v2011
      %v2013 = vpop.f32.mrb[0].mxu0
      %2014 = vmatprep.mubr.f32.mxu0 0.0
      %2015 = vmatmul.mubr.f32.gmra.mrb[0].mxu0 %v1540
      %v2016 = vpop.f32.mrb[0].mxu0
      %v2017 = vadd.f32 0.0, %v2016
      %v2018 = vpop.f32.mrb[0].mxu0
      %2019 = vmatprep.mubr.f32.mxu0 0.0
      %2020 = vmatmul.mubr.f32.gmra.mrb[0].mxu0 %v1543
      %v2021 = vpop.f32.mrb[0].mxu0
      %v2022 = vadd.f32 0.0, %v2021
      %v2023 = vpop.f32.mrb[0].mxu0
      %2024 = vdwg.mxu0
      %v2026 = vsel %vm250, %v2002, 0
      %v2029 = vsel %vm250, %v2007, 0
      %v2032 = vsel %vm250, %v2012, 0
      %v2035 = vsel %vm250, %v2017, 0
      %v2038 = vsel %vm250, %v2022, 0
      %2040 = vmatprep.subr.mxu0 0.0
      %2041 = vmatpush1.msra.mxu0 %v1526
      %2042 = vmatprep.subr.mxu0 0.0
      %2043 = vmatpush1.msra.mxu0 %v1527
      %2044 = vmatprep.subr.mxu0 0.0
      %2045 = vmatpush1.msra.mxu0 %v1528
      %2046 = vmatprep.subr.mxu0 0.0
      %2047 = vmatpush1.msra.mxu0 %v1529
      %2048 = vmatprep.subr.mxu0 0.0
      %2049 = vmatpush1.msra.mxu0 0.0
      %2050 = vmatprep.subr.mxu0 0.0
      %2051 = vmatpush1.msra.mxu0 0.0
      %2052 = vmatprep.subr.mxu0 0.0
      %2053 = vmatpush1.msra.mxu0 0.0
      %2054 = vmatprep.subr.mxu0 0.0
      %2055 = vmatpush1.msra.mxu0 0.0
      %2056 = vmatprep.subr.mxu0 0.0
      %2057 = vmatpush1.msra.mxu0 0.0
      %2058 = vmatprep.subr.mxu0 0.0
      %2059 = vmatpush1.msra.mxu0 0.0
      %2060 = vmatprep.subr.mxu0 0.0
      %2061 = vmatpush1.msra.mxu0 0.0
      %2062 = vmatprep.subr.mxu0 0.0
      %2063 = vmatpush1.msra.mxu0 0.0
      %2064 = vmatprep.subr.mxu0 0.0
      %2065 = vmatpush1.msra.mxu0 0.0
      %2066 = vmatprep.subr.mxu0 0.0
      %2067 = vmatpush1.msra.mxu0 0.0
      %2068 = vmatprep.subr.mxu0 0.0
      %2069 = vmatpush1.msra.mxu0 0.0
      %2070 = vmatprep.subr.mxu0 0.0
      %2071 = vmatpush1.msra.mxu0 0.0
      %2072 = vmatprep.subr.mxu0 0.0
      %2073 = vmatpush1.msra.mxu0 0.0
      %2074 = vmatprep.subr.mxu0 0.0
      %2075 = vmatpush1.msra.mxu0 0.0
      %2076 = vmatprep.subr.mxu0 0.0
      %2077 = vmatpush1.msra.mxu0 0.0
      %2078 = vmatprep.subr.mxu0 0.0
      %2079 = vmatpush1.msra.mxu0 0.0
      %2080 = vmatprep.subr.mxu0 0.0
      %2081 = vmatpush1.msra.mxu0 0.0
      %2082 = vmatprep.subr.mxu0 0.0
      %2083 = vmatpush1.msra.mxu0 0.0
      %2084 = vmatprep.subr.mxu0 0.0
      %2085 = vmatpush1.msra.mxu0 0.0
      %2086 = vmatprep.subr.mxu0 0.0
      %2087 = vmatpush1.msra.mxu0 0.0
      %2088 = vmatprep.subr.mxu0 0.0
      %2089 = vmatpush1.msra.mxu0 0.0
      %2090 = vmatprep.subr.mxu0 0.0
      %2091 = vmatpush1.msra.mxu0 0.0
      %2092 = vmatprep.subr.mxu0 0.0
      %2093 = vmatpush1.msra.mxu0 0.0
      %2094 = vmatprep.subr.mxu0 0.0
      %2095 = vmatpush1.msra.mxu0 0.0
      %2096 = vmatprep.subr.mxu0 0.0
      %2097 = vmatpush1.msra.mxu0 0.0
      %2098 = vmatprep.subr.mxu0 0.0
      %2099 = vmatpush1.msra.mxu0 0.0
      %2100 = vmatprep.subr.mxu0 0.0
      %2101 = vmatpush1.msra.mxu0 0.0
      %2102 = vmatprep.subr.mxu0 0.0
      %2103 = vmatpush1.msra.mxu0 0.0
      %2104 = vmatprep.mubr.f32.mxu0 0.0
      %2105 = vmatmul.mubr.f32.gmra.mrb[0].mxu0 %v2026
      %v2106 = vpop.f32.mrb[0].mxu0
      %v2107 = vadd.f32 0.0, %v2106
      %v2108 = vpop.f32.mrb[0].mxu0
      %2109 = vmatprep.mubr.f32.mxu0 0.0
      %2110 = vmatmul.mubr.f32.gmra.mrb[0].mxu0 %v2029
      %v2111 = vpop.f32.mrb[0].mxu0
      %v2112 = vadd.f32 0.0, %v2111
      %v2113 = vpop.f32.mrb[0].mxu0
      %2114 = vmatprep.mubr.f32.mxu0 0.0
      %2115 = vmatmul.mubr.f32.gmra.mrb[0].mxu0 %v2032
      %v2116 = vpop.f32.mrb[0].mxu0
      %v2117 = vadd.f32 0.0, %v2116
      %v2118 = vpop.f32.mrb[0].mxu0
      %2119 = vmatprep.mubr.f32.mxu0 0.0
      %2120 = vmatmul.mubr.f32.gmra.mrb[0].mxu0 %v2035
      %v2121 = vpop.f32.mrb[0].mxu0
      %v2122 = vadd.f32 0.0, %v2121
      %v2123 = vpop.f32.mrb[0].mxu0
      %2124 = vmatprep.mubr.f32.mxu0 0.0
      %2125 = vmatmul.mubr.f32.gmra.mrb[0].mxu0 %v2038
      %v2126 = vpop.f32.mrb[0].mxu0
      %v2127 = vadd.f32 0.0, %v2126
      %v2128 = vpop.f32.mrb[0].mxu0
      %2129 = vdwg.mxu0
      %s2130 = scalar_lea.vmem %s227, 240
      %2131 = vst [vmem:[%s2130] sm:$0xff] %v1717
      %2132 = vst [vmem:[%s2130 + $0x8] sm:$0xff] %v1722
      %2133 = vst [vmem:[%s2130 + $0x10] sm:$0xff] %v1727
      %2134 = vst [vmem:[%s2130 + $0x18] sm:$0xff] %v1732
      %2135 = vst [vmem:[%s2130 + $0x20] sm:$0xff] %v1737
      %2136 = vst [vmem:[%s2130 + $0x28] sm:$0xff] %v1912
      %2137 = vst [vmem:[%s2130 + $0x30] sm:$0xff] %v1917
      %2138 = vst [vmem:[%s2130 + $0x38] sm:$0xff] %v1922
      %2139 = vst [vmem:[%s2130 + $0x40] sm:$0xff] %v1927
      %2140 = vst [vmem:[%s2130 + $0x48] sm:$0xff] %v1932
      %2141 = vst [vmem:[%s2130 + $0x50] sm:$0xff] %v2107
      %2142 = vst [vmem:[%s2130 + $0x58] sm:$0xff] %v2112
      %2143 = vst [vmem:[%s2130 + $0x60] sm:$0xff] %v2117
      %2144 = vst [vmem:[%s2130 + $0x68] sm:$0xff] %v2122
      %2145 = vst [vmem:[%s2130 + $0x70] sm:$0xff] %v2127
      %s2146 = scalar_lea.vmem %s206, 288
      %v2147 = vld [vmem:[%s2146] sm:$0xff]
      %v2148 = vld [vmem:[%s2146 + $0x8] sm:$0xff]
      %v2149 = vld [vmem:[%s2146 + $0x10] sm:$0xff]
      %v2150 = vld [vmem:[%s2146 + $0x18] sm:$0xff]
      %v2151 = vld [vmem:[%s2146 + $0x20] sm:$0xff]
      %v2152 = vld [vmem:[%s2146 + $0x28] sm:$0xff]
      %v2153 = vld [vmem:[%s2146 + $0x30] sm:$0xff]
      %v2154 = vld [vmem:[%s2146 + $0x38] sm:$0xff]
      %v2155 = vld [vmem:[%s2146 + $0x40] sm:$0xff]
      %v2156 = vld [vmem:[%s2146 + $0x48] sm:$0xff]
      %v2157 = vld [vmem:[%s2146 + $0x50] sm:$0xff]
      %v2158 = vld [vmem:[%s2146 + $0x58] sm:$0xff]
      %s2159 = scalar_lea.vmem %s213, 120
      %v2160 = vld [vmem:[%s2159] sm:$0xff]
      %v2161 = vld [vmem:[%s2159 + $0x8] sm:$0xff]
      %v2162 = vld [vmem:[%s2159 + $0x10] sm:$0xff]
      %v2163 = vld [vmem:[%s2159 + $0x18] sm:$0xff]
      %v2164 = vld [vmem:[%s2159 + $0x20] sm:$0xff]
      %s2165 = scalar_lea.vmem %s220, 96
      %v2166 = vld [vmem:[%s2165] sm:$0xff]
      %v2167 = vld [vmem:[%s2165 + $0x8] sm:$0xff]
      %v2168 = vld [vmem:[%s2165 + $0x10] sm:$0xff]
      %v2169 = vld [vmem:[%s2165 + $0x18] sm:$0xff]
      %v2171 = vsel %vm250, %v2160, 0
      %v2174 = vsel %vm250, %v2161, 0
      %v2177 = vsel %vm250, %v2162, 0
      %v2180 = vsel %vm250, %v2163, 0
      %v2183 = vsel %vm250, %v2164, 0
      %2185 = vmatprep.subr.mxu0 0.0
      %2186 = vmatpush1.msra.mxu0 %v2147
      %2187 = vmatprep.subr.mxu0 0.0
      %2188 = vmatpush1.msra.mxu0 %v2148
      %2189 = vmatprep.subr.mxu0 0.0
      %2190 = vmatpush1.msra.mxu0 %v2149
      %2191 = vmatprep.subr.mxu0 0.0
      %2192 = vmatpush1.msra.mxu0 %v2150
      %2193 = vmatprep.subr.mxu0 0.0
      %2194 = vmatpush1.msra.mxu0 0.0
      %2195 = vmatprep.subr.mxu0 0.0
      %2196 = vmatpush1.msra.mxu0 0.0
      %2197 = vmatprep.subr.mxu0 0.0
      %2198 = vmatpush1.msra.mxu0 0.0
      %2199 = vmatprep.subr.mxu0 0.0
      %2200 = vmatpush1.msra.mxu0 0.0
      %2201 = vmatprep.subr.mxu0 0.0
      %2202 = vmatpush1.msra.mxu0 0.0
      %2203 = vmatprep.subr.mxu0 0.0
      %2204 = vmatpush1.msra.mxu0 0.0
      %2205 = vmatprep.subr.mxu0 0.0
      %2206 = vmatpush1.msra.mxu0 0.0
      %2207 = vmatprep.subr.mxu0 0.0
      %2208 = vmatpush1.msra.mxu0 0.0
      %2209 = vmatprep.subr.mxu0 0.0
      %2210 = vmatpush1.msra.mxu0 0.0
      %2211 = vmatprep.subr.mxu0 0.0
      %2212 = vmatpush1.msra.mxu0 0.0
      %2213 = vmatprep.subr.mxu0 0.0
      %2214 = vmatpush1.msra.mxu0 0.0
      %2215 = vmatprep.subr.mxu0 0.0
      %2216 = vmatpush1.msra.mxu0 0.0
      %2217 = vmatprep.subr.mxu0 0.0
      %2218 = vmatpush1.msra.mxu0 0.0
      %2219 = vmatprep.subr.mxu0 0.0
      %2220 = vmatpush1.msra.mxu0 0.0
      %2221 = vmatprep.subr.mxu0 0.0
      %2222 = vmatpush1.msra.mxu0 0.0
      %2223 = vmatprep.subr.mxu0 0.0
      %2224 = vmatpush1.msra.mxu0 0.0
      %2225 = vmatprep.subr.mxu0 0.0
      %2226 = vmatpush1.msra.mxu0 0.0
      %2227 = vmatprep.subr.mxu0 0.0
      %2228 = vmatpush1.msra.mxu0 0.0
      %2229 = vmatprep.subr.mxu0 0.0
      %2230 = vmatpush1.msra.mxu0 0.0
      %2231 = vmatprep.subr.mxu0 0.0
      %2232 = vmatpush1.msra.mxu0 0.0
      %2233 = vmatprep.subr.mxu0 0.0
      %2234 = vmatpush1.msra.mxu0 0.0
      %2235 = vmatprep.subr.mxu0 0.0
      %2236 = vmatpush1.msra.mxu0 0.0
      %2237 = vmatprep.subr.mxu0 0.0
      %2238 = vmatpush1.msra.mxu0 0.0
      %2239 = vmatprep.subr.mxu0 0.0
      %2240 = vmatpush1.msra.mxu0 0.0
      %2241 = vmatprep.subr.mxu0 0.0
      %2242 = vmatpush1.msra.mxu0 0.0
      %2243 = vmatprep.subr.mxu0 0.0
      %2244 = vmatpush1.msra.mxu0 0.0
      %2245 = vmatprep.subr.mxu0 0.0
      %2246 = vmatpush1.msra.mxu0 0.0
      %2247 = vmatprep.subr.mxu0 0.0
      %2248 = vmatpush1.msra.mxu0 0.0
      %2249 = vmatprep.mubr.f32.mxu0 0.0
      %2250 = vmatmul.mubr.f32.gmra.mrb[0].mxu0 %v2171
      %v2251 = vpop.f32.mrb[0].mxu0
      %v2252 = vadd.f32 0.0, %v2251
      %v2253 = vpop.f32.mrb[0].mxu0
      %2254 = vmatprep.mubr.f32.mxu0 0.0
      %2255 = vmatmul.mubr.f32.gmra.mrb[0].mxu0 %v2174
      %v2256 = vpop.f32.mrb[0].mxu0
      %v2257 = vadd.f32 0.0, %v2256
      %v2258 = vpop.f32.mrb[0].mxu0
      %2259 = vmatprep.mubr.f32.mxu0 0.0
      %2260 = vmatmul.mubr.f32.gmra.mrb[0].mxu0 %v2177
      %v2261 = vpop.f32.mrb[0].mxu0
      %v2262 = vadd.f32 0.0, %v2261
      %v2263 = vpop.f32.mrb[0].mxu0
      %2264 = vmatprep.mubr.f32.mxu0 0.0
      %2265 = vmatmul.mubr.f32.gmra.mrb[0].mxu0 %v2180
      %v2266 = vpop.f32.mrb[0].mxu0
      %v2267 = vadd.f32 0.0, %v2266
      %v2268 = vpop.f32.mrb[0].mxu0
      %2269 = vmatprep.mubr.f32.mxu0 0.0
      %2270 = vmatmul.mubr.f32.gmra.mrb[0].mxu0 %v2183
      %v2271 = vpop.f32.mrb[0].mxu0
      %v2272 = vadd.f32 0.0, %v2271
      %v2273 = vpop.f32.mrb[0].mxu0
      %2274 = vdwg.mxu0
      %v2276 = vsel %vm250, %v2252, 0
      %v2279 = vsel %vm250, %v2257, 0
      %v2282 = vsel %vm250, %v2262, 0
      %v2285 = vsel %vm250, %v2267, 0
      %v2288 = vsel %vm250, %v2272, 0
      %2290 = vmatprep.subr.mxu0 0.0
      %2291 = vmatpush1.msra.mxu0 %v2166
      %2292 = vmatprep.subr.mxu0 0.0
      %2293 = vmatpush1.msra.mxu0 %v2167
      %2294 = vmatprep.subr.mxu0 0.0
      %2295 = vmatpush1.msra.mxu0 %v2168
      %2296 = vmatprep.subr.mxu0 0.0
      %2297 = vmatpush1.msra.mxu0 %v2169
      %2298 = vmatprep.subr.mxu0 0.0
      %2299 = vmatpush1.msra.mxu0 0.0
      %2300 = vmatprep.subr.mxu0 0.0
      %2301 = vmatpush1.msra.mxu0 0.0
      %2302 = vmatprep.subr.mxu0 0.0
      %2303 = vmatpush1.msra.mxu0 0.0
      %2304 = vmatprep.subr.mxu0 0.0
      %2305 = vmatpush1.msra.mxu0 0.0
      %2306 = vmatprep.subr.mxu0 0.0
      %2307 = vmatpush1.msra.mxu0 0.0
      %2308 = vmatprep.subr.mxu0 0.0
      %2309 = vmatpush1.msra.mxu0 0.0
      %2310 = vmatprep.subr.mxu0 0.0
      %2311 = vmatpush1.msra.mxu0 0.0
      %2312 = vmatprep.subr.mxu0 0.0
      %2313 = vmatpush1.msra.mxu0 0.0
      %2314 = vmatprep.subr.mxu0 0.0
      %2315 = vmatpush1.msra.mxu0 0.0
      %2316 = vmatprep.subr.mxu0 0.0
      %2317 = vmatpush1.msra.mxu0 0.0
      %2318 = vmatprep.subr.mxu0 0.0
      %2319 = vmatpush1.msra.mxu0 0.0
      %2320 = vmatprep.subr.mxu0 0.0
      %2321 = vmatpush1.msra.mxu0 0.0
      %2322 = vmatprep.subr.mxu0 0.0
      %2323 = vmatpush1.msra.mxu0 0.0
      %2324 = vmatprep.subr.mxu0 0.0
      %2325 = vmatpush1.msra.mxu0 0.0
      %2326 = vmatprep.subr.mxu0 0.0
      %2327 = vmatpush1.msra.mxu0 0.0
      %2328 = vmatprep.subr.mxu0 0.0
      %2329 = vmatpush1.msra.mxu0 0.0
      %2330 = vmatprep.subr.mxu0 0.0
      %2331 = vmatpush1.msra.mxu0 0.0
      %2332 = vmatprep.subr.mxu0 0.0
      %2333 = vmatpush1.msra.mxu0 0.0
      %2334 = vmatprep.subr.mxu0 0.0
      %2335 = vmatpush1.msra.mxu0 0.0
      %2336 = vmatprep.subr.mxu0 0.0
      %2337 = vmatpush1.msra.mxu0 0.0
      %2338 = vmatprep.subr.mxu0 0.0
      %2339 = vmatpush1.msra.mxu0 0.0
      %2340 = vmatprep.subr.mxu0 0.0
      %2341 = vmatpush1.msra.mxu0 0.0
      %2342 = vmatprep.subr.mxu0 0.0
      %2343 = vmatpush1.msra.mxu0 0.0
      %2344 = vmatprep.subr.mxu0 0.0
      %2345 = vmatpush1.msra.mxu0 0.0
      %2346 = vmatprep.subr.mxu0 0.0
      %2347 = vmatpush1.msra.mxu0 0.0
      %2348 = vmatprep.subr.mxu0 0.0
      %2349 = vmatpush1.msra.mxu0 0.0
      %2350 = vmatprep.subr.mxu0 0.0
      %2351 = vmatpush1.msra.mxu0 0.0
      %2352 = vmatprep.subr.mxu0 0.0
      %2353 = vmatpush1.msra.mxu0 0.0
      %2354 = vmatprep.mubr.f32.mxu0 0.0
      %2355 = vmatmul.mubr.f32.gmra.mrb[0].mxu0 %v2276
      %v2356 = vpop.f32.mrb[0].mxu0
      %v2357 = vadd.f32 0.0, %v2356
      %v2358 = vpop.f32.mrb[0].mxu0
      %2359 = vmatprep.mubr.f32.mxu0 0.0
      %2360 = vmatmul.mubr.f32.gmra.mrb[0].mxu0 %v2279
      %v2361 = vpop.f32.mrb[0].mxu0
      %v2362 = vadd.f32 0.0, %v2361
      %v2363 = vpop.f32.mrb[0].mxu0
      %2364 = vmatprep.mubr.f32.mxu0 0.0
      %2365 = vmatmul.mubr.f32.gmra.mrb[0].mxu0 %v2282
      %v2366 = vpop.f32.mrb[0].mxu0
      %v2367 = vadd.f32 0.0, %v2366
      %v2368 = vpop.f32.mrb[0].mxu0
      %2369 = vmatprep.mubr.f32.mxu0 0.0
      %2370 = vmatmul.mubr.f32.gmra.mrb[0].mxu0 %v2285
      %v2371 = vpop.f32.mrb[0].mxu0
      %v2372 = vadd.f32 0.0, %v2371
      %v2373 = vpop.f32.mrb[0].mxu0
      %2374 = vmatprep.mubr.f32.mxu0 0.0
      %2375 = vmatmul.mubr.f32.gmra.mrb[0].mxu0 %v2288
      %v2376 = vpop.f32.mrb[0].mxu0
      %v2377 = vadd.f32 0.0, %v2376
      %v2378 = vpop.f32.mrb[0].mxu0
      %2379 = vdwg.mxu0
      %2380 = vmatprep.subr.mxu0 0.0
      %2381 = vmatpush1.msra.mxu0 %v2151
      %2382 = vmatprep.subr.mxu0 0.0
      %2383 = vmatpush1.msra.mxu0 %v2152
      %2384 = vmatprep.subr.mxu0 0.0
      %2385 = vmatpush1.msra.mxu0 %v2153
      %2386 = vmatprep.subr.mxu0 0.0
      %2387 = vmatpush1.msra.mxu0 %v2154
      %2388 = vmatprep.subr.mxu0 0.0
      %2389 = vmatpush1.msra.mxu0 0.0
      %2390 = vmatprep.subr.mxu0 0.0
      %2391 = vmatpush1.msra.mxu0 0.0
      %2392 = vmatprep.subr.mxu0 0.0
      %2393 = vmatpush1.msra.mxu0 0.0
      %2394 = vmatprep.subr.mxu0 0.0
      %2395 = vmatpush1.msra.mxu0 0.0
      %2396 = vmatprep.subr.mxu0 0.0
      %2397 = vmatpush1.msra.mxu0 0.0
      %2398 = vmatprep.subr.mxu0 0.0
      %2399 = vmatpush1.msra.mxu0 0.0
      %2400 = vmatprep.subr.mxu0 0.0
      %2401 = vmatpush1.msra.mxu0 0.0
      %2402 = vmatprep.subr.mxu0 0.0
      %2403 = vmatpush1.msra.mxu0 0.0
      %2404 = vmatprep.subr.mxu0 0.0
      %2405 = vmatpush1.msra.mxu0 0.0
      %2406 = vmatprep.subr.mxu0 0.0
      %2407 = vmatpush1.msra.mxu0 0.0
      %2408 = vmatprep.subr.mxu0 0.0
      %2409 = vmatpush1.msra.mxu0 0.0
      %2410 = vmatprep.subr.mxu0 0.0
      %2411 = vmatpush1.msra.mxu0 0.0
      %2412 = vmatprep.subr.mxu0 0.0
      %2413 = vmatpush1.msra.mxu0 0.0
      %2414 = vmatprep.subr.mxu0 0.0
      %2415 = vmatpush1.msra.mxu0 0.0
      %2416 = vmatprep.subr.mxu0 0.0
      %2417 = vmatpush1.msra.mxu0 0.0
      %2418 = vmatprep.subr.mxu0 0.0
      %2419 = vmatpush1.msra.mxu0 0.0
      %2420 = vmatprep.subr.mxu0 0.0
      %2421 = vmatpush1.msra.mxu0 0.0
      %2422 = vmatprep.subr.mxu0 0.0
      %2423 = vmatpush1.msra.mxu0 0.0
      %2424 = vmatprep.subr.mxu0 0.0
      %2425 = vmatpush1.msra.mxu0 0.0
      %2426 = vmatprep.subr.mxu0 0.0
      %2427 = vmatpush1.msra.mxu0 0.0
      %2428 = vmatprep.subr.mxu0 0.0
      %2429 = vmatpush1.msra.mxu0 0.0
      %2430 = vmatprep.subr.mxu0 0.0
      %2431 = vmatpush1.msra.mxu0 0.0
      %2432 = vmatprep.subr.mxu0 0.0
      %2433 = vmatpush1.msra.mxu0 0.0
      %2434 = vmatprep.subr.mxu0 0.0
      %2435 = vmatpush1.msra.mxu0 0.0
      %2436 = vmatprep.subr.mxu0 0.0
      %2437 = vmatpush1.msra.mxu0 0.0
      %2438 = vmatprep.subr.mxu0 0.0
      %2439 = vmatpush1.msra.mxu0 0.0
      %2440 = vmatprep.subr.mxu0 0.0
      %2441 = vmatpush1.msra.mxu0 0.0
      %2442 = vmatprep.subr.mxu0 0.0
      %2443 = vmatpush1.msra.mxu0 0.0
      %2444 = vmatprep.mubr.f32.mxu0 0.0
      %2445 = vmatmul.mubr.f32.gmra.mrb[0].mxu0 %v2171
      %v2446 = vpop.f32.mrb[0].mxu0
      %v2447 = vadd.f32 0.0, %v2446
      %v2448 = vpop.f32.mrb[0].mxu0
      %2449 = vmatprep.mubr.f32.mxu0 0.0
      %2450 = vmatmul.mubr.f32.gmra.mrb[0].mxu0 %v2174
      %v2451 = vpop.f32.mrb[0].mxu0
      %v2452 = vadd.f32 0.0, %v2451
      %v2453 = vpop.f32.mrb[0].mxu0
      %2454 = vmatprep.mubr.f32.mxu0 0.0
      %2455 = vmatmul.mubr.f32.gmra.mrb[0].mxu0 %v2177
      %v2456 = vpop.f32.mrb[0].mxu0
      %v2457 = vadd.f32 0.0, %v2456
      %v2458 = vpop.f32.mrb[0].mxu0
      %2459 = vmatprep.mubr.f32.mxu0 0.0
      %2460 = vmatmul.mubr.f32.gmra.mrb[0].mxu0 %v2180
      %v2461 = vpop.f32.mrb[0].mxu0
      %v2462 = vadd.f32 0.0, %v2461
      %v2463 = vpop.f32.mrb[0].mxu0
      %2464 = vmatprep.mubr.f32.mxu0 0.0
      %2465 = vmatmul.mubr.f32.gmra.mrb[0].mxu0 %v2183
      %v2466 = vpop.f32.mrb[0].mxu0
      %v2467 = vadd.f32 0.0, %v2466
      %v2468 = vpop.f32.mrb[0].mxu0
      %2469 = vdwg.mxu0
      %v2471 = vsel %vm250, %v2447, 0
      %v2474 = vsel %vm250, %v2452, 0
      %v2477 = vsel %vm250, %v2457, 0
      %v2480 = vsel %vm250, %v2462, 0
      %v2483 = vsel %vm250, %v2467, 0
      %2485 = vmatprep.subr.mxu0 0.0
      %2486 = vmatpush1.msra.mxu0 %v2166
      %2487 = vmatprep.subr.mxu0 0.0
      %2488 = vmatpush1.msra.mxu0 %v2167
      %2489 = vmatprep.subr.mxu0 0.0
      %2490 = vmatpush1.msra.mxu0 %v2168
      %2491 = vmatprep.subr.mxu0 0.0
      %2492 = vmatpush1.msra.mxu0 %v2169
      %2493 = vmatprep.subr.mxu0 0.0
      %2494 = vmatpush1.msra.mxu0 0.0
      %2495 = vmatprep.subr.mxu0 0.0
      %2496 = vmatpush1.msra.mxu0 0.0
      %2497 = vmatprep.subr.mxu0 0.0
      %2498 = vmatpush1.msra.mxu0 0.0
      %2499 = vmatprep.subr.mxu0 0.0
      %2500 = vmatpush1.msra.mxu0 0.0
      %2501 = vmatprep.subr.mxu0 0.0
      %2502 = vmatpush1.msra.mxu0 0.0
      %2503 = vmatprep.subr.mxu0 0.0
      %2504 = vmatpush1.msra.mxu0 0.0
      %2505 = vmatprep.subr.mxu0 0.0
      %2506 = vmatpush1.msra.mxu0 0.0
      %2507 = vmatprep.subr.mxu0 0.0
      %2508 = vmatpush1.msra.mxu0 0.0
      %2509 = vmatprep.subr.mxu0 0.0
      %2510 = vmatpush1.msra.mxu0 0.0
      %2511 = vmatprep.subr.mxu0 0.0
      %2512 = vmatpush1.msra.mxu0 0.0
      %2513 = vmatprep.subr.mxu0 0.0
      %2514 = vmatpush1.msra.mxu0 0.0
      %2515 = vmatprep.subr.mxu0 0.0
      %2516 = vmatpush1.msra.mxu0 0.0
      %2517 = vmatprep.subr.mxu0 0.0
      %2518 = vmatpush1.msra.mxu0 0.0
      %2519 = vmatprep.subr.mxu0 0.0
      %2520 = vmatpush1.msra.mxu0 0.0
      %2521 = vmatprep.subr.mxu0 0.0
      %2522 = vmatpush1.msra.mxu0 0.0
      %2523 = vmatprep.subr.mxu0 0.0
      %2524 = vmatpush1.msra.mxu0 0.0
      %2525 = vmatprep.subr.mxu0 0.0
      %2526 = vmatpush1.msra.mxu0 0.0
      %2527 = vmatprep.subr.mxu0 0.0
      %2528 = vmatpush1.msra.mxu0 0.0
      %2529 = vmatprep.subr.mxu0 0.0
      %2530 = vmatpush1.msra.mxu0 0.0
      %2531 = vmatprep.subr.mxu0 0.0
      %2532 = vmatpush1.msra.mxu0 0.0
      %2533 = vmatprep.subr.mxu0 0.0
      %2534 = vmatpush1.msra.mxu0 0.0
      %2535 = vmatprep.subr.mxu0 0.0
      %2536 = vmatpush1.msra.mxu0 0.0
      %2537 = vmatprep.subr.mxu0 0.0
      %2538 = vmatpush1.msra.mxu0 0.0
      %2539 = vmatprep.subr.mxu0 0.0
      %2540 = vmatpush1.msra.mxu0 0.0
      %2541 = vmatprep.subr.mxu0 0.0
      %2542 = vmatpush1.msra.mxu0 0.0
      %2543 = vmatprep.subr.mxu0 0.0
      %2544 = vmatpush1.msra.mxu0 0.0
      %2545 = vmatprep.subr.mxu0 0.0
      %2546 = vmatpush1.msra.mxu0 0.0
      %2547 = vmatprep.subr.mxu0 0.0
      %2548 = vmatpush1.msra.mxu0 0.0
      %2549 = vmatprep.mubr.f32.mxu0 0.0
      %2550 = vmatmul.mubr.f32.gmra.mrb[0].mxu0 %v2471
      %v2551 = vpop.f32.mrb[0].mxu0
      %v2552 = vadd.f32 0.0, %v2551
      %v2553 = vpop.f32.mrb[0].mxu0
      %2554 = vmatprep.mubr.f32.mxu0 0.0
      %2555 = vmatmul.mubr.f32.gmra.mrb[0].mxu0 %v2474
      %v2556 = vpop.f32.mrb[0].mxu0
      %v2557 = vadd.f32 0.0, %v2556
      %v2558 = vpop.f32.mrb[0].mxu0
      %2559 = vmatprep.mubr.f32.mxu0 0.0
      %2560 = vmatmul.mubr.f32.gmra.mrb[0].mxu0 %v2477
      %v2561 = vpop.f32.mrb[0].mxu0
      %v2562 = vadd.f32 0.0, %v2561
      %v2563 = vpop.f32.mrb[0].mxu0
      %2564 = vmatprep.mubr.f32.mxu0 0.0
      %2565 = vmatmul.mubr.f32.gmra.mrb[0].mxu0 %v2480
      %v2566 = vpop.f32.mrb[0].mxu0
      %v2567 = vadd.f32 0.0, %v2566
      %v2568 = vpop.f32.mrb[0].mxu0
      %2569 = vmatprep.mubr.f32.mxu0 0.0
      %2570 = vmatmul.mubr.f32.gmra.mrb[0].mxu0 %v2483
      %v2571 = vpop.f32.mrb[0].mxu0
      %v2572 = vadd.f32 0.0, %v2571
      %v2573 = vpop.f32.mrb[0].mxu0
      %2574 = vdwg.mxu0
      %2575 = vmatprep.subr.mxu0 0.0
      %2576 = vmatpush1.msra.mxu0 %v2155
      %2577 = vmatprep.subr.mxu0 0.0
      %2578 = vmatpush1.msra.mxu0 %v2156
      %2579 = vmatprep.subr.mxu0 0.0
      %2580 = vmatpush1.msra.mxu0 %v2157
      %2581 = vmatprep.subr.mxu0 0.0
      %2582 = vmatpush1.msra.mxu0 %v2158
      %2583 = vmatprep.subr.mxu0 0.0
      %2584 = vmatpush1.msra.mxu0 0.0
      %2585 = vmatprep.subr.mxu0 0.0
      %2586 = vmatpush1.msra.mxu0 0.0
      %2587 = vmatprep.subr.mxu0 0.0
      %2588 = vmatpush1.msra.mxu0 0.0
      %2589 = vmatprep.subr.mxu0 0.0
      %2590 = vmatpush1.msra.mxu0 0.0
      %2591 = vmatprep.subr.mxu0 0.0
      %2592 = vmatpush1.msra.mxu0 0.0
      %2593 = vmatprep.subr.mxu0 0.0
      %2594 = vmatpush1.msra.mxu0 0.0
      %2595 = vmatprep.subr.mxu0 0.0
      %2596 = vmatpush1.msra.mxu0 0.0
      %2597 = vmatprep.subr.mxu0 0.0
      %2598 = vmatpush1.msra.mxu0 0.0
      %2599 = vmatprep.subr.mxu0 0.0
      %2600 = vmatpush1.msra.mxu0 0.0
      %2601 = vmatprep.subr.mxu0 0.0
      %2602 = vmatpush1.msra.mxu0 0.0
      %2603 = vmatprep.subr.mxu0 0.0
      %2604 = vmatpush1.msra.mxu0 0.0
      %2605 = vmatprep.subr.mxu0 0.0
      %2606 = vmatpush1.msra.mxu0 0.0
      %2607 = vmatprep.subr.mxu0 0.0
      %2608 = vmatpush1.msra.mxu0 0.0
      %2609 = vmatprep.subr.mxu0 0.0
      %2610 = vmatpush1.msra.mxu0 0.0
      %2611 = vmatprep.subr.mxu0 0.0
      %2612 = vmatpush1.msra.mxu0 0.0
      %2613 = vmatprep.subr.mxu0 0.0
      %2614 = vmatpush1.msra.mxu0 0.0
      %2615 = vmatprep.subr.mxu0 0.0
      %2616 = vmatpush1.msra.mxu0 0.0
      %2617 = vmatprep.subr.mxu0 0.0
      %2618 = vmatpush1.msra.mxu0 0.0
      %2619 = vmatprep.subr.mxu0 0.0
      %2620 = vmatpush1.msra.mxu0 0.0
      %2621 = vmatprep.subr.mxu0 0.0
      %2622 = vmatpush1.msra.mxu0 0.0
      %2623 = vmatprep.subr.mxu0 0.0
      %2624 = vmatpush1.msra.mxu0 0.0
      %2625 = vmatprep.subr.mxu0 0.0
      %2626 = vmatpush1.msra.mxu0 0.0
      %2627 = vmatprep.subr.mxu0 0.0
      %2628 = vmatpush1.msra.mxu0 0.0
      %2629 = vmatprep.subr.mxu0 0.0
      %2630 = vmatpush1.msra.mxu0 0.0
      %2631 = vmatprep.subr.mxu0 0.0
      %2632 = vmatpush1.msra.mxu0 0.0
      %2633 = vmatprep.subr.mxu0 0.0
      %2634 = vmatpush1.msra.mxu0 0.0
      %2635 = vmatprep.subr.mxu0 0.0
      %2636 = vmatpush1.msra.mxu0 0.0
      %2637 = vmatprep.subr.mxu0 0.0
      %2638 = vmatpush1.msra.mxu0 0.0
      %2639 = vmatprep.mubr.f32.mxu0 0.0
      %2640 = vmatmul.mubr.f32.gmra.mrb[0].mxu0 %v2171
      %v2641 = vpop.f32.mrb[0].mxu0
      %v2642 = vadd.f32 0.0, %v2641
      %v2643 = vpop.f32.mrb[0].mxu0
      %2644 = vmatprep.mubr.f32.mxu0 0.0
      %2645 = vmatmul.mubr.f32.gmra.mrb[0].mxu0 %v2174
      %v2646 = vpop.f32.mrb[0].mxu0
      %v2647 = vadd.f32 0.0, %v2646
      %v2648 = vpop.f32.mrb[0].mxu0
      %2649 = vmatprep.mubr.f32.mxu0 0.0
      %2650 = vmatmul.mubr.f32.gmra.mrb[0].mxu0 %v2177
      %v2651 = vpop.f32.mrb[0].mxu0
      %v2652 = vadd.f32 0.0, %v2651
      %v2653 = vpop.f32.mrb[0].mxu0
      %2654 = vmatprep.mubr.f32.mxu0 0.0
      %2655 = vmatmul.mubr.f32.gmra.mrb[0].mxu0 %v2180
      %v2656 = vpop.f32.mrb[0].mxu0
      %v2657 = vadd.f32 0.0, %v2656
      %v2658 = vpop.f32.mrb[0].mxu0
      %2659 = vmatprep.mubr.f32.mxu0 0.0
      %2660 = vmatmul.mubr.f32.gmra.mrb[0].mxu0 %v2183
      %v2661 = vpop.f32.mrb[0].mxu0
      %v2662 = vadd.f32 0.0, %v2661
      %v2663 = vpop.f32.mrb[0].mxu0
      %2664 = vdwg.mxu0
      %v2666 = vsel %vm250, %v2642, 0
      %v2669 = vsel %vm250, %v2647, 0
      %v2672 = vsel %vm250, %v2652, 0
      %v2675 = vsel %vm250, %v2657, 0
      %v2678 = vsel %vm250, %v2662, 0
      %2680 = vmatprep.subr.mxu0 0.0
      %2681 = vmatpush1.msra.mxu0 %v2166
      %2682 = vmatprep.subr.mxu0 0.0
      %2683 = vmatpush1.msra.mxu0 %v2167
      %2684 = vmatprep.subr.mxu0 0.0
      %2685 = vmatpush1.msra.mxu0 %v2168
      %2686 = vmatprep.subr.mxu0 0.0
      %2687 = vmatpush1.msra.mxu0 %v2169
      %2688 = vmatprep.subr.mxu0 0.0
      %2689 = vmatpush1.msra.mxu0 0.0
      %2690 = vmatprep.subr.mxu0 0.0
      %2691 = vmatpush1.msra.mxu0 0.0
      %2692 = vmatprep.subr.mxu0 0.0
      %2693 = vmatpush1.msra.mxu0 0.0
      %2694 = vmatprep.subr.mxu0 0.0
      %2695 = vmatpush1.msra.mxu0 0.0
      %2696 = vmatprep.subr.mxu0 0.0
      %2697 = vmatpush1.msra.mxu0 0.0
      %2698 = vmatprep.subr.mxu0 0.0
      %2699 = vmatpush1.msra.mxu0 0.0
      %2700 = vmatprep.subr.mxu0 0.0
      %2701 = vmatpush1.msra.mxu0 0.0
      %2702 = vmatprep.subr.mxu0 0.0
      %2703 = vmatpush1.msra.mxu0 0.0
      %2704 = vmatprep.subr.mxu0 0.0
      %2705 = vmatpush1.msra.mxu0 0.0
      %2706 = vmatprep.subr.mxu0 0.0
      %2707 = vmatpush1.msra.mxu0 0.0
      %2708 = vmatprep.subr.mxu0 0.0
      %2709 = vmatpush1.msra.mxu0 0.0
      %2710 = vmatprep.subr.mxu0 0.0
      %2711 = vmatpush1.msra.mxu0 0.0
      %2712 = vmatprep.subr.mxu0 0.0
      %2713 = vmatpush1.msra.mxu0 0.0
      %2714 = vmatprep.subr.mxu0 0.0
      %2715 = vmatpush1.msra.mxu0 0.0
      %2716 = vmatprep.subr.mxu0 0.0
      %2717 = vmatpush1.msra.mxu0 0.0
      %2718 = vmatprep.subr.mxu0 0.0
      %2719 = vmatpush1.msra.mxu0 0.0
      %2720 = vmatprep.subr.mxu0 0.0
      %2721 = vmatpush1.msra.mxu0 0.0
      %2722 = vmatprep.subr.mxu0 0.0
      %2723 = vmatpush1.msra.mxu0 0.0
      %2724 = vmatprep.subr.mxu0 0.0
      %2725 = vmatpush1.msra.mxu0 0.0
      %2726 = vmatprep.subr.mxu0 0.0
      %2727 = vmatpush1.msra.mxu0 0.0
      %2728 = vmatprep.subr.mxu0 0.0
      %2729 = vmatpush1.msra.mxu0 0.0
      %2730 = vmatprep.subr.mxu0 0.0
      %2731 = vmatpush1.msra.mxu0 0.0
      %2732 = vmatprep.subr.mxu0 0.0
      %2733 = vmatpush1.msra.mxu0 0.0
      %2734 = vmatprep.subr.mxu0 0.0
      %2735 = vmatpush1.msra.mxu0 0.0
      %2736 = vmatprep.subr.mxu0 0.0
      %2737 = vmatpush1.msra.mxu0 0.0
      %2738 = vmatprep.subr.mxu0 0.0
      %2739 = vmatpush1.msra.mxu0 0.0
      %2740 = vmatprep.subr.mxu0 0.0
      %2741 = vmatpush1.msra.mxu0 0.0
      %2742 = vmatprep.subr.mxu0 0.0
      %2743 = vmatpush1.msra.mxu0 0.0
      %2744 = vmatprep.mubr.f32.mxu0 0.0
      %2745 = vmatmul.mubr.f32.gmra.mrb[0].mxu0 %v2666
      %v2746 = vpop.f32.mrb[0].mxu0
      %v2747 = vadd.f32 0.0, %v2746
      %v2748 = vpop.f32.mrb[0].mxu0
      %2749 = vmatprep.mubr.f32.mxu0 0.0
      %2750 = vmatmul.mubr.f32.gmra.mrb[0].mxu0 %v2669
      %v2751 = vpop.f32.mrb[0].mxu0
      %v2752 = vadd.f32 0.0, %v2751
      %v2753 = vpop.f32.mrb[0].mxu0
      %2754 = vmatprep.mubr.f32.mxu0 0.0
      %2755 = vmatmul.mubr.f32.gmra.mrb[0].mxu0 %v2672
      %v2756 = vpop.f32.mrb[0].mxu0
      %v2757 = vadd.f32 0.0, %v2756
      %v2758 = vpop.f32.mrb[0].mxu0
      %2759 = vmatprep.mubr.f32.mxu0 0.0
      %2760 = vmatmul.mubr.f32.gmra.mrb[0].mxu0 %v2675
      %v2761 = vpop.f32.mrb[0].mxu0
      %v2762 = vadd.f32 0.0, %v2761
      %v2763 = vpop.f32.mrb[0].mxu0
      %2764 = vmatprep.mubr.f32.mxu0 0.0
      %2765 = vmatmul.mubr.f32.gmra.mrb[0].mxu0 %v2678
      %v2766 = vpop.f32.mrb[0].mxu0
      %v2767 = vadd.f32 0.0, %v2766
      %v2768 = vpop.f32.mrb[0].mxu0
      %2769 = vdwg.mxu0
      %s2770 = scalar_lea.vmem %s227, 360
      %2771 = vst [vmem:[%s2770] sm:$0xff] %v2357
      %2772 = vst [vmem:[%s2770 + $0x8] sm:$0xff] %v2362
      %2773 = vst [vmem:[%s2770 + $0x10] sm:$0xff] %v2367
      %2774 = vst [vmem:[%s2770 + $0x18] sm:$0xff] %v2372
      %2775 = vst [vmem:[%s2770 + $0x20] sm:$0xff] %v2377
      %2776 = vst [vmem:[%s2770 + $0x28] sm:$0xff] %v2552
      %2777 = vst [vmem:[%s2770 + $0x30] sm:$0xff] %v2557
      %2778 = vst [vmem:[%s2770 + $0x38] sm:$0xff] %v2562
      %2779 = vst [vmem:[%s2770 + $0x40] sm:$0xff] %v2567
      %2780 = vst [vmem:[%s2770 + $0x48] sm:$0xff] %v2572
      %2781 = vst [vmem:[%s2770 + $0x50] sm:$0xff] %v2747
      %2782 = vst [vmem:[%s2770 + $0x58] sm:$0xff] %v2752
      %2783 = vst [vmem:[%s2770 + $0x60] sm:$0xff] %v2757
      %2784 = vst [vmem:[%s2770 + $0x68] sm:$0xff] %v2762
      %2785 = vst [vmem:[%s2770 + $0x70] sm:$0xff] %v2767
      %s2786 = scalar_lea.vmem %s206, 384
      %v2787 = vld [vmem:[%s2786] sm:$0xff]
      %v2788 = vld [vmem:[%s2786 + $0x8] sm:$0xff]
      %v2789 = vld [vmem:[%s2786 + $0x10] sm:$0xff]
      %v2790 = vld [vmem:[%s2786 + $0x18] sm:$0xff]
      %v2791 = vld [vmem:[%s2786 + $0x20] sm:$0xff]
      %v2792 = vld [vmem:[%s2786 + $0x28] sm:$0xff]
      %v2793 = vld [vmem:[%s2786 + $0x30] sm:$0xff]
      %v2794 = vld [vmem:[%s2786 + $0x38] sm:$0xff]
      %v2795 = vld [vmem:[%s2786 + $0x40] sm:$0xff]
      %v2796 = vld [vmem:[%s2786 + $0x48] sm:$0xff]
      %v2797 = vld [vmem:[%s2786 + $0x50] sm:$0xff]
      %v2798 = vld [vmem:[%s2786 + $0x58] sm:$0xff]
      %s2799 = scalar_lea.vmem %s213, 160
      %v2800 = vld [vmem:[%s2799] sm:$0xff]
      %v2801 = vld [vmem:[%s2799 + $0x8] sm:$0xff]
      %v2802 = vld [vmem:[%s2799 + $0x10] sm:$0xff]
      %v2803 = vld [vmem:[%s2799 + $0x18] sm:$0xff]
      %v2804 = vld [vmem:[%s2799 + $0x20] sm:$0xff]
      %s2805 = scalar_lea.vmem %s220, 128
      %v2806 = vld [vmem:[%s2805] sm:$0xff]
      %v2807 = vld [vmem:[%s2805 + $0x8] sm:$0xff]
      %v2808 = vld [vmem:[%s2805 + $0x10] sm:$0xff]
      %v2809 = vld [vmem:[%s2805 + $0x18] sm:$0xff]
      %v2811 = vsel %vm250, %v2800, 0
      %v2814 = vsel %vm250, %v2801, 0
      %v2817 = vsel %vm250, %v2802, 0
      %v2820 = vsel %vm250, %v2803, 0
      %v2823 = vsel %vm250, %v2804, 0
      %2825 = vmatprep.subr.mxu0 0.0
      %2826 = vmatpush1.msra.mxu0 %v2787
      %2827 = vmatprep.subr.mxu0 0.0
      %2828 = vmatpush1.msra.mxu0 %v2788
      %2829 = vmatprep.subr.mxu0 0.0
      %2830 = vmatpush1.msra.mxu0 %v2789
      %2831 = vmatprep.subr.mxu0 0.0
      %2832 = vmatpush1.msra.mxu0 %v2790
      %2833 = vmatprep.subr.mxu0 0.0
      %2834 = vmatpush1.msra.mxu0 0.0
      %2835 = vmatprep.subr.mxu0 0.0
      %2836 = vmatpush1.msra.mxu0 0.0
      %2837 = vmatprep.subr.mxu0 0.0
      %2838 = vmatpush1.msra.mxu0 0.0
      %2839 = vmatprep.subr.mxu0 0.0
      %2840 = vmatpush1.msra.mxu0 0.0
      %2841 = vmatprep.subr.mxu0 0.0
      %2842 = vmatpush1.msra.mxu0 0.0
      %2843 = vmatprep.subr.mxu0 0.0
      %2844 = vmatpush1.msra.mxu0 0.0
      %2845 = vmatprep.subr.mxu0 0.0
      %2846 = vmatpush1.msra.mxu0 0.0
      %2847 = vmatprep.subr.mxu0 0.0
      %2848 = vmatpush1.msra.mxu0 0.0
      %2849 = vmatprep.subr.mxu0 0.0
      %2850 = vmatpush1.msra.mxu0 0.0
      %2851 = vmatprep.subr.mxu0 0.0
      %2852 = vmatpush1.msra.mxu0 0.0
      %2853 = vmatprep.subr.mxu0 0.0
      %2854 = vmatpush1.msra.mxu0 0.0
      %2855 = vmatprep.subr.mxu0 0.0
      %2856 = vmatpush1.msra.mxu0 0.0
      %2857 = vmatprep.subr.mxu0 0.0
      %2858 = vmatpush1.msra.mxu0 0.0
      %2859 = vmatprep.subr.mxu0 0.0
      %2860 = vmatpush1.msra.mxu0 0.0
      %2861 = vmatprep.subr.mxu0 0.0
      %2862 = vmatpush1.msra.mxu0 0.0
      %2863 = vmatprep.subr.mxu0 0.0
      %2864 = vmatpush1.msra.mxu0 0.0
      %2865 = vmatprep.subr.mxu0 0.0
      %2866 = vmatpush1.msra.mxu0 0.0
      %2867 = vmatprep.subr.mxu0 0.0
      %2868 = vmatpush1.msra.mxu0 0.0
      %2869 = vmatprep.subr.mxu0 0.0
      %2870 = vmatpush1.msra.mxu0 0.0
      %2871 = vmatprep.subr.mxu0 0.0
      %2872 = vmatpush1.msra.mxu0 0.0
      %2873 = vmatprep.subr.mxu0 0.0
      %2874 = vmatpush1.msra.mxu0 0.0
      %2875 = vmatprep.subr.mxu0 0.0
      %2876 = vmatpush1.msra.mxu0 0.0
      %2877 = vmatprep.subr.mxu0 0.0
      %2878 = vmatpush1.msra.mxu0 0.0
      %2879 = vmatprep.subr.mxu0 0.0
      %2880 = vmatpush1.msra.mxu0 0.0
      %2881 = vmatprep.subr.mxu0 0.0
      %2882 = vmatpush1.msra.mxu0 0.0
      %2883 = vmatprep.subr.mxu0 0.0
      %2884 = vmatpush1.msra.mxu0 0.0
      %2885 = vmatprep.subr.mxu0 0.0
      %2886 = vmatpush1.msra.mxu0 0.0
      %2887 = vmatprep.subr.mxu0 0.0
      %2888 = vmatpush1.msra.mxu0 0.0
      %2889 = vmatprep.mubr.f32.mxu0 0.0
      %2890 = vmatmul.mubr.f32.gmra.mrb[0].mxu0 %v2811
      %v2891 = vpop.f32.mrb[0].mxu0
      %v2892 = vadd.f32 0.0, %v2891
      %v2893 = vpop.f32.mrb[0].mxu0
      %2894 = vmatprep.mubr.f32.mxu0 0.0
      %2895 = vmatmul.mubr.f32.gmra.mrb[0].mxu0 %v2814
      %v2896 = vpop.f32.mrb[0].mxu0
      %v2897 = vadd.f32 0.0, %v2896
      %v2898 = vpop.f32.mrb[0].mxu0
      %2899 = vmatprep.mubr.f32.mxu0 0.0
      %2900 = vmatmul.mubr.f32.gmra.mrb[0].mxu0 %v2817
      %v2901 = vpop.f32.mrb[0].mxu0
      %v2902 = vadd.f32 0.0, %v2901
      %v2903 = vpop.f32.mrb[0].mxu0
      %2904 = vmatprep.mubr.f32.mxu0 0.0
      %2905 = vmatmul.mubr.f32.gmra.mrb[0].mxu0 %v2820
      %v2906 = vpop.f32.mrb[0].mxu0
      %v2907 = vadd.f32 0.0, %v2906
      %v2908 = vpop.f32.mrb[0].mxu0
      %2909 = vmatprep.mubr.f32.mxu0 0.0
      %2910 = vmatmul.mubr.f32.gmra.mrb[0].mxu0 %v2823
      %v2911 = vpop.f32.mrb[0].mxu0
      %v2912 = vadd.f32 0.0, %v2911
      %v2913 = vpop.f32.mrb[0].mxu0
      %2914 = vdwg.mxu0
      %v2916 = vsel %vm250, %v2892, 0
      %v2919 = vsel %vm250, %v2897, 0
      %v2922 = vsel %vm250, %v2902, 0
      %v2925 = vsel %vm250, %v2907, 0
      %v2928 = vsel %vm250, %v2912, 0
      %2930 = vmatprep.subr.mxu0 0.0
      %2931 = vmatpush1.msra.mxu0 %v2806
      %2932 = vmatprep.subr.mxu0 0.0
      %2933 = vmatpush1.msra.mxu0 %v2807
      %2934 = vmatprep.subr.mxu0 0.0
      %2935 = vmatpush1.msra.mxu0 %v2808
      %2936 = vmatprep.subr.mxu0 0.0
      %2937 = vmatpush1.msra.mxu0 %v2809
      %2938 = vmatprep.subr.mxu0 0.0
      %2939 = vmatpush1.msra.mxu0 0.0
      %2940 = vmatprep.subr.mxu0 0.0
      %2941 = vmatpush1.msra.mxu0 0.0
      %2942 = vmatprep.subr.mxu0 0.0
      %2943 = vmatpush1.msra.mxu0 0.0
      %2944 = vmatprep.subr.mxu0 0.0
      %2945 = vmatpush1.msra.mxu0 0.0
      %2946 = vmatprep.subr.mxu0 0.0
      %2947 = vmatpush1.msra.mxu0 0.0
      %2948 = vmatprep.subr.mxu0 0.0
      %2949 = vmatpush1.msra.mxu0 0.0
      %2950 = vmatprep.subr.mxu0 0.0
      %2951 = vmatpush1.msra.mxu0 0.0
      %2952 = vmatprep.subr.mxu0 0.0
      %2953 = vmatpush1.msra.mxu0 0.0
      %2954 = vmatprep.subr.mxu0 0.0
      %2955 = vmatpush1.msra.mxu0 0.0
      %2956 = vmatprep.subr.mxu0 0.0
      %2957 = vmatpush1.msra.mxu0 0.0
      %2958 = vmatprep.subr.mxu0 0.0
      %2959 = vmatpush1.msra.mxu0 0.0
      %2960 = vmatprep.subr.mxu0 0.0
      %2961 = vmatpush1.msra.mxu0 0.0
      %2962 = vmatprep.subr.mxu0 0.0
      %2963 = vmatpush1.msra.mxu0 0.0
      %2964 = vmatprep.subr.mxu0 0.0
      %2965 = vmatpush1.msra.mxu0 0.0
      %2966 = vmatprep.subr.mxu0 0.0
      %2967 = vmatpush1.msra.mxu0 0.0
      %2968 = vmatprep.subr.mxu0 0.0
      %2969 = vmatpush1.msra.mxu0 0.0
      %2970 = vmatprep.subr.mxu0 0.0
      %2971 = vmatpush1.msra.mxu0 0.0
      %2972 = vmatprep.subr.mxu0 0.0
      %2973 = vmatpush1.msra.mxu0 0.0
      %2974 = vmatprep.subr.mxu0 0.0
      %2975 = vmatpush1.msra.mxu0 0.0
      %2976 = vmatprep.subr.mxu0 0.0
      %2977 = vmatpush1.msra.mxu0 0.0
      %2978 = vmatprep.subr.mxu0 0.0
      %2979 = vmatpush1.msra.mxu0 0.0
      %2980 = vmatprep.subr.mxu0 0.0
      %2981 = vmatpush1.msra.mxu0 0.0
      %2982 = vmatprep.subr.mxu0 0.0
      %2983 = vmatpush1.msra.mxu0 0.0
      %2984 = vmatprep.subr.mxu0 0.0
      %2985 = vmatpush1.msra.mxu0 0.0
      %2986 = vmatprep.subr.mxu0 0.0
      %2987 = vmatpush1.msra.mxu0 0.0
      %2988 = vmatprep.subr.mxu0 0.0
      %2989 = vmatpush1.msra.mxu0 0.0
      %2990 = vmatprep.subr.mxu0 0.0
      %2991 = vmatpush1.msra.mxu0 0.0
      %2992 = vmatprep.subr.mxu0 0.0
      %2993 = vmatpush1.msra.mxu0 0.0
      %2994 = vmatprep.mubr.f32.mxu0 0.0
      %2995 = vmatmul.mubr.f32.gmra.mrb[0].mxu0 %v2916
      %v2996 = vpop.f32.mrb[0].mxu0
      %v2997 = vadd.f32 0.0, %v2996
      %v2998 = vpop.f32.mrb[0].mxu0
      %2999 = vmatprep.mubr.f32.mxu0 0.0
      %3000 = vmatmul.mubr.f32.gmra.mrb[0].mxu0 %v2919
      %v3001 = vpop.f32.mrb[0].mxu0
      %v3002 = vadd.f32 0.0, %v3001
      %v3003 = vpop.f32.mrb[0].mxu0
      %3004 = vmatprep.mubr.f32.mxu0 0.0
      %3005 = vmatmul.mubr.f32.gmra.mrb[0].mxu0 %v2922
      %v3006 = vpop.f32.mrb[0].mxu0
      %v3007 = vadd.f32 0.0, %v3006
      %v3008 = vpop.f32.mrb[0].mxu0
      %3009 = vmatprep.mubr.f32.mxu0 0.0
      %3010 = vmatmul.mubr.f32.gmra.mrb[0].mxu0 %v2925
      %v3011 = vpop.f32.mrb[0].mxu0
      %v3012 = vadd.f32 0.0, %v3011
      %v3013 = vpop.f32.mrb[0].mxu0
      %3014 = vmatprep.mubr.f32.mxu0 0.0
      %3015 = vmatmul.mubr.f32.gmra.mrb[0].mxu0 %v2928
      %v3016 = vpop.f32.mrb[0].mxu0
      %v3017 = vadd.f32 0.0, %v3016
      %v3018 = vpop.f32.mrb[0].mxu0
      %3019 = vdwg.mxu0
      %3020 = vmatprep.subr.mxu0 0.0
      %3021 = vmatpush1.msra.mxu0 %v2791
      %3022 = vmatprep.subr.mxu0 0.0
      %3023 = vmatpush1.msra.mxu0 %v2792
      %3024 = vmatprep.subr.mxu0 0.0
      %3025 = vmatpush1.msra.mxu0 %v2793
      %3026 = vmatprep.subr.mxu0 0.0
      %3027 = vmatpush1.msra.mxu0 %v2794
      %3028 = vmatprep.subr.mxu0 0.0
      %3029 = vmatpush1.msra.mxu0 0.0
      %3030 = vmatprep.subr.mxu0 0.0
      %3031 = vmatpush1.msra.mxu0 0.0
      %3032 = vmatprep.subr.mxu0 0.0
      %3033 = vmatpush1.msra.mxu0 0.0
      %3034 = vmatprep.subr.mxu0 0.0
      %3035 = vmatpush1.msra.mxu0 0.0
      %3036 = vmatprep.subr.mxu0 0.0
      %3037 = vmatpush1.msra.mxu0 0.0
      %3038 = vmatprep.subr.mxu0 0.0
      %3039 = vmatpush1.msra.mxu0 0.0
      %3040 = vmatprep.subr.mxu0 0.0
      %3041 = vmatpush1.msra.mxu0 0.0
      %3042 = vmatprep.subr.mxu0 0.0
      %3043 = vmatpush1.msra.mxu0 0.0
      %3044 = vmatprep.subr.mxu0 0.0
      %3045 = vmatpush1.msra.mxu0 0.0
      %3046 = vmatprep.subr.mxu0 0.0
      %3047 = vmatpush1.msra.mxu0 0.0
      %3048 = vmatprep.subr.mxu0 0.0
      %3049 = vmatpush1.msra.mxu0 0.0
      %3050 = vmatprep.subr.mxu0 0.0
      %3051 = vmatpush1.msra.mxu0 0.0
      %3052 = vmatprep.subr.mxu0 0.0
      %3053 = vmatpush1.msra.mxu0 0.0
      %3054 = vmatprep.subr.mxu0 0.0
      %3055 = vmatpush1.msra.mxu0 0.0
      %3056 = vmatprep.subr.mxu0 0.0
      %3057 = vmatpush1.msra.mxu0 0.0
      %3058 = vmatprep.subr.mxu0 0.0
      %3059 = vmatpush1.msra.mxu0 0.0
      %3060 = vmatprep.subr.mxu0 0.0
      %3061 = vmatpush1.msra.mxu0 0.0
      %3062 = vmatprep.subr.mxu0 0.0
      %3063 = vmatpush1.msra.mxu0 0.0
      %3064 = vmatprep.subr.mxu0 0.0
      %3065 = vmatpush1.msra.mxu0 0.0
      %3066 = vmatprep.subr.mxu0 0.0
      %3067 = vmatpush1.msra.mxu0 0.0
      %3068 = vmatprep.subr.mxu0 0.0
      %3069 = vmatpush1.msra.mxu0 0.0
      %3070 = vmatprep.subr.mxu0 0.0
      %3071 = vmatpush1.msra.mxu0 0.0
      %3072 = vmatprep.subr.mxu0 0.0
      %3073 = vmatpush1.msra.mxu0 0.0
      %3074 = vmatprep.subr.mxu0 0.0
      %3075 = vmatpush1.msra.mxu0 0.0
      %3076 = vmatprep.subr.mxu0 0.0
      %3077 = vmatpush1.msra.mxu0 0.0
      %3078 = vmatprep.subr.mxu0 0.0
      %3079 = vmatpush1.msra.mxu0 0.0
      %3080 = vmatprep.subr.mxu0 0.0
      %3081 = vmatpush1.msra.mxu0 0.0
      %3082 = vmatprep.subr.mxu0 0.0
      %3083 = vmatpush1.msra.mxu0 0.0
      %3084 = vmatprep.mubr.f32.mxu0 0.0
      %3085 = vmatmul.mubr.f32.gmra.mrb[0].mxu0 %v2811
      %v3086 = vpop.f32.mrb[0].mxu0
      %v3087 = vadd.f32 0.0, %v3086
      %v3088 = vpop.f32.mrb[0].mxu0
      %3089 = vmatprep.mubr.f32.mxu0 0.0
      %3090 = vmatmul.mubr.f32.gmra.mrb[0].mxu0 %v2814
      %v3091 = vpop.f32.mrb[0].mxu0
      %v3092 = vadd.f32 0.0, %v3091
      %v3093 = vpop.f32.mrb[0].mxu0
      %3094 = vmatprep.mubr.f32.mxu0 0.0
      %3095 = vmatmul.mubr.f32.gmra.mrb[0].mxu0 %v2817
      %v3096 = vpop.f32.mrb[0].mxu0
      %v3097 = vadd.f32 0.0, %v3096
      %v3098 = vpop.f32.mrb[0].mxu0
      %3099 = vmatprep.mubr.f32.mxu0 0.0
      %3100 = vmatmul.mubr.f32.gmra.mrb[0].mxu0 %v2820
      %v3101 = vpop.f32.mrb[0].mxu0
      %v3102 = vadd.f32 0.0, %v3101
      %v3103 = vpop.f32.mrb[0].mxu0
      %3104 = vmatprep.mubr.f32.mxu0 0.0
      %3105 = vmatmul.mubr.f32.gmra.mrb[0].mxu0 %v2823
      %v3106 = vpop.f32.mrb[0].mxu0
      %v3107 = vadd.f32 0.0, %v3106
      %v3108 = vpop.f32.mrb[0].mxu0
      %3109 = vdwg.mxu0
      %v3111 = vsel %vm250, %v3087, 0
      %v3114 = vsel %vm250, %v3092, 0
      %v3117 = vsel %vm250, %v3097, 0
      %v3120 = vsel %vm250, %v3102, 0
      %v3123 = vsel %vm250, %v3107, 0
      %3125 = vmatprep.subr.mxu0 0.0
      %3126 = vmatpush1.msra.mxu0 %v2806
      %3127 = vmatprep.subr.mxu0 0.0
      %3128 = vmatpush1.msra.mxu0 %v2807
      %3129 = vmatprep.subr.mxu0 0.0
      %3130 = vmatpush1.msra.mxu0 %v2808
      %3131 = vmatprep.subr.mxu0 0.0
      %3132 = vmatpush1.msra.mxu0 %v2809
      %3133 = vmatprep.subr.mxu0 0.0
      %3134 = vmatpush1.msra.mxu0 0.0
      %3135 = vmatprep.subr.mxu0 0.0
      %3136 = vmatpush1.msra.mxu0 0.0
      %3137 = vmatprep.subr.mxu0 0.0
      %3138 = vmatpush1.msra.mxu0 0.0
      %3139 = vmatprep.subr.mxu0 0.0
      %3140 = vmatpush1.msra.mxu0 0.0
      %3141 = vmatprep.subr.mxu0 0.0
      %3142 = vmatpush1.msra.mxu0 0.0
      %3143 = vmatprep.subr.mxu0 0.0
      %3144 = vmatpush1.msra.mxu0 0.0
      %3145 = vmatprep.subr.mxu0 0.0
      %3146 = vmatpush1.msra.mxu0 0.0
      %3147 = vmatprep.subr.mxu0 0.0
      %3148 = vmatpush1.msra.mxu0 0.0
      %3149 = vmatprep.subr.mxu0 0.0
      %3150 = vmatpush1.msra.mxu0 0.0
      %3151 = vmatprep.subr.mxu0 0.0
      %3152 = vmatpush1.msra.mxu0 0.0
      %3153 = vmatprep.subr.mxu0 0.0
      %3154 = vmatpush1.msra.mxu0 0.0
      %3155 = vmatprep.subr.mxu0 0.0
      %3156 = vmatpush1.msra.mxu0 0.0
      %3157 = vmatprep.subr.mxu0 0.0
      %3158 = vmatpush1.msra.mxu0 0.0
      %3159 = vmatprep.subr.mxu0 0.0
      %3160 = vmatpush1.msra.mxu0 0.0
      %3161 = vmatprep.subr.mxu0 0.0
      %3162 = vmatpush1.msra.mxu0 0.0
      %3163 = vmatprep.subr.mxu0 0.0
      %3164 = vmatpush1.msra.mxu0 0.0
      %3165 = vmatprep.subr.mxu0 0.0
      %3166 = vmatpush1.msra.mxu0 0.0
      %3167 = vmatprep.subr.mxu0 0.0
      %3168 = vmatpush1.msra.mxu0 0.0
      %3169 = vmatprep.subr.mxu0 0.0
      %3170 = vmatpush1.msra.mxu0 0.0
      %3171 = vmatprep.subr.mxu0 0.0
      %3172 = vmatpush1.msra.mxu0 0.0
      %3173 = vmatprep.subr.mxu0 0.0
      %3174 = vmatpush1.msra.mxu0 0.0
      %3175 = vmatprep.subr.mxu0 0.0
      %3176 = vmatpush1.msra.mxu0 0.0
      %3177 = vmatprep.subr.mxu0 0.0
      %3178 = vmatpush1.msra.mxu0 0.0
      %3179 = vmatprep.subr.mxu0 0.0
      %3180 = vmatpush1.msra.mxu0 0.0
      %3181 = vmatprep.subr.mxu0 0.0
      %3182 = vmatpush1.msra.mxu0 0.0
      %3183 = vmatprep.subr.mxu0 0.0
      %3184 = vmatpush1.msra.mxu0 0.0
      %3185 = vmatprep.subr.mxu0 0.0
      %3186 = vmatpush1.msra.mxu0 0.0
      %3187 = vmatprep.subr.mxu0 0.0
      %3188 = vmatpush1.msra.mxu0 0.0
      %3189 = vmatprep.mubr.f32.mxu0 0.0
      %3190 = vmatmul.mubr.f32.gmra.mrb[0].mxu0 %v3111
      %v3191 = vpop.f32.mrb[0].mxu0
      %v3192 = vadd.f32 0.0, %v3191
      %v3193 = vpop.f32.mrb[0].mxu0
      %3194 = vmatprep.mubr.f32.mxu0 0.0
      %3195 = vmatmul.mubr.f32.gmra.mrb[0].mxu0 %v3114
      %v3196 = vpop.f32.mrb[0].mxu0
      %v3197 = vadd.f32 0.0, %v3196
      %v3198 = vpop.f32.mrb[0].mxu0
      %3199 = vmatprep.mubr.f32.mxu0 0.0
      %3200 = vmatmul.mubr.f32.gmra.mrb[0].mxu0 %v3117
      %v3201 = vpop.f32.mrb[0].mxu0
      %v3202 = vadd.f32 0.0, %v3201
      %v3203 = vpop.f32.mrb[0].mxu0
      %3204 = vmatprep.mubr.f32.mxu0 0.0
      %3205 = vmatmul.mubr.f32.gmra.mrb[0].mxu0 %v3120
      %v3206 = vpop.f32.mrb[0].mxu0
      %v3207 = vadd.f32 0.0, %v3206
      %v3208 = vpop.f32.mrb[0].mxu0
      %3209 = vmatprep.mubr.f32.mxu0 0.0
      %3210 = vmatmul.mubr.f32.gmra.mrb[0].mxu0 %v3123
      %v3211 = vpop.f32.mrb[0].mxu0
      %v3212 = vadd.f32 0.0, %v3211
      %v3213 = vpop.f32.mrb[0].mxu0
      %3214 = vdwg.mxu0
      %3215 = vmatprep.subr.mxu0 0.0
      %3216 = vmatpush1.msra.mxu0 %v2795
      %3217 = vmatprep.subr.mxu0 0.0
      %3218 = vmatpush1.msra.mxu0 %v2796
      %3219 = vmatprep.subr.mxu0 0.0
      %3220 = vmatpush1.msra.mxu0 %v2797
      %3221 = vmatprep.subr.mxu0 0.0
      %3222 = vmatpush1.msra.mxu0 %v2798
      %3223 = vmatprep.subr.mxu0 0.0
      %3224 = vmatpush1.msra.mxu0 0.0
      %3225 = vmatprep.subr.mxu0 0.0
      %3226 = vmatpush1.msra.mxu0 0.0
      %3227 = vmatprep.subr.mxu0 0.0
      %3228 = vmatpush1.msra.mxu0 0.0
      %3229 = vmatprep.subr.mxu0 0.0
      %3230 = vmatpush1.msra.mxu0 0.0
      %3231 = vmatprep.subr.mxu0 0.0
      %3232 = vmatpush1.msra.mxu0 0.0
      %3233 = vmatprep.subr.mxu0 0.0
      %3234 = vmatpush1.msra.mxu0 0.0
      %3235 = vmatprep.subr.mxu0 0.0
      %3236 = vmatpush1.msra.mxu0 0.0
      %3237 = vmatprep.subr.mxu0 0.0
      %3238 = vmatpush1.msra.mxu0 0.0
      %3239 = vmatprep.subr.mxu0 0.0
      %3240 = vmatpush1.msra.mxu0 0.0
      %3241 = vmatprep.subr.mxu0 0.0
      %3242 = vmatpush1.msra.mxu0 0.0
      %3243 = vmatprep.subr.mxu0 0.0
      %3244 = vmatpush1.msra.mxu0 0.0
      %3245 = vmatprep.subr.mxu0 0.0
      %3246 = vmatpush1.msra.mxu0 0.0
      %3247 = vmatprep.subr.mxu0 0.0
      %3248 = vmatpush1.msra.mxu0 0.0
      %3249 = vmatprep.subr.mxu0 0.0
      %3250 = vmatpush1.msra.mxu0 0.0
      %3251 = vmatprep.subr.mxu0 0.0
      %3252 = vmatpush1.msra.mxu0 0.0
      %3253 = vmatprep.subr.mxu0 0.0
      %3254 = vmatpush1.msra.mxu0 0.0
      %3255 = vmatprep.subr.mxu0 0.0
      %3256 = vmatpush1.msra.mxu0 0.0
      %3257 = vmatprep.subr.mxu0 0.0
      %3258 = vmatpush1.msra.mxu0 0.0
      %3259 = vmatprep.subr.mxu0 0.0
      %3260 = vmatpush1.msra.mxu0 0.0
      %3261 = vmatprep.subr.mxu0 0.0
      %3262 = vmatpush1.msra.mxu0 0.0
      %3263 = vmatprep.subr.mxu0 0.0
      %3264 = vmatpush1.msra.mxu0 0.0
      %3265 = vmatprep.subr.mxu0 0.0
      %3266 = vmatpush1.msra.mxu0 0.0
      %3267 = vmatprep.subr.mxu0 0.0
      %3268 = vmatpush1.msra.mxu0 0.0
      %3269 = vmatprep.subr.mxu0 0.0
      %3270 = vmatpush1.msra.mxu0 0.0
      %3271 = vmatprep.subr.mxu0 0.0
      %3272 = vmatpush1.msra.mxu0 0.0
      %3273 = vmatprep.subr.mxu0 0.0
      %3274 = vmatpush1.msra.mxu0 0.0
      %3275 = vmatprep.subr.mxu0 0.0
      %3276 = vmatpush1.msra.mxu0 0.0
      %3277 = vmatprep.subr.mxu0 0.0
      %3278 = vmatpush1.msra.mxu0 0.0
      %3279 = vmatprep.mubr.f32.mxu0 0.0
      %3280 = vmatmul.mubr.f32.gmra.mrb[0].mxu0 %v2811
      %v3281 = vpop.f32.mrb[0].mxu0
      %v3282 = vadd.f32 0.0, %v3281
      %v3283 = vpop.f32.mrb[0].mxu0
      %3284 = vmatprep.mubr.f32.mxu0 0.0
      %3285 = vmatmul.mubr.f32.gmra.mrb[0].mxu0 %v2814
      %v3286 = vpop.f32.mrb[0].mxu0
      %v3287 = vadd.f32 0.0, %v3286
      %v3288 = vpop.f32.mrb[0].mxu0
      %3289 = vmatprep.mubr.f32.mxu0 0.0
      %3290 = vmatmul.mubr.f32.gmra.mrb[0].mxu0 %v2817
      %v3291 = vpop.f32.mrb[0].mxu0
      %v3292 = vadd.f32 0.0, %v3291
      %v3293 = vpop.f32.mrb[0].mxu0
      %3294 = vmatprep.mubr.f32.mxu0 0.0
      %3295 = vmatmul.mubr.f32.gmra.mrb[0].mxu0 %v2820
      %v3296 = vpop.f32.mrb[0].mxu0
      %v3297 = vadd.f32 0.0, %v3296
      %v3298 = vpop.f32.mrb[0].mxu0
      %3299 = vmatprep.mubr.f32.mxu0 0.0
      %3300 = vmatmul.mubr.f32.gmra.mrb[0].mxu0 %v2823
      %v3301 = vpop.f32.mrb[0].mxu0
      %v3302 = vadd.f32 0.0, %v3301
      %v3303 = vpop.f32.mrb[0].mxu0
      %3304 = vdwg.mxu0
      %v3306 = vsel %vm250, %v3282, 0
      %v3309 = vsel %vm250, %v3287, 0
      %v3312 = vsel %vm250, %v3292, 0
      %v3315 = vsel %vm250, %v3297, 0
      %v3318 = vsel %vm250, %v3302, 0
      %3320 = vmatprep.subr.mxu0 0.0
      %3321 = vmatpush1.msra.mxu0 %v2806
      %3322 = vmatprep.subr.mxu0 0.0
      %3323 = vmatpush1.msra.mxu0 %v2807
      %3324 = vmatprep.subr.mxu0 0.0
      %3325 = vmatpush1.msra.mxu0 %v2808
      %3326 = vmatprep.subr.mxu0 0.0
      %3327 = vmatpush1.msra.mxu0 %v2809
      %3328 = vmatprep.subr.mxu0 0.0
      %3329 = vmatpush1.msra.mxu0 0.0
      %3330 = vmatprep.subr.mxu0 0.0
      %3331 = vmatpush1.msra.mxu0 0.0
      %3332 = vmatprep.subr.mxu0 0.0
      %3333 = vmatpush1.msra.mxu0 0.0
      %3334 = vmatprep.subr.mxu0 0.0
      %3335 = vmatpush1.msra.mxu0 0.0
      %3336 = vmatprep.subr.mxu0 0.0
      %3337 = vmatpush1.msra.mxu0 0.0
      %3338 = vmatprep.subr.mxu0 0.0
      %3339 = vmatpush1.msra.mxu0 0.0
      %3340 = vmatprep.subr.mxu0 0.0
      %3341 = vmatpush1.msra.mxu0 0.0
      %3342 = vmatprep.subr.mxu0 0.0
      %3343 = vmatpush1.msra.mxu0 0.0
      %3344 = vmatprep.subr.mxu0 0.0
      %3345 = vmatpush1.msra.mxu0 0.0
      %3346 = vmatprep.subr.mxu0 0.0
      %3347 = vmatpush1.msra.mxu0 0.0
      %3348 = vmatprep.subr.mxu0 0.0
      %3349 = vmatpush1.msra.mxu0 0.0
      %3350 = vmatprep.subr.mxu0 0.0
      %3351 = vmatpush1.msra.mxu0 0.0
      %3352 = vmatprep.subr.mxu0 0.0
      %3353 = vmatpush1.msra.mxu0 0.0
      %3354 = vmatprep.subr.mxu0 0.0
      %3355 = vmatpush1.msra.mxu0 0.0
      %3356 = vmatprep.subr.mxu0 0.0
      %3357 = vmatpush1.msra.mxu0 0.0
      %3358 = vmatprep.subr.mxu0 0.0
      %3359 = vmatpush1.msra.mxu0 0.0
      %3360 = vmatprep.subr.mxu0 0.0
      %3361 = vmatpush1.msra.mxu0 0.0
      %3362 = vmatprep.subr.mxu0 0.0
      %3363 = vmatpush1.msra.mxu0 0.0
      %3364 = vmatprep.subr.mxu0 0.0
      %3365 = vmatpush1.msra.mxu0 0.0
      %3366 = vmatprep.subr.mxu0 0.0
      %3367 = vmatpush1.msra.mxu0 0.0
      %3368 = vmatprep.subr.mxu0 0.0
      %3369 = vmatpush1.msra.mxu0 0.0
      %3370 = vmatprep.subr.mxu0 0.0
      %3371 = vmatpush1.msra.mxu0 0.0
      %3372 = vmatprep.subr.mxu0 0.0
      %3373 = vmatpush1.msra.mxu0 0.0
      %3374 = vmatprep.subr.mxu0 0.0
      %3375 = vmatpush1.msra.mxu0 0.0
      %3376 = vmatprep.subr.mxu0 0.0
      %3377 = vmatpush1.msra.mxu0 0.0
      %3378 = vmatprep.subr.mxu0 0.0
      %3379 = vmatpush1.msra.mxu0 0.0
      %3380 = vmatprep.subr.mxu0 0.0
      %3381 = vmatpush1.msra.mxu0 0.0
      %3382 = vmatprep.subr.mxu0 0.0
      %3383 = vmatpush1.msra.mxu0 0.0
      %3384 = vmatprep.mubr.f32.mxu0 0.0
      %3385 = vmatmul.mubr.f32.gmra.mrb[0].mxu0 %v3306
      %v3386 = vpop.f32.mrb[0].mxu0
      %v3387 = vadd.f32 0.0, %v3386
      %v3388 = vpop.f32.mrb[0].mxu0
      %3389 = vmatprep.mubr.f32.mxu0 0.0
      %3390 = vmatmul.mubr.f32.gmra.mrb[0].mxu0 %v3309
      %v3391 = vpop.f32.mrb[0].mxu0
      %v3392 = vadd.f32 0.0, %v3391
      %v3393 = vpop.f32.mrb[0].mxu0
      %3394 = vmatprep.mubr.f32.mxu0 0.0
      %3395 = vmatmul.mubr.f32.gmra.mrb[0].mxu0 %v3312
      %v3396 = vpop.f32.mrb[0].mxu0
      %v3397 = vadd.f32 0.0, %v3396
      %v3398 = vpop.f32.mrb[0].mxu0
      %3399 = vmatprep.mubr.f32.mxu0 0.0
      %3400 = vmatmul.mubr.f32.gmra.mrb[0].mxu0 %v3315
      %v3401 = vpop.f32.mrb[0].mxu0
      %v3402 = vadd.f32 0.0, %v3401
      %v3403 = vpop.f32.mrb[0].mxu0
      %3404 = vmatprep.mubr.f32.mxu0 0.0
      %3405 = vmatmul.mubr.f32.gmra.mrb[0].mxu0 %v3318
      %v3406 = vpop.f32.mrb[0].mxu0
      %v3407 = vadd.f32 0.0, %v3406
      %v3408 = vpop.f32.mrb[0].mxu0
      %3409 = vdwg.mxu0
      %s3410 = scalar_lea.vmem %s227, 480
      %3411 = vst [vmem:[%s3410] sm:$0xff] %v2997
      %3412 = vst [vmem:[%s3410 + $0x8] sm:$0xff] %v3002
      %3413 = vst [vmem:[%s3410 + $0x10] sm:$0xff] %v3007
      %3414 = vst [vmem:[%s3410 + $0x18] sm:$0xff] %v3012
      %3415 = vst [vmem:[%s3410 + $0x20] sm:$0xff] %v3017
      %3416 = vst [vmem:[%s3410 + $0x28] sm:$0xff] %v3192
      %3417 = vst [vmem:[%s3410 + $0x30] sm:$0xff] %v3197
      %3418 = vst [vmem:[%s3410 + $0x38] sm:$0xff] %v3202
      %3419 = vst [vmem:[%s3410 + $0x40] sm:$0xff] %v3207
      %3420 = vst [vmem:[%s3410 + $0x48] sm:$0xff] %v3212
      %3421 = vst [vmem:[%s3410 + $0x50] sm:$0xff] %v3387
      %3422 = vst [vmem:[%s3410 + $0x58] sm:$0xff] %v3392
      %3423 = vst [vmem:[%s3410 + $0x60] sm:$0xff] %v3397
      %3424 = vst [vmem:[%s3410 + $0x68] sm:$0xff] %v3402
      %3425 = vst [vmem:[%s3410 + $0x70] sm:$0xff] %v3407
      %s3426 = scalar_lea.vmem %s206, 480
      %v3427 = vld [vmem:[%s3426] sm:$0xff]
      %v3428 = vld [vmem:[%s3426 + $0x8] sm:$0xff]
      %v3429 = vld [vmem:[%s3426 + $0x10] sm:$0xff]
      %v3430 = vld [vmem:[%s3426 + $0x18] sm:$0xff]
      %v3431 = vld [vmem:[%s3426 + $0x20] sm:$0xff]
      %v3432 = vld [vmem:[%s3426 + $0x28] sm:$0xff]
      %v3433 = vld [vmem:[%s3426 + $0x30] sm:$0xff]
      %v3434 = vld [vmem:[%s3426 + $0x38] sm:$0xff]
      %v3435 = vld [vmem:[%s3426 + $0x40] sm:$0xff]
      %v3436 = vld [vmem:[%s3426 + $0x48] sm:$0xff]
      %v3437 = vld [vmem:[%s3426 + $0x50] sm:$0xff]
      %v3438 = vld [vmem:[%s3426 + $0x58] sm:$0xff]
      %s3439 = scalar_lea.vmem %s213, 200
      %v3440 = vld [vmem:[%s3439] sm:$0xff]
      %v3441 = vld [vmem:[%s3439 + $0x8] sm:$0xff]
      %v3442 = vld [vmem:[%s3439 + $0x10] sm:$0xff]
      %v3443 = vld [vmem:[%s3439 + $0x18] sm:$0xff]
      %v3444 = vld [vmem:[%s3439 + $0x20] sm:$0xff]
      %s3445 = scalar_lea.vmem %s220, 160
      %v3446 = vld [vmem:[%s3445] sm:$0xff]
      %v3447 = vld [vmem:[%s3445 + $0x8] sm:$0xff]
      %v3448 = vld [vmem:[%s3445 + $0x10] sm:$0xff]
      %v3449 = vld [vmem:[%s3445 + $0x18] sm:$0xff]
      %v3451 = vsel %vm250, %v3440, 0
      %v3454 = vsel %vm250, %v3441, 0
      %v3457 = vsel %vm250, %v3442, 0
      %v3460 = vsel %vm250, %v3443, 0
      %v3463 = vsel %vm250, %v3444, 0
      %3465 = vmatprep.subr.mxu0 0.0
      %3466 = vmatpush1.msra.mxu0 %v3427
      %3467 = vmatprep.subr.mxu0 0.0
      %3468 = vmatpush1.msra.mxu0 %v3428
      %3469 = vmatprep.subr.mxu0 0.0
      %3470 = vmatpush1.msra.mxu0 %v3429
      %3471 = vmatprep.subr.mxu0 0.0
      %3472 = vmatpush1.msra.mxu0 %v3430
      %3473 = vmatprep.subr.mxu0 0.0
      %3474 = vmatpush1.msra.mxu0 0.0
      %3475 = vmatprep.subr.mxu0 0.0
      %3476 = vmatpush1.msra.mxu0 0.0
      %3477 = vmatprep.subr.mxu0 0.0
      %3478 = vmatpush1.msra.mxu0 0.0
      %3479 = vmatprep.subr.mxu0 0.0
      %3480 = vmatpush1.msra.mxu0 0.0
      %3481 = vmatprep.subr.mxu0 0.0
      %3482 = vmatpush1.msra.mxu0 0.0
      %3483 = vmatprep.subr.mxu0 0.0
      %3484 = vmatpush1.msra.mxu0 0.0
      %3485 = vmatprep.subr.mxu0 0.0
      %3486 = vmatpush1.msra.mxu0 0.0
      %3487 = vmatprep.subr.mxu0 0.0
      %3488 = vmatpush1.msra.mxu0 0.0
      %3489 = vmatprep.subr.mxu0 0.0
      %3490 = vmatpush1.msra.mxu0 0.0
      %3491 = vmatprep.subr.mxu0 0.0
      %3492 = vmatpush1.msra.mxu0 0.0
      %3493 = vmatprep.subr.mxu0 0.0
      %3494 = vmatpush1.msra.mxu0 0.0
      %3495 = vmatprep.subr.mxu0 0.0
      %3496 = vmatpush1.msra.mxu0 0.0
      %3497 = vmatprep.subr.mxu0 0.0
      %3498 = vmatpush1.msra.mxu0 0.0
      %3499 = vmatprep.subr.mxu0 0.0
      %3500 = vmatpush1.msra.mxu0 0.0
      %3501 = vmatprep.subr.mxu0 0.0
      %3502 = vmatpush1.msra.mxu0 0.0
      %3503 = vmatprep.subr.mxu0 0.0
      %3504 = vmatpush1.msra.mxu0 0.0
      %3505 = vmatprep.subr.mxu0 0.0
      %3506 = vmatpush1.msra.mxu0 0.0
      %3507 = vmatprep.subr.mxu0 0.0
      %3508 = vmatpush1.msra.mxu0 0.0
      %3509 = vmatprep.subr.mxu0 0.0
      %3510 = vmatpush1.msra.mxu0 0.0
      %3511 = vmatprep.subr.mxu0 0.0
      %3512 = vmatpush1.msra.mxu0 0.0
      %3513 = vmatprep.subr.mxu0 0.0
      %3514 = vmatpush1.msra.mxu0 0.0
      %3515 = vmatprep.subr.mxu0 0.0
      %3516 = vmatpush1.msra.mxu0 0.0
      %3517 = vmatprep.subr.mxu0 0.0
      %3518 = vmatpush1.msra.mxu0 0.0
      %3519 = vmatprep.subr.mxu0 0.0
      %3520 = vmatpush1.msra.mxu0 0.0
      %3521 = vmatprep.subr.mxu0 0.0
      %3522 = vmatpush1.msra.mxu0 0.0
      %3523 = vmatprep.subr.mxu0 0.0
      %3524 = vmatpush1.msra.mxu0 0.0
      %3525 = vmatprep.subr.mxu0 0.0
      %3526 = vmatpush1.msra.mxu0 0.0
      %3527 = vmatprep.subr.mxu0 0.0
      %3528 = vmatpush1.msra.mxu0 0.0
      %3529 = vmatprep.mubr.f32.mxu0 0.0
      %3530 = vmatmul.mubr.f32.gmra.mrb[0].mxu0 %v3451
      %v3531 = vpop.f32.mrb[0].mxu0
      %v3532 = vadd.f32 0.0, %v3531
      %v3533 = vpop.f32.mrb[0].mxu0
      %3534 = vmatprep.mubr.f32.mxu0 0.0
      %3535 = vmatmul.mubr.f32.gmra.mrb[0].mxu0 %v3454
      %v3536 = vpop.f32.mrb[0].mxu0
      %v3537 = vadd.f32 0.0, %v3536
      %v3538 = vpop.f32.mrb[0].mxu0
      %3539 = vmatprep.mubr.f32.mxu0 0.0
      %3540 = vmatmul.mubr.f32.gmra.mrb[0].mxu0 %v3457
      %v3541 = vpop.f32.mrb[0].mxu0
      %v3542 = vadd.f32 0.0, %v3541
      %v3543 = vpop.f32.mrb[0].mxu0
      %3544 = vmatprep.mubr.f32.mxu0 0.0
      %3545 = vmatmul.mubr.f32.gmra.mrb[0].mxu0 %v3460
      %v3546 = vpop.f32.mrb[0].mxu0
      %v3547 = vadd.f32 0.0, %v3546
      %v3548 = vpop.f32.mrb[0].mxu0
      %3549 = vmatprep.mubr.f32.mxu0 0.0
      %3550 = vmatmul.mubr.f32.gmra.mrb[0].mxu0 %v3463
      %v3551 = vpop.f32.mrb[0].mxu0
      %v3552 = vadd.f32 0.0, %v3551
      %v3553 = vpop.f32.mrb[0].mxu0
      %3554 = vdwg.mxu0
      %v3556 = vsel %vm250, %v3532, 0
      %v3559 = vsel %vm250, %v3537, 0
      %v3562 = vsel %vm250, %v3542, 0
      %v3565 = vsel %vm250, %v3547, 0
      %v3568 = vsel %vm250, %v3552, 0
      %3570 = vmatprep.subr.mxu0 0.0
      %3571 = vmatpush1.msra.mxu0 %v3446
      %3572 = vmatprep.subr.mxu0 0.0
      %3573 = vmatpush1.msra.mxu0 %v3447
      %3574 = vmatprep.subr.mxu0 0.0
      %3575 = vmatpush1.msra.mxu0 %v3448
      %3576 = vmatprep.subr.mxu0 0.0
      %3577 = vmatpush1.msra.mxu0 %v3449
      %3578 = vmatprep.subr.mxu0 0.0
      %3579 = vmatpush1.msra.mxu0 0.0
      %3580 = vmatprep.subr.mxu0 0.0
      %3581 = vmatpush1.msra.mxu0 0.0
      %3582 = vmatprep.subr.mxu0 0.0
      %3583 = vmatpush1.msra.mxu0 0.0
      %3584 = vmatprep.subr.mxu0 0.0
      %3585 = vmatpush1.msra.mxu0 0.0
      %3586 = vmatprep.subr.mxu0 0.0
      %3587 = vmatpush1.msra.mxu0 0.0
      %3588 = vmatprep.subr.mxu0 0.0
      %3589 = vmatpush1.msra.mxu0 0.0
      %3590 = vmatprep.subr.mxu0 0.0
      %3591 = vmatpush1.msra.mxu0 0.0
      %3592 = vmatprep.subr.mxu0 0.0
      %3593 = vmatpush1.msra.mxu0 0.0
      %3594 = vmatprep.subr.mxu0 0.0
      %3595 = vmatpush1.msra.mxu0 0.0
      %3596 = vmatprep.subr.mxu0 0.0
      %3597 = vmatpush1.msra.mxu0 0.0
      %3598 = vmatprep.subr.mxu0 0.0
      %3599 = vmatpush1.msra.mxu0 0.0
      %3600 = vmatprep.subr.mxu0 0.0
      %3601 = vmatpush1.msra.mxu0 0.0
      %3602 = vmatprep.subr.mxu0 0.0
      %3603 = vmatpush1.msra.mxu0 0.0
      %3604 = vmatprep.subr.mxu0 0.0
      %3605 = vmatpush1.msra.mxu0 0.0
      %3606 = vmatprep.subr.mxu0 0.0
      %3607 = vmatpush1.msra.mxu0 0.0
      %3608 = vmatprep.subr.mxu0 0.0
      %3609 = vmatpush1.msra.mxu0 0.0
      %3610 = vmatprep.subr.mxu0 0.0
      %3611 = vmatpush1.msra.mxu0 0.0
      %3612 = vmatprep.subr.mxu0 0.0
      %3613 = vmatpush1.msra.mxu0 0.0
      %3614 = vmatprep.subr.mxu0 0.0
      %3615 = vmatpush1.msra.mxu0 0.0
      %3616 = vmatprep.subr.mxu0 0.0
      %3617 = vmatpush1.msra.mxu0 0.0
      %3618 = vmatprep.subr.mxu0 0.0
      %3619 = vmatpush1.msra.mxu0 0.0
      %3620 = vmatprep.subr.mxu0 0.0
      %3621 = vmatpush1.msra.mxu0 0.0
      %3622 = vmatprep.subr.mxu0 0.0
      %3623 = vmatpush1.msra.mxu0 0.0
      %3624 = vmatprep.subr.mxu0 0.0
      %3625 = vmatpush1.msra.mxu0 0.0
      %3626 = vmatprep.subr.mxu0 0.0
      %3627 = vmatpush1.msra.mxu0 0.0
      %3628 = vmatprep.subr.mxu0 0.0
      %3629 = vmatpush1.msra.mxu0 0.0
      %3630 = vmatprep.subr.mxu0 0.0
      %3631 = vmatpush1.msra.mxu0 0.0
      %3632 = vmatprep.subr.mxu0 0.0
      %3633 = vmatpush1.msra.mxu0 0.0
      %3634 = vmatprep.mubr.f32.mxu0 0.0
      %3635 = vmatmul.mubr.f32.gmra.mrb[0].mxu0 %v3556
      %v3636 = vpop.f32.mrb[0].mxu0
      %v3637 = vadd.f32 0.0, %v3636
      %v3638 = vpop.f32.mrb[0].mxu0
      %3639 = vmatprep.mubr.f32.mxu0 0.0
      %3640 = vmatmul.mubr.f32.gmra.mrb[0].mxu0 %v3559
      %v3641 = vpop.f32.mrb[0].mxu0
      %v3642 = vadd.f32 0.0, %v3641
      %v3643 = vpop.f32.mrb[0].mxu0
      %3644 = vmatprep.mubr.f32.mxu0 0.0
      %3645 = vmatmul.mubr.f32.gmra.mrb[0].mxu0 %v3562
      %v3646 = vpop.f32.mrb[0].mxu0
      %v3647 = vadd.f32 0.0, %v3646
      %v3648 = vpop.f32.mrb[0].mxu0
      %3649 = vmatprep.mubr.f32.mxu0 0.0
      %3650 = vmatmul.mubr.f32.gmra.mrb[0].mxu0 %v3565
      %v3651 = vpop.f32.mrb[0].mxu0
      %v3652 = vadd.f32 0.0, %v3651
      %v3653 = vpop.f32.mrb[0].mxu0
      %3654 = vmatprep.mubr.f32.mxu0 0.0
      %3655 = vmatmul.mubr.f32.gmra.mrb[0].mxu0 %v3568
      %v3656 = vpop.f32.mrb[0].mxu0
      %v3657 = vadd.f32 0.0, %v3656
      %v3658 = vpop.f32.mrb[0].mxu0
      %3659 = vdwg.mxu0
      %3660 = vmatprep.subr.mxu0 0.0
      %3661 = vmatpush1.msra.mxu0 %v3431
      %3662 = vmatprep.subr.mxu0 0.0
      %3663 = vmatpush1.msra.mxu0 %v3432
      %3664 = vmatprep.subr.mxu0 0.0
      %3665 = vmatpush1.msra.mxu0 %v3433
      %3666 = vmatprep.subr.mxu0 0.0
      %3667 = vmatpush1.msra.mxu0 %v3434
      %3668 = vmatprep.subr.mxu0 0.0
      %3669 = vmatpush1.msra.mxu0 0.0
      %3670 = vmatprep.subr.mxu0 0.0
      %3671 = vmatpush1.msra.mxu0 0.0
      %3672 = vmatprep.subr.mxu0 0.0
      %3673 = vmatpush1.msra.mxu0 0.0
      %3674 = vmatprep.subr.mxu0 0.0
      %3675 = vmatpush1.msra.mxu0 0.0
      %3676 = vmatprep.subr.mxu0 0.0
      %3677 = vmatpush1.msra.mxu0 0.0
      %3678 = vmatprep.subr.mxu0 0.0
      %3679 = vmatpush1.msra.mxu0 0.0
      %3680 = vmatprep.subr.mxu0 0.0
      %3681 = vmatpush1.msra.mxu0 0.0
      %3682 = vmatprep.subr.mxu0 0.0
      %3683 = vmatpush1.msra.mxu0 0.0
      %3684 = vmatprep.subr.mxu0 0.0
      %3685 = vmatpush1.msra.mxu0 0.0
      %3686 = vmatprep.subr.mxu0 0.0
      %3687 = vmatpush1.msra.mxu0 0.0
      %3688 = vmatprep.subr.mxu0 0.0
      %3689 = vmatpush1.msra.mxu0 0.0
      %3690 = vmatprep.subr.mxu0 0.0
      %3691 = vmatpush1.msra.mxu0 0.0
      %3692 = vmatprep.subr.mxu0 0.0
      %3693 = vmatpush1.msra.mxu0 0.0
      %3694 = vmatprep.subr.mxu0 0.0
      %3695 = vmatpush1.msra.mxu0 0.0
      %3696 = vmatprep.subr.mxu0 0.0
      %3697 = vmatpush1.msra.mxu0 0.0
      %3698 = vmatprep.subr.mxu0 0.0
      %3699 = vmatpush1.msra.mxu0 0.0
      %3700 = vmatprep.subr.mxu0 0.0
      %3701 = vmatpush1.msra.mxu0 0.0
      %3702 = vmatprep.subr.mxu0 0.0
      %3703 = vmatpush1.msra.mxu0 0.0
      %3704 = vmatprep.subr.mxu0 0.0
      %3705 = vmatpush1.msra.mxu0 0.0
      %3706 = vmatprep.subr.mxu0 0.0
      %3707 = vmatpush1.msra.mxu0 0.0
      %3708 = vmatprep.subr.mxu0 0.0
      %3709 = vmatpush1.msra.mxu0 0.0
      %3710 = vmatprep.subr.mxu0 0.0
      %3711 = vmatpush1.msra.mxu0 0.0
      %3712 = vmatprep.subr.mxu0 0.0
      %3713 = vmatpush1.msra.mxu0 0.0
      %3714 = vmatprep.subr.mxu0 0.0
      %3715 = vmatpush1.msra.mxu0 0.0
      %3716 = vmatprep.subr.mxu0 0.0
      %3717 = vmatpush1.msra.mxu0 0.0
      %3718 = vmatprep.subr.mxu0 0.0
      %3719 = vmatpush1.msra.mxu0 0.0
      %3720 = vmatprep.subr.mxu0 0.0
      %3721 = vmatpush1.msra.mxu0 0.0
      %3722 = vmatprep.subr.mxu0 0.0
      %3723 = vmatpush1.msra.mxu0 0.0
      %3724 = vmatprep.mubr.f32.mxu0 0.0
      %3725 = vmatmul.mubr.f32.gmra.mrb[0].mxu0 %v3451
      %v3726 = vpop.f32.mrb[0].mxu0
      %v3727 = vadd.f32 0.0, %v3726
      %v3728 = vpop.f32.mrb[0].mxu0
      %3729 = vmatprep.mubr.f32.mxu0 0.0
      %3730 = vmatmul.mubr.f32.gmra.mrb[0].mxu0 %v3454
      %v3731 = vpop.f32.mrb[0].mxu0
      %v3732 = vadd.f32 0.0, %v3731
      %v3733 = vpop.f32.mrb[0].mxu0
      %3734 = vmatprep.mubr.f32.mxu0 0.0
      %3735 = vmatmul.mubr.f32.gmra.mrb[0].mxu0 %v3457
      %v3736 = vpop.f32.mrb[0].mxu0
      %v3737 = vadd.f32 0.0, %v3736
      %v3738 = vpop.f32.mrb[0].mxu0
      %3739 = vmatprep.mubr.f32.mxu0 0.0
      %3740 = vmatmul.mubr.f32.gmra.mrb[0].mxu0 %v3460
      %v3741 = vpop.f32.mrb[0].mxu0
      %v3742 = vadd.f32 0.0, %v3741
      %v3743 = vpop.f32.mrb[0].mxu0
      %3744 = vmatprep.mubr.f32.mxu0 0.0
      %3745 = vmatmul.mubr.f32.gmra.mrb[0].mxu0 %v3463
      %v3746 = vpop.f32.mrb[0].mxu0
      %v3747 = vadd.f32 0.0, %v3746
      %v3748 = vpop.f32.mrb[0].mxu0
      %3749 = vdwg.mxu0
      %v3751 = vsel %vm250, %v3727, 0
      %v3754 = vsel %vm250, %v3732, 0
      %v3757 = vsel %vm250, %v3737, 0
      %v3760 = vsel %vm250, %v3742, 0
      %v3763 = vsel %vm250, %v3747, 0
      %3765 = vmatprep.subr.mxu0 0.0
      %3766 = vmatpush1.msra.mxu0 %v3446
      %3767 = vmatprep.subr.mxu0 0.0
      %3768 = vmatpush1.msra.mxu0 %v3447
      %3769 = vmatprep.subr.mxu0 0.0
      %3770 = vmatpush1.msra.mxu0 %v3448
      %3771 = vmatprep.subr.mxu0 0.0
      %3772 = vmatpush1.msra.mxu0 %v3449
      %3773 = vmatprep.subr.mxu0 0.0
      %3774 = vmatpush1.msra.mxu0 0.0
      %3775 = vmatprep.subr.mxu0 0.0
      %3776 = vmatpush1.msra.mxu0 0.0
      %3777 = vmatprep.subr.mxu0 0.0
      %3778 = vmatpush1.msra.mxu0 0.0
      %3779 = vmatprep.subr.mxu0 0.0
      %3780 = vmatpush1.msra.mxu0 0.0
      %3781 = vmatprep.subr.mxu0 0.0
      %3782 = vmatpush1.msra.mxu0 0.0
      %3783 = vmatprep.subr.mxu0 0.0
      %3784 = vmatpush1.msra.mxu0 0.0
      %3785 = vmatprep.subr.mxu0 0.0
      %3786 = vmatpush1.msra.mxu0 0.0
      %3787 = vmatprep.subr.mxu0 0.0
      %3788 = vmatpush1.msra.mxu0 0.0
      %3789 = vmatprep.subr.mxu0 0.0
      %3790 = vmatpush1.msra.mxu0 0.0
      %3791 = vmatprep.subr.mxu0 0.0
      %3792 = vmatpush1.msra.mxu0 0.0
      %3793 = vmatprep.subr.mxu0 0.0
      %3794 = vmatpush1.msra.mxu0 0.0
      %3795 = vmatprep.subr.mxu0 0.0
      %3796 = vmatpush1.msra.mxu0 0.0
      %3797 = vmatprep.subr.mxu0 0.0
      %3798 = vmatpush1.msra.mxu0 0.0
      %3799 = vmatprep.subr.mxu0 0.0
      %3800 = vmatpush1.msra.mxu0 0.0
      %3801 = vmatprep.subr.mxu0 0.0
      %3802 = vmatpush1.msra.mxu0 0.0
      %3803 = vmatprep.subr.mxu0 0.0
      %3804 = vmatpush1.msra.mxu0 0.0
      %3805 = vmatprep.subr.mxu0 0.0
      %3806 = vmatpush1.msra.mxu0 0.0
      %3807 = vmatprep.subr.mxu0 0.0
      %3808 = vmatpush1.msra.mxu0 0.0
      %3809 = vmatprep.subr.mxu0 0.0
      %3810 = vmatpush1.msra.mxu0 0.0
      %3811 = vmatprep.subr.mxu0 0.0
      %3812 = vmatpush1.msra.mxu0 0.0
      %3813 = vmatprep.subr.mxu0 0.0
      %3814 = vmatpush1.msra.mxu0 0.0
      %3815 = vmatprep.subr.mxu0 0.0
      %3816 = vmatpush1.msra.mxu0 0.0
      %3817 = vmatprep.subr.mxu0 0.0
      %3818 = vmatpush1.msra.mxu0 0.0
      %3819 = vmatprep.subr.mxu0 0.0
      %3820 = vmatpush1.msra.mxu0 0.0
      %3821 = vmatprep.subr.mxu0 0.0
      %3822 = vmatpush1.msra.mxu0 0.0
      %3823 = vmatprep.subr.mxu0 0.0
      %3824 = vmatpush1.msra.mxu0 0.0
      %3825 = vmatprep.subr.mxu0 0.0
      %3826 = vmatpush1.msra.mxu0 0.0
      %3827 = vmatprep.subr.mxu0 0.0
      %3828 = vmatpush1.msra.mxu0 0.0
      %3829 = vmatprep.mubr.f32.mxu0 0.0
      %3830 = vmatmul.mubr.f32.gmra.mrb[0].mxu0 %v3751
      %v3831 = vpop.f32.mrb[0].mxu0
      %v3832 = vadd.f32 0.0, %v3831
      %v3833 = vpop.f32.mrb[0].mxu0
      %3834 = vmatprep.mubr.f32.mxu0 0.0
      %3835 = vmatmul.mubr.f32.gmra.mrb[0].mxu0 %v3754
      %v3836 = vpop.f32.mrb[0].mxu0
      %v3837 = vadd.f32 0.0, %v3836
      %v3838 = vpop.f32.mrb[0].mxu0
      %3839 = vmatprep.mubr.f32.mxu0 0.0
      %3840 = vmatmul.mubr.f32.gmra.mrb[0].mxu0 %v3757
      %v3841 = vpop.f32.mrb[0].mxu0
      %v3842 = vadd.f32 0.0, %v3841
      %v3843 = vpop.f32.mrb[0].mxu0
      %3844 = vmatprep.mubr.f32.mxu0 0.0
      %3845 = vmatmul.mubr.f32.gmra.mrb[0].mxu0 %v3760
      %v3846 = vpop.f32.mrb[0].mxu0
      %v3847 = vadd.f32 0.0, %v3846
      %v3848 = vpop.f32.mrb[0].mxu0
      %3849 = vmatprep.mubr.f32.mxu0 0.0
      %3850 = vmatmul.mubr.f32.gmra.mrb[0].mxu0 %v3763
      %v3851 = vpop.f32.mrb[0].mxu0
      %v3852 = vadd.f32 0.0, %v3851
      %v3853 = vpop.f32.mrb[0].mxu0
      %3854 = vdwg.mxu0
      %3855 = vmatprep.subr.mxu0 0.0
      %3856 = vmatpush1.msra.mxu0 %v3435
      %3857 = vmatprep.subr.mxu0 0.0
      %3858 = vmatpush1.msra.mxu0 %v3436
      %3859 = vmatprep.subr.mxu0 0.0
      %3860 = vmatpush1.msra.mxu0 %v3437
      %3861 = vmatprep.subr.mxu0 0.0
      %3862 = vmatpush1.msra.mxu0 %v3438
      %3863 = vmatprep.subr.mxu0 0.0
      %3864 = vmatpush1.msra.mxu0 0.0
      %3865 = vmatprep.subr.mxu0 0.0
      %3866 = vmatpush1.msra.mxu0 0.0
      %3867 = vmatprep.subr.mxu0 0.0
      %3868 = vmatpush1.msra.mxu0 0.0
      %3869 = vmatprep.subr.mxu0 0.0
      %3870 = vmatpush1.msra.mxu0 0.0
      %3871 = vmatprep.subr.mxu0 0.0
      %3872 = vmatpush1.msra.mxu0 0.0
      %3873 = vmatprep.subr.mxu0 0.0
      %3874 = vmatpush1.msra.mxu0 0.0
      %3875 = vmatprep.subr.mxu0 0.0
      %3876 = vmatpush1.msra.mxu0 0.0
      %3877 = vmatprep.subr.mxu0 0.0
      %3878 = vmatpush1.msra.mxu0 0.0
      %3879 = vmatprep.subr.mxu0 0.0
      %3880 = vmatpush1.msra.mxu0 0.0
      %3881 = vmatprep.subr.mxu0 0.0
      %3882 = vmatpush1.msra.mxu0 0.0
      %3883 = vmatprep.subr.mxu0 0.0
      %3884 = vmatpush1.msra.mxu0 0.0
      %3885 = vmatprep.subr.mxu0 0.0
      %3886 = vmatpush1.msra.mxu0 0.0
      %3887 = vmatprep.subr.mxu0 0.0
      %3888 = vmatpush1.msra.mxu0 0.0
      %3889 = vmatprep.subr.mxu0 0.0
      %3890 = vmatpush1.msra.mxu0 0.0
      %3891 = vmatprep.subr.mxu0 0.0
      %3892 = vmatpush1.msra.mxu0 0.0
      %3893 = vmatprep.subr.mxu0 0.0
      %3894 = vmatpush1.msra.mxu0 0.0
      %3895 = vmatprep.subr.mxu0 0.0
      %3896 = vmatpush1.msra.mxu0 0.0
      %3897 = vmatprep.subr.mxu0 0.0
      %3898 = vmatpush1.msra.mxu0 0.0
      %3899 = vmatprep.subr.mxu0 0.0
      %3900 = vmatpush1.msra.mxu0 0.0
      %3901 = vmatprep.subr.mxu0 0.0
      %3902 = vmatpush1.msra.mxu0 0.0
      %3903 = vmatprep.subr.mxu0 0.0
      %3904 = vmatpush1.msra.mxu0 0.0
      %3905 = vmatprep.subr.mxu0 0.0
      %3906 = vmatpush1.msra.mxu0 0.0
      %3907 = vmatprep.subr.mxu0 0.0
      %3908 = vmatpush1.msra.mxu0 0.0
      %3909 = vmatprep.subr.mxu0 0.0
      %3910 = vmatpush1.msra.mxu0 0.0
      %3911 = vmatprep.subr.mxu0 0.0
      %3912 = vmatpush1.msra.mxu0 0.0
      %3913 = vmatprep.subr.mxu0 0.0
      %3914 = vmatpush1.msra.mxu0 0.0
      %3915 = vmatprep.subr.mxu0 0.0
      %3916 = vmatpush1.msra.mxu0 0.0
      %3917 = vmatprep.subr.mxu0 0.0
      %3918 = vmatpush1.msra.mxu0 0.0
      %3919 = vmatprep.mubr.f32.mxu0 0.0
      %3920 = vmatmul.mubr.f32.gmra.mrb[0].mxu0 %v3451
      %v3921 = vpop.f32.mrb[0].mxu0
      %v3922 = vadd.f32 0.0, %v3921
      %v3923 = vpop.f32.mrb[0].mxu0
      %3924 = vmatprep.mubr.f32.mxu0 0.0
      %3925 = vmatmul.mubr.f32.gmra.mrb[0].mxu0 %v3454
      %v3926 = vpop.f32.mrb[0].mxu0
      %v3927 = vadd.f32 0.0, %v3926
      %v3928 = vpop.f32.mrb[0].mxu0
      %3929 = vmatprep.mubr.f32.mxu0 0.0
      %3930 = vmatmul.mubr.f32.gmra.mrb[0].mxu0 %v3457
      %v3931 = vpop.f32.mrb[0].mxu0
      %v3932 = vadd.f32 0.0, %v3931
      %v3933 = vpop.f32.mrb[0].mxu0
      %3934 = vmatprep.mubr.f32.mxu0 0.0
      %3935 = vmatmul.mubr.f32.gmra.mrb[0].mxu0 %v3460
      %v3936 = vpop.f32.mrb[0].mxu0
      %v3937 = vadd.f32 0.0, %v3936
      %v3938 = vpop.f32.mrb[0].mxu0
      %3939 = vmatprep.mubr.f32.mxu0 0.0
      %3940 = vmatmul.mubr.f32.gmra.mrb[0].mxu0 %v3463
      %v3941 = vpop.f32.mrb[0].mxu0
      %v3942 = vadd.f32 0.0, %v3941
      %v3943 = vpop.f32.mrb[0].mxu0
      %3944 = vdwg.mxu0
      %v3946 = vsel %vm250, %v3922, 0
      %v3949 = vsel %vm250, %v3927, 0
      %v3952 = vsel %vm250, %v3932, 0
      %v3955 = vsel %vm250, %v3937, 0
      %v3958 = vsel %vm250, %v3942, 0
      %3960 = vmatprep.subr.mxu0 0.0
      %3961 = vmatpush1.msra.mxu0 %v3446
      %3962 = vmatprep.subr.mxu0 0.0
      %3963 = vmatpush1.msra.mxu0 %v3447
      %3964 = vmatprep.subr.mxu0 0.0
      %3965 = vmatpush1.msra.mxu0 %v3448
      %3966 = vmatprep.subr.mxu0 0.0
      %3967 = vmatpush1.msra.mxu0 %v3449
      %3968 = vmatprep.subr.mxu0 0.0
      %3969 = vmatpush1.msra.mxu0 0.0
      %3970 = vmatprep.subr.mxu0 0.0
      %3971 = vmatpush1.msra.mxu0 0.0
      %3972 = vmatprep.subr.mxu0 0.0
      %3973 = vmatpush1.msra.mxu0 0.0
      %3974 = vmatprep.subr.mxu0 0.0
      %3975 = vmatpush1.msra.mxu0 0.0
      %3976 = vmatprep.subr.mxu0 0.0
      %3977 = vmatpush1.msra.mxu0 0.0
      %3978 = vmatprep.subr.mxu0 0.0
      %3979 = vmatpush1.msra.mxu0 0.0
      %3980 = vmatprep.subr.mxu0 0.0
      %3981 = vmatpush1.msra.mxu0 0.0
      %3982 = vmatprep.subr.mxu0 0.0
      %3983 = vmatpush1.msra.mxu0 0.0
      %3984 = vmatprep.subr.mxu0 0.0
      %3985 = vmatpush1.msra.mxu0 0.0
      %3986 = vmatprep.subr.mxu0 0.0
      %3987 = vmatpush1.msra.mxu0 0.0
      %3988 = vmatprep.subr.mxu0 0.0
      %3989 = vmatpush1.msra.mxu0 0.0
      %3990 = vmatprep.subr.mxu0 0.0
      %3991 = vmatpush1.msra.mxu0 0.0
      %3992 = vmatprep.subr.mxu0 0.0
      %3993 = vmatpush1.msra.mxu0 0.0
      %3994 = vmatprep.subr.mxu0 0.0
      %3995 = vmatpush1.msra.mxu0 0.0
      %3996 = vmatprep.subr.mxu0 0.0
      %3997 = vmatpush1.msra.mxu0 0.0
      %3998 = vmatprep.subr.mxu0 0.0
      %3999 = vmatpush1.msra.mxu0 0.0
      %4000 = vmatprep.subr.mxu0 0.0
      %4001 = vmatpush1.msra.mxu0 0.0
      %4002 = vmatprep.subr.mxu0 0.0
      %4003 = vmatpush1.msra.mxu0 0.0
      %4004 = vmatprep.subr.mxu0 0.0
      %4005 = vmatpush1.msra.mxu0 0.0
      %4006 = vmatprep.subr.mxu0 0.0
      %4007 = vmatpush1.msra.mxu0 0.0
      %4008 = vmatprep.subr.mxu0 0.0
      %4009 = vmatpush1.msra.mxu0 0.0
      %4010 = vmatprep.subr.mxu0 0.0
      %4011 = vmatpush1.msra.mxu0 0.0
      %4012 = vmatprep.subr.mxu0 0.0
      %4013 = vmatpush1.msra.mxu0 0.0
      %4014 = vmatprep.subr.mxu0 0.0
      %4015 = vmatpush1.msra.mxu0 0.0
      %4016 = vmatprep.subr.mxu0 0.0
      %4017 = vmatpush1.msra.mxu0 0.0
      %4018 = vmatprep.subr.mxu0 0.0
      %4019 = vmatpush1.msra.mxu0 0.0
      %4020 = vmatprep.subr.mxu0 0.0
      %4021 = vmatpush1.msra.mxu0 0.0
      %4022 = vmatprep.subr.mxu0 0.0
      %4023 = vmatpush1.msra.mxu0 0.0
      %4024 = vmatprep.mubr.f32.mxu0 0.0
      %4025 = vmatmul.mubr.f32.gmra.mrb[0].mxu0 %v3946
      %v4026 = vpop.f32.mrb[0].mxu0
      %v4027 = vadd.f32 0.0, %v4026
      %v4028 = vpop.f32.mrb[0].mxu0
      %4029 = vmatprep.mubr.f32.mxu0 0.0
      %4030 = vmatmul.mubr.f32.gmra.mrb[0].mxu0 %v3949
      %v4031 = vpop.f32.mrb[0].mxu0
      %v4032 = vadd.f32 0.0, %v4031
      %v4033 = vpop.f32.mrb[0].mxu0
      %4034 = vmatprep.mubr.f32.mxu0 0.0
      %4035 = vmatmul.mubr.f32.gmra.mrb[0].mxu0 %v3952
      %v4036 = vpop.f32.mrb[0].mxu0
      %v4037 = vadd.f32 0.0, %v4036
      %v4038 = vpop.f32.mrb[0].mxu0
      %4039 = vmatprep.mubr.f32.mxu0 0.0
      %4040 = vmatmul.mubr.f32.gmra.mrb[0].mxu0 %v3955
      %v4041 = vpop.f32.mrb[0].mxu0
      %v4042 = vadd.f32 0.0, %v4041
      %v4043 = vpop.f32.mrb[0].mxu0
      %4044 = vmatprep.mubr.f32.mxu0 0.0
      %4045 = vmatmul.mubr.f32.gmra.mrb[0].mxu0 %v3958
      %v4046 = vpop.f32.mrb[0].mxu0
      %v4047 = vadd.f32 0.0, %v4046
      %v4048 = vpop.f32.mrb[0].mxu0
      %4049 = vdwg.mxu0
      %s4050 = scalar_lea.vmem %s227, 600
      %4051 = vst [vmem:[%s4050] sm:$0xff] %v3637
      %4052 = vst [vmem:[%s4050 + $0x8] sm:$0xff] %v3642
      %4053 = vst [vmem:[%s4050 + $0x10] sm:$0xff] %v3647
      %4054 = vst [vmem:[%s4050 + $0x18] sm:$0xff] %v3652
      %4055 = vst [vmem:[%s4050 + $0x20] sm:$0xff] %v3657
      %4056 = vst [vmem:[%s4050 + $0x28] sm:$0xff] %v3832
      %4057 = vst [vmem:[%s4050 + $0x30] sm:$0xff] %v3837
      %4058 = vst [vmem:[%s4050 + $0x38] sm:$0xff] %v3842
      %4059 = vst [vmem:[%s4050 + $0x40] sm:$0xff] %v3847
      %4060 = vst [vmem:[%s4050 + $0x48] sm:$0xff] %v3852
      %4061 = vst [vmem:[%s4050 + $0x50] sm:$0xff] %v4027
      %4062 = vst [vmem:[%s4050 + $0x58] sm:$0xff] %v4032
      %4063 = vst [vmem:[%s4050 + $0x60] sm:$0xff] %v4037
      %4064 = vst [vmem:[%s4050 + $0x68] sm:$0xff] %v4042
      %4065 = vst [vmem:[%s4050 + $0x70] sm:$0xff] %v4047
      %s4066 = scalar_lea.vmem %s206, 576
      %v4067 = vld [vmem:[%s4066] sm:$0xff]
      %v4068 = vld [vmem:[%s4066 + $0x8] sm:$0xff]
      %v4069 = vld [vmem:[%s4066 + $0x10] sm:$0xff]
      %v4070 = vld [vmem:[%s4066 + $0x18] sm:$0xff]
      %v4071 = vld [vmem:[%s4066 + $0x20] sm:$0xff]
      %v4072 = vld [vmem:[%s4066 + $0x28] sm:$0xff]
      %v4073 = vld [vmem:[%s4066 + $0x30] sm:$0xff]
      %v4074 = vld [vmem:[%s4066 + $0x38] sm:$0xff]
      %v4075 = vld [vmem:[%s4066 + $0x40] sm:$0xff]
      %v4076 = vld [vmem:[%s4066 + $0x48] sm:$0xff]
      %v4077 = vld [vmem:[%s4066 + $0x50] sm:$0xff]
      %v4078 = vld [vmem:[%s4066 + $0x58] sm:$0xff]
      %s4079 = scalar_lea.vmem %s213, 240
      %v4080 = vld [vmem:[%s4079] sm:$0xff]
      %v4081 = vld [vmem:[%s4079 + $0x8] sm:$0xff]
      %v4082 = vld [vmem:[%s4079 + $0x10] sm:$0xff]
      %v4083 = vld [vmem:[%s4079 + $0x18] sm:$0xff]
      %v4084 = vld [vmem:[%s4079 + $0x20] sm:$0xff]
      %s4085 = scalar_lea.vmem %s220, 192
      %v4086 = vld [vmem:[%s4085] sm:$0xff]
      %v4087 = vld [vmem:[%s4085 + $0x8] sm:$0xff]
      %v4088 = vld [vmem:[%s4085 + $0x10] sm:$0xff]
      %v4089 = vld [vmem:[%s4085 + $0x18] sm:$0xff]
      %v4091 = vsel %vm250, %v4080, 0
      %v4094 = vsel %vm250, %v4081, 0
      %v4097 = vsel %vm250, %v4082, 0
      %v4100 = vsel %vm250, %v4083, 0
      %v4103 = vsel %vm250, %v4084, 0
      %4105 = vmatprep.subr.mxu0 0.0
      %4106 = vmatpush1.msra.mxu0 %v4067
      %4107 = vmatprep.subr.mxu0 0.0
      %4108 = vmatpush1.msra.mxu0 %v4068
      %4109 = vmatprep.subr.mxu0 0.0
      %4110 = vmatpush1.msra.mxu0 %v4069
      %4111 = vmatprep.subr.mxu0 0.0
      %4112 = vmatpush1.msra.mxu0 %v4070
      %4113 = vmatprep.subr.mxu0 0.0
      %4114 = vmatpush1.msra.mxu0 0.0
      %4115 = vmatprep.subr.mxu0 0.0
      %4116 = vmatpush1.msra.mxu0 0.0
      %4117 = vmatprep.subr.mxu0 0.0
      %4118 = vmatpush1.msra.mxu0 0.0
      %4119 = vmatprep.subr.mxu0 0.0
      %4120 = vmatpush1.msra.mxu0 0.0
      %4121 = vmatprep.subr.mxu0 0.0
      %4122 = vmatpush1.msra.mxu0 0.0
      %4123 = vmatprep.subr.mxu0 0.0
      %4124 = vmatpush1.msra.mxu0 0.0
      %4125 = vmatprep.subr.mxu0 0.0
      %4126 = vmatpush1.msra.mxu0 0.0
      %4127 = vmatprep.subr.mxu0 0.0
      %4128 = vmatpush1.msra.mxu0 0.0
      %4129 = vmatprep.subr.mxu0 0.0
      %4130 = vmatpush1.msra.mxu0 0.0
      %4131 = vmatprep.subr.mxu0 0.0
      %4132 = vmatpush1.msra.mxu0 0.0
      %4133 = vmatprep.subr.mxu0 0.0
      %4134 = vmatpush1.msra.mxu0 0.0
      %4135 = vmatprep.subr.mxu0 0.0
      %4136 = vmatpush1.msra.mxu0 0.0
      %4137 = vmatprep.subr.mxu0 0.0
      %4138 = vmatpush1.msra.mxu0 0.0
      %4139 = vmatprep.subr.mxu0 0.0
      %4140 = vmatpush1.msra.mxu0 0.0
      %4141 = vmatprep.subr.mxu0 0.0
      %4142 = vmatpush1.msra.mxu0 0.0
      %4143 = vmatprep.subr.mxu0 0.0
      %4144 = vmatpush1.msra.mxu0 0.0
      %4145 = vmatprep.subr.mxu0 0.0
      %4146 = vmatpush1.msra.mxu0 0.0
      %4147 = vmatprep.subr.mxu0 0.0
      %4148 = vmatpush1.msra.mxu0 0.0
      %4149 = vmatprep.subr.mxu0 0.0
      %4150 = vmatpush1.msra.mxu0 0.0
      %4151 = vmatprep.subr.mxu0 0.0
      %4152 = vmatpush1.msra.mxu0 0.0
      %4153 = vmatprep.subr.mxu0 0.0
      %4154 = vmatpush1.msra.mxu0 0.0
      %4155 = vmatprep.subr.mxu0 0.0
      %4156 = vmatpush1.msra.mxu0 0.0
      %4157 = vmatprep.subr.mxu0 0.0
      %4158 = vmatpush1.msra.mxu0 0.0
      %4159 = vmatprep.subr.mxu0 0.0
      %4160 = vmatpush1.msra.mxu0 0.0
      %4161 = vmatprep.subr.mxu0 0.0
      %4162 = vmatpush1.msra.mxu0 0.0
      %4163 = vmatprep.subr.mxu0 0.0
      %4164 = vmatpush1.msra.mxu0 0.0
      %4165 = vmatprep.subr.mxu0 0.0
      %4166 = vmatpush1.msra.mxu0 0.0
      %4167 = vmatprep.subr.mxu0 0.0
      %4168 = vmatpush1.msra.mxu0 0.0
      %4169 = vmatprep.mubr.f32.mxu0 0.0
      %4170 = vmatmul.mubr.f32.gmra.mrb[0].mxu0 %v4091
      %v4171 = vpop.f32.mrb[0].mxu0
      %v4172 = vadd.f32 0.0, %v4171
      %v4173 = vpop.f32.mrb[0].mxu0
      %4174 = vmatprep.mubr.f32.mxu0 0.0
      %4175 = vmatmul.mubr.f32.gmra.mrb[0].mxu0 %v4094
      %v4176 = vpop.f32.mrb[0].mxu0
      %v4177 = vadd.f32 0.0, %v4176
      %v4178 = vpop.f32.mrb[0].mxu0
      %4179 = vmatprep.mubr.f32.mxu0 0.0
      %4180 = vmatmul.mubr.f32.gmra.mrb[0].mxu0 %v4097
      %v4181 = vpop.f32.mrb[0].mxu0
      %v4182 = vadd.f32 0.0, %v4181
      %v4183 = vpop.f32.mrb[0].mxu0
      %4184 = vmatprep.mubr.f32.mxu0 0.0
      %4185 = vmatmul.mubr.f32.gmra.mrb[0].mxu0 %v4100
      %v4186 = vpop.f32.mrb[0].mxu0
      %v4187 = vadd.f32 0.0, %v4186
      %v4188 = vpop.f32.mrb[0].mxu0
      %4189 = vmatprep.mubr.f32.mxu0 0.0
      %4190 = vmatmul.mubr.f32.gmra.mrb[0].mxu0 %v4103
      %v4191 = vpop.f32.mrb[0].mxu0
      %v4192 = vadd.f32 0.0, %v4191
      %v4193 = vpop.f32.mrb[0].mxu0
      %4194 = vdwg.mxu0
      %v4196 = vsel %vm250, %v4172, 0
      %v4199 = vsel %vm250, %v4177, 0
      %v4202 = vsel %vm250, %v4182, 0
      %v4205 = vsel %vm250, %v4187, 0
      %v4208 = vsel %vm250, %v4192, 0
      %4210 = vmatprep.subr.mxu0 0.0
      %4211 = vmatpush1.msra.mxu0 %v4086
      %4212 = vmatprep.subr.mxu0 0.0
      %4213 = vmatpush1.msra.mxu0 %v4087
      %4214 = vmatprep.subr.mxu0 0.0
      %4215 = vmatpush1.msra.mxu0 %v4088
      %4216 = vmatprep.subr.mxu0 0.0
      %4217 = vmatpush1.msra.mxu0 %v4089
      %4218 = vmatprep.subr.mxu0 0.0
      %4219 = vmatpush1.msra.mxu0 0.0
      %4220 = vmatprep.subr.mxu0 0.0
      %4221 = vmatpush1.msra.mxu0 0.0
      %4222 = vmatprep.subr.mxu0 0.0
      %4223 = vmatpush1.msra.mxu0 0.0
      %4224 = vmatprep.subr.mxu0 0.0
      %4225 = vmatpush1.msra.mxu0 0.0
      %4226 = vmatprep.subr.mxu0 0.0
      %4227 = vmatpush1.msra.mxu0 0.0
      %4228 = vmatprep.subr.mxu0 0.0
      %4229 = vmatpush1.msra.mxu0 0.0
      %4230 = vmatprep.subr.mxu0 0.0
      %4231 = vmatpush1.msra.mxu0 0.0
      %4232 = vmatprep.subr.mxu0 0.0
      %4233 = vmatpush1.msra.mxu0 0.0
      %4234 = vmatprep.subr.mxu0 0.0
      %4235 = vmatpush1.msra.mxu0 0.0
      %4236 = vmatprep.subr.mxu0 0.0
      %4237 = vmatpush1.msra.mxu0 0.0
      %4238 = vmatprep.subr.mxu0 0.0
      %4239 = vmatpush1.msra.mxu0 0.0
      %4240 = vmatprep.subr.mxu0 0.0
      %4241 = vmatpush1.msra.mxu0 0.0
      %4242 = vmatprep.subr.mxu0 0.0
      %4243 = vmatpush1.msra.mxu0 0.0
      %4244 = vmatprep.subr.mxu0 0.0
      %4245 = vmatpush1.msra.mxu0 0.0
      %4246 = vmatprep.subr.mxu0 0.0
      %4247 = vmatpush1.msra.mxu0 0.0
      %4248 = vmatprep.subr.mxu0 0.0
      %4249 = vmatpush1.msra.mxu0 0.0
      %4250 = vmatprep.subr.mxu0 0.0
      %4251 = vmatpush1.msra.mxu0 0.0
      %4252 = vmatprep.subr.mxu0 0.0
      %4253 = vmatpush1.msra.mxu0 0.0
      %4254 = vmatprep.subr.mxu0 0.0
      %4255 = vmatpush1.msra.mxu0 0.0
      %4256 = vmatprep.subr.mxu0 0.0
      %4257 = vmatpush1.msra.mxu0 0.0
      %4258 = vmatprep.subr.mxu0 0.0
      %4259 = vmatpush1.msra.mxu0 0.0
      %4260 = vmatprep.subr.mxu0 0.0
      %4261 = vmatpush1.msra.mxu0 0.0
      %4262 = vmatprep.subr.mxu0 0.0
      %4263 = vmatpush1.msra.mxu0 0.0
      %4264 = vmatprep.subr.mxu0 0.0
      %4265 = vmatpush1.msra.mxu0 0.0
      %4266 = vmatprep.subr.mxu0 0.0
      %4267 = vmatpush1.msra.mxu0 0.0
      %4268 = vmatprep.subr.mxu0 0.0
      %4269 = vmatpush1.msra.mxu0 0.0
      %4270 = vmatprep.subr.mxu0 0.0
      %4271 = vmatpush1.msra.mxu0 0.0
      %4272 = vmatprep.subr.mxu0 0.0
      %4273 = vmatpush1.msra.mxu0 0.0
      %4274 = vmatprep.mubr.f32.mxu0 0.0
      %4275 = vmatmul.mubr.f32.gmra.mrb[0].mxu0 %v4196
      %v4276 = vpop.f32.mrb[0].mxu0
      %v4277 = vadd.f32 0.0, %v4276
      %v4278 = vpop.f32.mrb[0].mxu0
      %4279 = vmatprep.mubr.f32.mxu0 0.0
      %4280 = vmatmul.mubr.f32.gmra.mrb[0].mxu0 %v4199
      %v4281 = vpop.f32.mrb[0].mxu0
      %v4282 = vadd.f32 0.0, %v4281
      %v4283 = vpop.f32.mrb[0].mxu0
      %4284 = vmatprep.mubr.f32.mxu0 0.0
      %4285 = vmatmul.mubr.f32.gmra.mrb[0].mxu0 %v4202
      %v4286 = vpop.f32.mrb[0].mxu0
      %v4287 = vadd.f32 0.0, %v4286
      %v4288 = vpop.f32.mrb[0].mxu0
      %4289 = vmatprep.mubr.f32.mxu0 0.0
      %4290 = vmatmul.mubr.f32.gmra.mrb[0].mxu0 %v4205
      %v4291 = vpop.f32.mrb[0].mxu0
      %v4292 = vadd.f32 0.0, %v4291
      %v4293 = vpop.f32.mrb[0].mxu0
      %4294 = vmatprep.mubr.f32.mxu0 0.0
      %4295 = vmatmul.mubr.f32.gmra.mrb[0].mxu0 %v4208
      %v4296 = vpop.f32.mrb[0].mxu0
      %v4297 = vadd.f32 0.0, %v4296
      %v4298 = vpop.f32.mrb[0].mxu0
      %4299 = vdwg.mxu0
      %4300 = vmatprep.subr.mxu0 0.0
      %4301 = vmatpush1.msra.mxu0 %v4071
      %4302 = vmatprep.subr.mxu0 0.0
      %4303 = vmatpush1.msra.mxu0 %v4072
      %4304 = vmatprep.subr.mxu0 0.0
      %4305 = vmatpush1.msra.mxu0 %v4073
      %4306 = vmatprep.subr.mxu0 0.0
      %4307 = vmatpush1.msra.mxu0 %v4074
      %4308 = vmatprep.subr.mxu0 0.0
      %4309 = vmatpush1.msra.mxu0 0.0
      %4310 = vmatprep.subr.mxu0 0.0
      %4311 = vmatpush1.msra.mxu0 0.0
      %4312 = vmatprep.subr.mxu0 0.0
      %4313 = vmatpush1.msra.mxu0 0.0
      %4314 = vmatprep.subr.mxu0 0.0
      %4315 = vmatpush1.msra.mxu0 0.0
      %4316 = vmatprep.subr.mxu0 0.0
      %4317 = vmatpush1.msra.mxu0 0.0
      %4318 = vmatprep.subr.mxu0 0.0
      %4319 = vmatpush1.msra.mxu0 0.0
      %4320 = vmatprep.subr.mxu0 0.0
      %4321 = vmatpush1.msra.mxu0 0.0
      %4322 = vmatprep.subr.mxu0 0.0
      %4323 = vmatpush1.msra.mxu0 0.0
      %4324 = vmatprep.subr.mxu0 0.0
      %4325 = vmatpush1.msra.mxu0 0.0
      %4326 = vmatprep.subr.mxu0 0.0
      %4327 = vmatpush1.msra.mxu0 0.0
      %4328 = vmatprep.subr.mxu0 0.0
      %4329 = vmatpush1.msra.mxu0 0.0
      %4330 = vmatprep.subr.mxu0 0.0
      %4331 = vmatpush1.msra.mxu0 0.0
      %4332 = vmatprep.subr.mxu0 0.0
      %4333 = vmatpush1.msra.mxu0 0.0
      %4334 = vmatprep.subr.mxu0 0.0
      %4335 = vmatpush1.msra.mxu0 0.0
      %4336 = vmatprep.subr.mxu0 0.0
      %4337 = vmatpush1.msra.mxu0 0.0
      %4338 = vmatprep.subr.mxu0 0.0
      %4339 = vmatpush1.msra.mxu0 0.0
      %4340 = vmatprep.subr.mxu0 0.0
      %4341 = vmatpush1.msra.mxu0 0.0
      %4342 = vmatprep.subr.mxu0 0.0
      %4343 = vmatpush1.msra.mxu0 0.0
      %4344 = vmatprep.subr.mxu0 0.0
      %4345 = vmatpush1.msra.mxu0 0.0
      %4346 = vmatprep.subr.mxu0 0.0
      %4347 = vmatpush1.msra.mxu0 0.0
      %4348 = vmatprep.subr.mxu0 0.0
      %4349 = vmatpush1.msra.mxu0 0.0
      %4350 = vmatprep.subr.mxu0 0.0
      %4351 = vmatpush1.msra.mxu0 0.0
      %4352 = vmatprep.subr.mxu0 0.0
      %4353 = vmatpush1.msra.mxu0 0.0
      %4354 = vmatprep.subr.mxu0 0.0
      %4355 = vmatpush1.msra.mxu0 0.0
      %4356 = vmatprep.subr.mxu0 0.0
      %4357 = vmatpush1.msra.mxu0 0.0
      %4358 = vmatprep.subr.mxu0 0.0
      %4359 = vmatpush1.msra.mxu0 0.0
      %4360 = vmatprep.subr.mxu0 0.0
      %4361 = vmatpush1.msra.mxu0 0.0
      %4362 = vmatprep.subr.mxu0 0.0
      %4363 = vmatpush1.msra.mxu0 0.0
      %4364 = vmatprep.mubr.f32.mxu0 0.0
      %4365 = vmatmul.mubr.f32.gmra.mrb[0].mxu0 %v4091
      %v4366 = vpop.f32.mrb[0].mxu0
      %v4367 = vadd.f32 0.0, %v4366
      %v4368 = vpop.f32.mrb[0].mxu0
      %4369 = vmatprep.mubr.f32.mxu0 0.0
      %4370 = vmatmul.mubr.f32.gmra.mrb[0].mxu0 %v4094
      %v4371 = vpop.f32.mrb[0].mxu0
      %v4372 = vadd.f32 0.0, %v4371
      %v4373 = vpop.f32.mrb[0].mxu0
      %4374 = vmatprep.mubr.f32.mxu0 0.0
      %4375 = vmatmul.mubr.f32.gmra.mrb[0].mxu0 %v4097
      %v4376 = vpop.f32.mrb[0].mxu0
      %v4377 = vadd.f32 0.0, %v4376
      %v4378 = vpop.f32.mrb[0].mxu0
      %4379 = vmatprep.mubr.f32.mxu0 0.0
      %4380 = vmatmul.mubr.f32.gmra.mrb[0].mxu0 %v4100
      %v4381 = vpop.f32.mrb[0].mxu0
      %v4382 = vadd.f32 0.0, %v4381
      %v4383 = vpop.f32.mrb[0].mxu0
      %4384 = vmatprep.mubr.f32.mxu0 0.0
      %4385 = vmatmul.mubr.f32.gmra.mrb[0].mxu0 %v4103
      %v4386 = vpop.f32.mrb[0].mxu0
      %v4387 = vadd.f32 0.0, %v4386
      %v4388 = vpop.f32.mrb[0].mxu0
      %4389 = vdwg.mxu0
      %v4391 = vsel %vm250, %v4367, 0
      %v4394 = vsel %vm250, %v4372, 0
      %v4397 = vsel %vm250, %v4377, 0
      %v4400 = vsel %vm250, %v4382, 0
      %v4403 = vsel %vm250, %v4387, 0
      %4405 = vmatprep.subr.mxu0 0.0
      %4406 = vmatpush1.msra.mxu0 %v4086
      %4407 = vmatprep.subr.mxu0 0.0
      %4408 = vmatpush1.msra.mxu0 %v4087
      %4409 = vmatprep.subr.mxu0 0.0
      %4410 = vmatpush1.msra.mxu0 %v4088
      %4411 = vmatprep.subr.mxu0 0.0
      %4412 = vmatpush1.msra.mxu0 %v4089
      %4413 = vmatprep.subr.mxu0 0.0
      %4414 = vmatpush1.msra.mxu0 0.0
      %4415 = vmatprep.subr.mxu0 0.0
      %4416 = vmatpush1.msra.mxu0 0.0
      %4417 = vmatprep.subr.mxu0 0.0
      %4418 = vmatpush1.msra.mxu0 0.0
      %4419 = vmatprep.subr.mxu0 0.0
      %4420 = vmatpush1.msra.mxu0 0.0
      %4421 = vmatprep.subr.mxu0 0.0
      %4422 = vmatpush1.msra.mxu0 0.0
      %4423 = vmatprep.subr.mxu0 0.0
      %4424 = vmatpush1.msra.mxu0 0.0
      %4425 = vmatprep.subr.mxu0 0.0
      %4426 = vmatpush1.msra.mxu0 0.0
      %4427 = vmatprep.subr.mxu0 0.0
      %4428 = vmatpush1.msra.mxu0 0.0
      %4429 = vmatprep.subr.mxu0 0.0
      %4430 = vmatpush1.msra.mxu0 0.0
      %4431 = vmatprep.subr.mxu0 0.0
      %4432 = vmatpush1.msra.mxu0 0.0
      %4433 = vmatprep.subr.mxu0 0.0
      %4434 = vmatpush1.msra.mxu0 0.0
      %4435 = vmatprep.subr.mxu0 0.0
      %4436 = vmatpush1.msra.mxu0 0.0
      %4437 = vmatprep.subr.mxu0 0.0
      %4438 = vmatpush1.msra.mxu0 0.0
      %4439 = vmatprep.subr.mxu0 0.0
      %4440 = vmatpush1.msra.mxu0 0.0
      %4441 = vmatprep.subr.mxu0 0.0
      %4442 = vmatpush1.msra.mxu0 0.0
      %4443 = vmatprep.subr.mxu0 0.0
      %4444 = vmatpush1.msra.mxu0 0.0
      %4445 = vmatprep.subr.mxu0 0.0
      %4446 = vmatpush1.msra.mxu0 0.0
      %4447 = vmatprep.subr.mxu0 0.0
      %4448 = vmatpush1.msra.mxu0 0.0
      %4449 = vmatprep.subr.mxu0 0.0
      %4450 = vmatpush1.msra.mxu0 0.0
      %4451 = vmatprep.subr.mxu0 0.0
      %4452 = vmatpush1.msra.mxu0 0.0
      %4453 = vmatprep.subr.mxu0 0.0
      %4454 = vmatpush1.msra.mxu0 0.0
      %4455 = vmatprep.subr.mxu0 0.0
      %4456 = vmatpush1.msra.mxu0 0.0
      %4457 = vmatprep.subr.mxu0 0.0
      %4458 = vmatpush1.msra.mxu0 0.0
      %4459 = vmatprep.subr.mxu0 0.0
      %4460 = vmatpush1.msra.mxu0 0.0
      %4461 = vmatprep.subr.mxu0 0.0
      %4462 = vmatpush1.msra.mxu0 0.0
      %4463 = vmatprep.subr.mxu0 0.0
      %4464 = vmatpush1.msra.mxu0 0.0
      %4465 = vmatprep.subr.mxu0 0.0
      %4466 = vmatpush1.msra.mxu0 0.0
      %4467 = vmatprep.subr.mxu0 0.0
      %4468 = vmatpush1.msra.mxu0 0.0
      %4469 = vmatprep.mubr.f32.mxu0 0.0
      %4470 = vmatmul.mubr.f32.gmra.mrb[0].mxu0 %v4391
      %v4471 = vpop.f32.mrb[0].mxu0
      %v4472 = vadd.f32 0.0, %v4471
      %v4473 = vpop.f32.mrb[0].mxu0
      %4474 = vmatprep.mubr.f32.mxu0 0.0
      %4475 = vmatmul.mubr.f32.gmra.mrb[0].mxu0 %v4394
      %v4476 = vpop.f32.mrb[0].mxu0
      %v4477 = vadd.f32 0.0, %v4476
      %v4478 = vpop.f32.mrb[0].mxu0
      %4479 = vmatprep.mubr.f32.mxu0 0.0
      %4480 = vmatmul.mubr.f32.gmra.mrb[0].mxu0 %v4397
      %v4481 = vpop.f32.mrb[0].mxu0
      %v4482 = vadd.f32 0.0, %v4481
      %v4483 = vpop.f32.mrb[0].mxu0
      %4484 = vmatprep.mubr.f32.mxu0 0.0
      %4485 = vmatmul.mubr.f32.gmra.mrb[0].mxu0 %v4400
      %v4486 = vpop.f32.mrb[0].mxu0
      %v4487 = vadd.f32 0.0, %v4486
      %v4488 = vpop.f32.mrb[0].mxu0
      %4489 = vmatprep.mubr.f32.mxu0 0.0
      %4490 = vmatmul.mubr.f32.gmra.mrb[0].mxu0 %v4403
      %v4491 = vpop.f32.mrb[0].mxu0
      %v4492 = vadd.f32 0.0, %v4491
      %v4493 = vpop.f32.mrb[0].mxu0
      %4494 = vdwg.mxu0
      %4495 = vmatprep.subr.mxu0 0.0
      %4496 = vmatpush1.msra.mxu0 %v4075
      %4497 = vmatprep.subr.mxu0 0.0
      %4498 = vmatpush1.msra.mxu0 %v4076
      %4499 = vmatprep.subr.mxu0 0.0
      %4500 = vmatpush1.msra.mxu0 %v4077
      %4501 = vmatprep.subr.mxu0 0.0
      %4502 = vmatpush1.msra.mxu0 %v4078
      %4503 = vmatprep.subr.mxu0 0.0
      %4504 = vmatpush1.msra.mxu0 0.0
      %4505 = vmatprep.subr.mxu0 0.0
      %4506 = vmatpush1.msra.mxu0 0.0
      %4507 = vmatprep.subr.mxu0 0.0
      %4508 = vmatpush1.msra.mxu0 0.0
      %4509 = vmatprep.subr.mxu0 0.0
      %4510 = vmatpush1.msra.mxu0 0.0
      %4511 = vmatprep.subr.mxu0 0.0
      %4512 = vmatpush1.msra.mxu0 0.0
      %4513 = vmatprep.subr.mxu0 0.0
      %4514 = vmatpush1.msra.mxu0 0.0
      %4515 = vmatprep.subr.mxu0 0.0
      %4516 = vmatpush1.msra.mxu0 0.0
      %4517 = vmatprep.subr.mxu0 0.0
      %4518 = vmatpush1.msra.mxu0 0.0
      %4519 = vmatprep.subr.mxu0 0.0
      %4520 = vmatpush1.msra.mxu0 0.0
      %4521 = vmatprep.subr.mxu0 0.0
      %4522 = vmatpush1.msra.mxu0 0.0
      %4523 = vmatprep.subr.mxu0 0.0
      %4524 = vmatpush1.msra.mxu0 0.0
      %4525 = vmatprep.subr.mxu0 0.0
      %4526 = vmatpush1.msra.mxu0 0.0
      %4527 = vmatprep.subr.mxu0 0.0
      %4528 = vmatpush1.msra.mxu0 0.0
      %4529 = vmatprep.subr.mxu0 0.0
      %4530 = vmatpush1.msra.mxu0 0.0
      %4531 = vmatprep.subr.mxu0 0.0
      %4532 = vmatpush1.msra.mxu0 0.0
      %4533 = vmatprep.subr.mxu0 0.0
      %4534 = vmatpush1.msra.mxu0 0.0
      %4535 = vmatprep.subr.mxu0 0.0
      %4536 = vmatpush1.msra.mxu0 0.0
      %4537 = vmatprep.subr.mxu0 0.0
      %4538 = vmatpush1.msra.mxu0 0.0
      %4539 = vmatprep.subr.mxu0 0.0
      %4540 = vmatpush1.msra.mxu0 0.0
      %4541 = vmatprep.subr.mxu0 0.0
      %4542 = vmatpush1.msra.mxu0 0.0
      %4543 = vmatprep.subr.mxu0 0.0
      %4544 = vmatpush1.msra.mxu0 0.0
      %4545 = vmatprep.subr.mxu0 0.0
      %4546 = vmatpush1.msra.mxu0 0.0
      %4547 = vmatprep.subr.mxu0 0.0
      %4548 = vmatpush1.msra.mxu0 0.0
      %4549 = vmatprep.subr.mxu0 0.0
      %4550 = vmatpush1.msra.mxu0 0.0
      %4551 = vmatprep.subr.mxu0 0.0
      %4552 = vmatpush1.msra.mxu0 0.0
      %4553 = vmatprep.subr.mxu0 0.0
      %4554 = vmatpush1.msra.mxu0 0.0
      %4555 = vmatprep.subr.mxu0 0.0
      %4556 = vmatpush1.msra.mxu0 0.0
      %4557 = vmatprep.subr.mxu0 0.0
      %4558 = vmatpush1.msra.mxu0 0.0
      %4559 = vmatprep.mubr.f32.mxu0 0.0
      %4560 = vmatmul.mubr.f32.gmra.mrb[0].mxu0 %v4091
      %v4561 = vpop.f32.mrb[0].mxu0
      %v4562 = vadd.f32 0.0, %v4561
      %v4563 = vpop.f32.mrb[0].mxu0
      %4564 = vmatprep.mubr.f32.mxu0 0.0
      %4565 = vmatmul.mubr.f32.gmra.mrb[0].mxu0 %v4094
      %v4566 = vpop.f32.mrb[0].mxu0
      %v4567 = vadd.f32 0.0, %v4566
      %v4568 = vpop.f32.mrb[0].mxu0
      %4569 = vmatprep.mubr.f32.mxu0 0.0
      %4570 = vmatmul.mubr.f32.gmra.mrb[0].mxu0 %v4097
      %v4571 = vpop.f32.mrb[0].mxu0
      %v4572 = vadd.f32 0.0, %v4571
      %v4573 = vpop.f32.mrb[0].mxu0
      %4574 = vmatprep.mubr.f32.mxu0 0.0
      %4575 = vmatmul.mubr.f32.gmra.mrb[0].mxu0 %v4100
      %v4576 = vpop.f32.mrb[0].mxu0
      %v4577 = vadd.f32 0.0, %v4576
      %v4578 = vpop.f32.mrb[0].mxu0
      %4579 = vmatprep.mubr.f32.mxu0 0.0
      %4580 = vmatmul.mubr.f32.gmra.mrb[0].mxu0 %v4103
      %v4581 = vpop.f32.mrb[0].mxu0
      %v4582 = vadd.f32 0.0, %v4581
      %v4583 = vpop.f32.mrb[0].mxu0
      %4584 = vdwg.mxu0
      %v4586 = vsel %vm250, %v4562, 0
      %v4589 = vsel %vm250, %v4567, 0
      %v4592 = vsel %vm250, %v4572, 0
      %v4595 = vsel %vm250, %v4577, 0
      %v4598 = vsel %vm250, %v4582, 0
      %4600 = vmatprep.subr.mxu0 0.0
      %4601 = vmatpush1.msra.mxu0 %v4086
      %4602 = vmatprep.subr.mxu0 0.0
      %4603 = vmatpush1.msra.mxu0 %v4087
      %4604 = vmatprep.subr.mxu0 0.0
      %4605 = vmatpush1.msra.mxu0 %v4088
      %4606 = vmatprep.subr.mxu0 0.0
      %4607 = vmatpush1.msra.mxu0 %v4089
      %4608 = vmatprep.subr.mxu0 0.0
      %4609 = vmatpush1.msra.mxu0 0.0
      %4610 = vmatprep.subr.mxu0 0.0
      %4611 = vmatpush1.msra.mxu0 0.0
      %4612 = vmatprep.subr.mxu0 0.0
      %4613 = vmatpush1.msra.mxu0 0.0
      %4614 = vmatprep.subr.mxu0 0.0
      %4615 = vmatpush1.msra.mxu0 0.0
      %4616 = vmatprep.subr.mxu0 0.0
      %4617 = vmatpush1.msra.mxu0 0.0
      %4618 = vmatprep.subr.mxu0 0.0
      %4619 = vmatpush1.msra.mxu0 0.0
      %4620 = vmatprep.subr.mxu0 0.0
      %4621 = vmatpush1.msra.mxu0 0.0
      %4622 = vmatprep.subr.mxu0 0.0
      %4623 = vmatpush1.msra.mxu0 0.0
      %4624 = vmatprep.subr.mxu0 0.0
      %4625 = vmatpush1.msra.mxu0 0.0
      %4626 = vmatprep.subr.mxu0 0.0
      %4627 = vmatpush1.msra.mxu0 0.0
      %4628 = vmatprep.subr.mxu0 0.0
      %4629 = vmatpush1.msra.mxu0 0.0
      %4630 = vmatprep.subr.mxu0 0.0
      %4631 = vmatpush1.msra.mxu0 0.0
      %4632 = vmatprep.subr.mxu0 0.0
      %4633 = vmatpush1.msra.mxu0 0.0
      %4634 = vmatprep.subr.mxu0 0.0
      %4635 = vmatpush1.msra.mxu0 0.0
      %4636 = vmatprep.subr.mxu0 0.0
      %4637 = vmatpush1.msra.mxu0 0.0
      %4638 = vmatprep.subr.mxu0 0.0
      %4639 = vmatpush1.msra.mxu0 0.0
      %4640 = vmatprep.subr.mxu0 0.0
      %4641 = vmatpush1.msra.mxu0 0.0
      %4642 = vmatprep.subr.mxu0 0.0
      %4643 = vmatpush1.msra.mxu0 0.0
      %4644 = vmatprep.subr.mxu0 0.0
      %4645 = vmatpush1.msra.mxu0 0.0
      %4646 = vmatprep.subr.mxu0 0.0
      %4647 = vmatpush1.msra.mxu0 0.0
      %4648 = vmatprep.subr.mxu0 0.0
      %4649 = vmatpush1.msra.mxu0 0.0
      %4650 = vmatprep.subr.mxu0 0.0
      %4651 = vmatpush1.msra.mxu0 0.0
      %4652 = vmatprep.subr.mxu0 0.0
      %4653 = vmatpush1.msra.mxu0 0.0
      %4654 = vmatprep.subr.mxu0 0.0
      %4655 = vmatpush1.msra.mxu0 0.0
      %4656 = vmatprep.subr.mxu0 0.0
      %4657 = vmatpush1.msra.mxu0 0.0
      %4658 = vmatprep.subr.mxu0 0.0
      %4659 = vmatpush1.msra.mxu0 0.0
      %4660 = vmatprep.subr.mxu0 0.0
      %4661 = vmatpush1.msra.mxu0 0.0
      %4662 = vmatprep.subr.mxu0 0.0
      %4663 = vmatpush1.msra.mxu0 0.0
      %4664 = vmatprep.mubr.f32.mxu0 0.0
      %4665 = vmatmul.mubr.f32.gmra.mrb[0].mxu0 %v4586
      %v4666 = vpop.f32.mrb[0].mxu0
      %v4667 = vadd.f32 0.0, %v4666
      %v4668 = vpop.f32.mrb[0].mxu0
      %4669 = vmatprep.mubr.f32.mxu0 0.0
      %4670 = vmatmul.mubr.f32.gmra.mrb[0].mxu0 %v4589
      %v4671 = vpop.f32.mrb[0].mxu0
      %v4672 = vadd.f32 0.0, %v4671
      %v4673 = vpop.f32.mrb[0].mxu0
      %4674 = vmatprep.mubr.f32.mxu0 0.0
      %4675 = vmatmul.mubr.f32.gmra.mrb[0].mxu0 %v4592
      %v4676 = vpop.f32.mrb[0].mxu0
      %v4677 = vadd.f32 0.0, %v4676
      %v4678 = vpop.f32.mrb[0].mxu0
      %4679 = vmatprep.mubr.f32.mxu0 0.0
      %4680 = vmatmul.mubr.f32.gmra.mrb[0].mxu0 %v4595
      %v4681 = vpop.f32.mrb[0].mxu0
      %v4682 = vadd.f32 0.0, %v4681
      %v4683 = vpop.f32.mrb[0].mxu0
      %4684 = vmatprep.mubr.f32.mxu0 0.0
      %4685 = vmatmul.mubr.f32.gmra.mrb[0].mxu0 %v4598
      %v4686 = vpop.f32.mrb[0].mxu0
      %v4687 = vadd.f32 0.0, %v4686
      %v4688 = vpop.f32.mrb[0].mxu0
      %4689 = vdwg.mxu0
      %s4690 = scalar_lea.vmem %s227, 720
      %4691 = vst [vmem:[%s4690] sm:$0xff] %v4277
      %4692 = vst [vmem:[%s4690 + $0x8] sm:$0xff] %v4282
      %4693 = vst [vmem:[%s4690 + $0x10] sm:$0xff] %v4287
      %4694 = vst [vmem:[%s4690 + $0x18] sm:$0xff] %v4292
      %4695 = vst [vmem:[%s4690 + $0x20] sm:$0xff] %v4297
      %4696 = vst [vmem:[%s4690 + $0x28] sm:$0xff] %v4472
      %4697 = vst [vmem:[%s4690 + $0x30] sm:$0xff] %v4477
      %4698 = vst [vmem:[%s4690 + $0x38] sm:$0xff] %v4482
      %4699 = vst [vmem:[%s4690 + $0x40] sm:$0xff] %v4487
      %4700 = vst [vmem:[%s4690 + $0x48] sm:$0xff] %v4492
      %4701 = vst [vmem:[%s4690 + $0x50] sm:$0xff] %v4667
      %4702 = vst [vmem:[%s4690 + $0x58] sm:$0xff] %v4672
      %4703 = vst [vmem:[%s4690 + $0x60] sm:$0xff] %v4677
      %4704 = vst [vmem:[%s4690 + $0x68] sm:$0xff] %v4682
      %4705 = vst [vmem:[%s4690 + $0x70] sm:$0xff] %v4687
      %s4706 = scalar_lea.vmem %s206, 672
      %v4707 = vld [vmem:[%s4706] sm:$0xff]
      %v4708 = vld [vmem:[%s4706 + $0x8] sm:$0xff]
      %v4709 = vld [vmem:[%s4706 + $0x10] sm:$0xff]
      %v4710 = vld [vmem:[%s4706 + $0x18] sm:$0xff]
      %v4711 = vld [vmem:[%s4706 + $0x20] sm:$0xff]
      %v4712 = vld [vmem:[%s4706 + $0x28] sm:$0xff]
      %v4713 = vld [vmem:[%s4706 + $0x30] sm:$0xff]
      %v4714 = vld [vmem:[%s4706 + $0x38] sm:$0xff]
      %v4715 = vld [vmem:[%s4706 + $0x40] sm:$0xff]
      %v4716 = vld [vmem:[%s4706 + $0x48] sm:$0xff]
      %v4717 = vld [vmem:[%s4706 + $0x50] sm:$0xff]
      %v4718 = vld [vmem:[%s4706 + $0x58] sm:$0xff]
      %s4719 = scalar_lea.vmem %s213, 280
      %v4720 = vld [vmem:[%s4719] sm:$0xff]
      %v4721 = vld [vmem:[%s4719 + $0x8] sm:$0xff]
      %v4722 = vld [vmem:[%s4719 + $0x10] sm:$0xff]
      %v4723 = vld [vmem:[%s4719 + $0x18] sm:$0xff]
      %v4724 = vld [vmem:[%s4719 + $0x20] sm:$0xff]
      %s4725 = scalar_lea.vmem %s220, 224
      %v4726 = vld [vmem:[%s4725] sm:$0xff]
      %v4727 = vld [vmem:[%s4725 + $0x8] sm:$0xff]
      %v4728 = vld [vmem:[%s4725 + $0x10] sm:$0xff]
      %v4729 = vld [vmem:[%s4725 + $0x18] sm:$0xff]
      %v4731 = vsel %vm250, %v4720, 0
      %v4734 = vsel %vm250, %v4721, 0
      %v4737 = vsel %vm250, %v4722, 0
      %v4740 = vsel %vm250, %v4723, 0
      %v4743 = vsel %vm250, %v4724, 0
      %4745 = vmatprep.subr.mxu0 0.0
      %4746 = vmatpush1.msra.mxu0 %v4707
      %4747 = vmatprep.subr.mxu0 0.0
      %4748 = vmatpush1.msra.mxu0 %v4708
      %4749 = vmatprep.subr.mxu0 0.0
      %4750 = vmatpush1.msra.mxu0 %v4709
      %4751 = vmatprep.subr.mxu0 0.0
      %4752 = vmatpush1.msra.mxu0 %v4710
      %4753 = vmatprep.subr.mxu0 0.0
      %4754 = vmatpush1.msra.mxu0 0.0
      %4755 = vmatprep.subr.mxu0 0.0
      %4756 = vmatpush1.msra.mxu0 0.0
      %4757 = vmatprep.subr.mxu0 0.0
      %4758 = vmatpush1.msra.mxu0 0.0
      %4759 = vmatprep.subr.mxu0 0.0
      %4760 = vmatpush1.msra.mxu0 0.0
      %4761 = vmatprep.subr.mxu0 0.0
      %4762 = vmatpush1.msra.mxu0 0.0
      %4763 = vmatprep.subr.mxu0 0.0
      %4764 = vmatpush1.msra.mxu0 0.0
      %4765 = vmatprep.subr.mxu0 0.0
      %4766 = vmatpush1.msra.mxu0 0.0
      %4767 = vmatprep.subr.mxu0 0.0
      %4768 = vmatpush1.msra.mxu0 0.0
      %4769 = vmatprep.subr.mxu0 0.0
      %4770 = vmatpush1.msra.mxu0 0.0
      %4771 = vmatprep.subr.mxu0 0.0
      %4772 = vmatpush1.msra.mxu0 0.0
      %4773 = vmatprep.subr.mxu0 0.0
      %4774 = vmatpush1.msra.mxu0 0.0
      %4775 = vmatprep.subr.mxu0 0.0
      %4776 = vmatpush1.msra.mxu0 0.0
      %4777 = vmatprep.subr.mxu0 0.0
      %4778 = vmatpush1.msra.mxu0 0.0
      %4779 = vmatprep.subr.mxu0 0.0
      %4780 = vmatpush1.msra.mxu0 0.0
      %4781 = vmatprep.subr.mxu0 0.0
      %4782 = vmatpush1.msra.mxu0 0.0
      %4783 = vmatprep.subr.mxu0 0.0
      %4784 = vmatpush1.msra.mxu0 0.0
      %4785 = vmatprep.subr.mxu0 0.0
      %4786 = vmatpush1.msra.mxu0 0.0
      %4787 = vmatprep.subr.mxu0 0.0
      %4788 = vmatpush1.msra.mxu0 0.0
      %4789 = vmatprep.subr.mxu0 0.0
      %4790 = vmatpush1.msra.mxu0 0.0
      %4791 = vmatprep.subr.mxu0 0.0
      %4792 = vmatpush1.msra.mxu0 0.0
      %4793 = vmatprep.subr.mxu0 0.0
      %4794 = vmatpush1.msra.mxu0 0.0
      %4795 = vmatprep.subr.mxu0 0.0
      %4796 = vmatpush1.msra.mxu0 0.0
      %4797 = vmatprep.subr.mxu0 0.0
      %4798 = vmatpush1.msra.mxu0 0.0
      %4799 = vmatprep.subr.mxu0 0.0
      %4800 = vmatpush1.msra.mxu0 0.0
      %4801 = vmatprep.subr.mxu0 0.0
      %4802 = vmatpush1.msra.mxu0 0.0
      %4803 = vmatprep.subr.mxu0 0.0
      %4804 = vmatpush1.msra.mxu0 0.0
      %4805 = vmatprep.subr.mxu0 0.0
      %4806 = vmatpush1.msra.mxu0 0.0
      %4807 = vmatprep.subr.mxu0 0.0
      %4808 = vmatpush1.msra.mxu0 0.0
      %4809 = vmatprep.mubr.f32.mxu0 0.0
      %4810 = vmatmul.mubr.f32.gmra.mrb[0].mxu0 %v4731
      %v4811 = vpop.f32.mrb[0].mxu0
      %v4812 = vadd.f32 0.0, %v4811
      %v4813 = vpop.f32.mrb[0].mxu0
      %4814 = vmatprep.mubr.f32.mxu0 0.0
      %4815 = vmatmul.mubr.f32.gmra.mrb[0].mxu0 %v4734
      %v4816 = vpop.f32.mrb[0].mxu0
      %v4817 = vadd.f32 0.0, %v4816
      %v4818 = vpop.f32.mrb[0].mxu0
      %4819 = vmatprep.mubr.f32.mxu0 0.0
      %4820 = vmatmul.mubr.f32.gmra.mrb[0].mxu0 %v4737
      %v4821 = vpop.f32.mrb[0].mxu0
      %v4822 = vadd.f32 0.0, %v4821
      %v4823 = vpop.f32.mrb[0].mxu0
      %4824 = vmatprep.mubr.f32.mxu0 0.0
      %4825 = vmatmul.mubr.f32.gmra.mrb[0].mxu0 %v4740
      %v4826 = vpop.f32.mrb[0].mxu0
      %v4827 = vadd.f32 0.0, %v4826
      %v4828 = vpop.f32.mrb[0].mxu0
      %4829 = vmatprep.mubr.f32.mxu0 0.0
      %4830 = vmatmul.mubr.f32.gmra.mrb[0].mxu0 %v4743
      %v4831 = vpop.f32.mrb[0].mxu0
      %v4832 = vadd.f32 0.0, %v4831
      %v4833 = vpop.f32.mrb[0].mxu0
      %4834 = vdwg.mxu0
      %v4836 = vsel %vm250, %v4812, 0
      %v4839 = vsel %vm250, %v4817, 0
      %v4842 = vsel %vm250, %v4822, 0
      %v4845 = vsel %vm250, %v4827, 0
      %v4848 = vsel %vm250, %v4832, 0
      %4850 = vmatprep.subr.mxu0 0.0
      %4851 = vmatpush1.msra.mxu0 %v4726
      %4852 = vmatprep.subr.mxu0 0.0
      %4853 = vmatpush1.msra.mxu0 %v4727
      %4854 = vmatprep.subr.mxu0 0.0
      %4855 = vmatpush1.msra.mxu0 %v4728
      %4856 = vmatprep.subr.mxu0 0.0
      %4857 = vmatpush1.msra.mxu0 %v4729
      %4858 = vmatprep.subr.mxu0 0.0
      %4859 = vmatpush1.msra.mxu0 0.0
      %4860 = vmatprep.subr.mxu0 0.0
      %4861 = vmatpush1.msra.mxu0 0.0
      %4862 = vmatprep.subr.mxu0 0.0
      %4863 = vmatpush1.msra.mxu0 0.0
      %4864 = vmatprep.subr.mxu0 0.0
      %4865 = vmatpush1.msra.mxu0 0.0
      %4866 = vmatprep.subr.mxu0 0.0
      %4867 = vmatpush1.msra.mxu0 0.0
      %4868 = vmatprep.subr.mxu0 0.0
      %4869 = vmatpush1.msra.mxu0 0.0
      %4870 = vmatprep.subr.mxu0 0.0
      %4871 = vmatpush1.msra.mxu0 0.0
      %4872 = vmatprep.subr.mxu0 0.0
      %4873 = vmatpush1.msra.mxu0 0.0
      %4874 = vmatprep.subr.mxu0 0.0
      %4875 = vmatpush1.msra.mxu0 0.0
      %4876 = vmatprep.subr.mxu0 0.0
      %4877 = vmatpush1.msra.mxu0 0.0
      %4878 = vmatprep.subr.mxu0 0.0
      %4879 = vmatpush1.msra.mxu0 0.0
      %4880 = vmatprep.subr.mxu0 0.0
      %4881 = vmatpush1.msra.mxu0 0.0
      %4882 = vmatprep.subr.mxu0 0.0
      %4883 = vmatpush1.msra.mxu0 0.0
      %4884 = vmatprep.subr.mxu0 0.0
      %4885 = vmatpush1.msra.mxu0 0.0
      %4886 = vmatprep.subr.mxu0 0.0
      %4887 = vmatpush1.msra.mxu0 0.0
      %4888 = vmatprep.subr.mxu0 0.0
      %4889 = vmatpush1.msra.mxu0 0.0
      %4890 = vmatprep.subr.mxu0 0.0
      %4891 = vmatpush1.msra.mxu0 0.0
      %4892 = vmatprep.subr.mxu0 0.0
      %4893 = vmatpush1.msra.mxu0 0.0
      %4894 = vmatprep.subr.mxu0 0.0
      %4895 = vmatpush1.msra.mxu0 0.0
      %4896 = vmatprep.subr.mxu0 0.0
      %4897 = vmatpush1.msra.mxu0 0.0
      %4898 = vmatprep.subr.mxu0 0.0
      %4899 = vmatpush1.msra.mxu0 0.0
      %4900 = vmatprep.subr.mxu0 0.0
      %4901 = vmatpush1.msra.mxu0 0.0
      %4902 = vmatprep.subr.mxu0 0.0
      %4903 = vmatpush1.msra.mxu0 0.0
      %4904 = vmatprep.subr.mxu0 0.0
      %4905 = vmatpush1.msra.mxu0 0.0
      %4906 = vmatprep.subr.mxu0 0.0
      %4907 = vmatpush1.msra.mxu0 0.0
      %4908 = vmatprep.subr.mxu0 0.0
      %4909 = vmatpush1.msra.mxu0 0.0
      %4910 = vmatprep.subr.mxu0 0.0
      %4911 = vmatpush1.msra.mxu0 0.0
      %4912 = vmatprep.subr.mxu0 0.0
      %4913 = vmatpush1.msra.mxu0 0.0
      %4914 = vmatprep.mubr.f32.mxu0 0.0
      %4915 = vmatmul.mubr.f32.gmra.mrb[0].mxu0 %v4836
      %v4916 = vpop.f32.mrb[0].mxu0
      %v4917 = vadd.f32 0.0, %v4916
      %v4918 = vpop.f32.mrb[0].mxu0
      %4919 = vmatprep.mubr.f32.mxu0 0.0
      %4920 = vmatmul.mubr.f32.gmra.mrb[0].mxu0 %v4839
      %v4921 = vpop.f32.mrb[0].mxu0
      %v4922 = vadd.f32 0.0, %v4921
      %v4923 = vpop.f32.mrb[0].mxu0
      %4924 = vmatprep.mubr.f32.mxu0 0.0
      %4925 = vmatmul.mubr.f32.gmra.mrb[0].mxu0 %v4842
      %v4926 = vpop.f32.mrb[0].mxu0
      %v4927 = vadd.f32 0.0, %v4926
      %v4928 = vpop.f32.mrb[0].mxu0
      %4929 = vmatprep.mubr.f32.mxu0 0.0
      %4930 = vmatmul.mubr.f32.gmra.mrb[0].mxu0 %v4845
      %v4931 = vpop.f32.mrb[0].mxu0
      %v4932 = vadd.f32 0.0, %v4931
      %v4933 = vpop.f32.mrb[0].mxu0
      %4934 = vmatprep.mubr.f32.mxu0 0.0
      %4935 = vmatmul.mubr.f32.gmra.mrb[0].mxu0 %v4848
      %v4936 = vpop.f32.mrb[0].mxu0
      %v4937 = vadd.f32 0.0, %v4936
      %v4938 = vpop.f32.mrb[0].mxu0
      %4939 = vdwg.mxu0
      %4940 = vmatprep.subr.mxu0 0.0
      %4941 = vmatpush1.msra.mxu0 %v4711
      %4942 = vmatprep.subr.mxu0 0.0
      %4943 = vmatpush1.msra.mxu0 %v4712
      %4944 = vmatprep.subr.mxu0 0.0
      %4945 = vmatpush1.msra.mxu0 %v4713
      %4946 = vmatprep.subr.mxu0 0.0
      %4947 = vmatpush1.msra.mxu0 %v4714
      %4948 = vmatprep.subr.mxu0 0.0
      %4949 = vmatpush1.msra.mxu0 0.0
      %4950 = vmatprep.subr.mxu0 0.0
      %4951 = vmatpush1.msra.mxu0 0.0
      %4952 = vmatprep.subr.mxu0 0.0
      %4953 = vmatpush1.msra.mxu0 0.0
      %4954 = vmatprep.subr.mxu0 0.0
      %4955 = vmatpush1.msra.mxu0 0.0
      %4956 = vmatprep.subr.mxu0 0.0
      %4957 = vmatpush1.msra.mxu0 0.0
      %4958 = vmatprep.subr.mxu0 0.0
      %4959 = vmatpush1.msra.mxu0 0.0
      %4960 = vmatprep.subr.mxu0 0.0
      %4961 = vmatpush1.msra.mxu0 0.0
      %4962 = vmatprep.subr.mxu0 0.0
      %4963 = vmatpush1.msra.mxu0 0.0
      %4964 = vmatprep.subr.mxu0 0.0
      %4965 = vmatpush1.msra.mxu0 0.0
      %4966 = vmatprep.subr.mxu0 0.0
      %4967 = vmatpush1.msra.mxu0 0.0
      %4968 = vmatprep.subr.mxu0 0.0
      %4969 = vmatpush1.msra.mxu0 0.0
      %4970 = vmatprep.subr.mxu0 0.0
      %4971 = vmatpush1.msra.mxu0 0.0
      %4972 = vmatprep.subr.mxu0 0.0
      %4973 = vmatpush1.msra.mxu0 0.0
      %4974 = vmatprep.subr.mxu0 0.0
      %4975 = vmatpush1.msra.mxu0 0.0
      %4976 = vmatprep.subr.mxu0 0.0
      %4977 = vmatpush1.msra.mxu0 0.0
      %4978 = vmatprep.subr.mxu0 0.0
      %4979 = vmatpush1.msra.mxu0 0.0
      %4980 = vmatprep.subr.mxu0 0.0
      %4981 = vmatpush1.msra.mxu0 0.0
      %4982 = vmatprep.subr.mxu0 0.0
      %4983 = vmatpush1.msra.mxu0 0.0
      %4984 = vmatprep.subr.mxu0 0.0
      %4985 = vmatpush1.msra.mxu0 0.0
      %4986 = vmatprep.subr.mxu0 0.0
      %4987 = vmatpush1.msra.mxu0 0.0
      %4988 = vmatprep.subr.mxu0 0.0
      %4989 = vmatpush1.msra.mxu0 0.0
      %4990 = vmatprep.subr.mxu0 0.0
      %4991 = vmatpush1.msra.mxu0 0.0
      %4992 = vmatprep.subr.mxu0 0.0
      %4993 = vmatpush1.msra.mxu0 0.0
      %4994 = vmatprep.subr.mxu0 0.0
      %4995 = vmatpush1.msra.mxu0 0.0
      %4996 = vmatprep.subr.mxu0 0.0
      %4997 = vmatpush1.msra.mxu0 0.0
      %4998 = vmatprep.subr.mxu0 0.0
      %4999 = vmatpush1.msra.mxu0 0.0
      %5000 = vmatprep.subr.mxu0 0.0
      %5001 = vmatpush1.msra.mxu0 0.0
      %5002 = vmatprep.subr.mxu0 0.0
      %5003 = vmatpush1.msra.mxu0 0.0
      %5004 = vmatprep.mubr.f32.mxu0 0.0
      %5005 = vmatmul.mubr.f32.gmra.mrb[0].mxu0 %v4731
      %v5006 = vpop.f32.mrb[0].mxu0
      %v5007 = vadd.f32 0.0, %v5006
      %v5008 = vpop.f32.mrb[0].mxu0
      %5009 = vmatprep.mubr.f32.mxu0 0.0
      %5010 = vmatmul.mubr.f32.gmra.mrb[0].mxu0 %v4734
      %v5011 = vpop.f32.mrb[0].mxu0
      %v5012 = vadd.f32 0.0, %v5011
      %v5013 = vpop.f32.mrb[0].mxu0
      %5014 = vmatprep.mubr.f32.mxu0 0.0
      %5015 = vmatmul.mubr.f32.gmra.mrb[0].mxu0 %v4737
      %v5016 = vpop.f32.mrb[0].mxu0
      %v5017 = vadd.f32 0.0, %v5016
      %v5018 = vpop.f32.mrb[0].mxu0
      %5019 = vmatprep.mubr.f32.mxu0 0.0
      %5020 = vmatmul.mubr.f32.gmra.mrb[0].mxu0 %v4740
      %v5021 = vpop.f32.mrb[0].mxu0
      %v5022 = vadd.f32 0.0, %v5021
      %v5023 = vpop.f32.mrb[0].mxu0
      %5024 = vmatprep.mubr.f32.mxu0 0.0
      %5025 = vmatmul.mubr.f32.gmra.mrb[0].mxu0 %v4743
      %v5026 = vpop.f32.mrb[0].mxu0
      %v5027 = vadd.f32 0.0, %v5026
      %v5028 = vpop.f32.mrb[0].mxu0
      %5029 = vdwg.mxu0
      %v5031 = vsel %vm250, %v5007, 0
      %v5034 = vsel %vm250, %v5012, 0
      %v5037 = vsel %vm250, %v5017, 0
      %v5040 = vsel %vm250, %v5022, 0
      %v5043 = vsel %vm250, %v5027, 0
      %5045 = vmatprep.subr.mxu0 0.0
      %5046 = vmatpush1.msra.mxu0 %v4726
      %5047 = vmatprep.subr.mxu0 0.0
      %5048 = vmatpush1.msra.mxu0 %v4727
      %5049 = vmatprep.subr.mxu0 0.0
      %5050 = vmatpush1.msra.mxu0 %v4728
      %5051 = vmatprep.subr.mxu0 0.0
      %5052 = vmatpush1.msra.mxu0 %v4729
      %5053 = vmatprep.subr.mxu0 0.0
      %5054 = vmatpush1.msra.mxu0 0.0
      %5055 = vmatprep.subr.mxu0 0.0
      %5056 = vmatpush1.msra.mxu0 0.0
      %5057 = vmatprep.subr.mxu0 0.0
      %5058 = vmatpush1.msra.mxu0 0.0
      %5059 = vmatprep.subr.mxu0 0.0
      %5060 = vmatpush1.msra.mxu0 0.0
      %5061 = vmatprep.subr.mxu0 0.0
      %5062 = vmatpush1.msra.mxu0 0.0
      %5063 = vmatprep.subr.mxu0 0.0
      %5064 = vmatpush1.msra.mxu0 0.0
      %5065 = vmatprep.subr.mxu0 0.0
      %5066 = vmatpush1.msra.mxu0 0.0
      %5067 = vmatprep.subr.mxu0 0.0
      %5068 = vmatpush1.msra.mxu0 0.0
      %5069 = vmatprep.subr.mxu0 0.0
      %5070 = vmatpush1.msra.mxu0 0.0
      %5071 = vmatprep.subr.mxu0 0.0
      %5072 = vmatpush1.msra.mxu0 0.0
      %5073 = vmatprep.subr.mxu0 0.0
      %5074 = vmatpush1.msra.mxu0 0.0
      %5075 = vmatprep.subr.mxu0 0.0
      %5076 = vmatpush1.msra.mxu0 0.0
      %5077 = vmatprep.subr.mxu0 0.0
      %5078 = vmatpush1.msra.mxu0 0.0
      %5079 = vmatprep.subr.mxu0 0.0
      %5080 = vmatpush1.msra.mxu0 0.0
      %5081 = vmatprep.subr.mxu0 0.0
      %5082 = vmatpush1.msra.mxu0 0.0
      %5083 = vmatprep.subr.mxu0 0.0
      %5084 = vmatpush1.msra.mxu0 0.0
      %5085 = vmatprep.subr.mxu0 0.0
      %5086 = vmatpush1.msra.mxu0 0.0
      %5087 = vmatprep.subr.mxu0 0.0
      %5088 = vmatpush1.msra.mxu0 0.0
      %5089 = vmatprep.subr.mxu0 0.0
      %5090 = vmatpush1.msra.mxu0 0.0
      %5091 = vmatprep.subr.mxu0 0.0
      %5092 = vmatpush1.msra.mxu0 0.0
      %5093 = vmatprep.subr.mxu0 0.0
      %5094 = vmatpush1.msra.mxu0 0.0
      %5095 = vmatprep.subr.mxu0 0.0
      %5096 = vmatpush1.msra.mxu0 0.0
      %5097 = vmatprep.subr.mxu0 0.0
      %5098 = vmatpush1.msra.mxu0 0.0
      %5099 = vmatprep.subr.mxu0 0.0
      %5100 = vmatpush1.msra.mxu0 0.0
      %5101 = vmatprep.subr.mxu0 0.0
      %5102 = vmatpush1.msra.mxu0 0.0
      %5103 = vmatprep.subr.mxu0 0.0
      %5104 = vmatpush1.msra.mxu0 0.0
      %5105 = vmatprep.subr.mxu0 0.0
      %5106 = vmatpush1.msra.mxu0 0.0
      %5107 = vmatprep.subr.mxu0 0.0
      %5108 = vmatpush1.msra.mxu0 0.0
      %5109 = vmatprep.mubr.f32.mxu0 0.0
      %5110 = vmatmul.mubr.f32.gmra.mrb[0].mxu0 %v5031
      %v5111 = vpop.f32.mrb[0].mxu0
      %v5112 = vadd.f32 0.0, %v5111
      %v5113 = vpop.f32.mrb[0].mxu0
      %5114 = vmatprep.mubr.f32.mxu0 0.0
      %5115 = vmatmul.mubr.f32.gmra.mrb[0].mxu0 %v5034
      %v5116 = vpop.f32.mrb[0].mxu0
      %v5117 = vadd.f32 0.0, %v5116
      %v5118 = vpop.f32.mrb[0].mxu0
      %5119 = vmatprep.mubr.f32.mxu0 0.0
      %5120 = vmatmul.mubr.f32.gmra.mrb[0].mxu0 %v5037
      %v5121 = vpop.f32.mrb[0].mxu0
      %v5122 = vadd.f32 0.0, %v5121
      %v5123 = vpop.f32.mrb[0].mxu0
      %5124 = vmatprep.mubr.f32.mxu0 0.0
      %5125 = vmatmul.mubr.f32.gmra.mrb[0].mxu0 %v5040
      %v5126 = vpop.f32.mrb[0].mxu0
      %v5127 = vadd.f32 0.0, %v5126
      %v5128 = vpop.f32.mrb[0].mxu0
      %5129 = vmatprep.mubr.f32.mxu0 0.0
      %5130 = vmatmul.mubr.f32.gmra.mrb[0].mxu0 %v5043
      %v5131 = vpop.f32.mrb[0].mxu0
      %v5132 = vadd.f32 0.0, %v5131
      %v5133 = vpop.f32.mrb[0].mxu0
      %5134 = vdwg.mxu0
      %5135 = vmatprep.subr.mxu0 0.0
      %5136 = vmatpush1.msra.mxu0 %v4715
      %5137 = vmatprep.subr.mxu0 0.0
      %5138 = vmatpush1.msra.mxu0 %v4716
      %5139 = vmatprep.subr.mxu0 0.0
      %5140 = vmatpush1.msra.mxu0 %v4717
      %5141 = vmatprep.subr.mxu0 0.0
      %5142 = vmatpush1.msra.mxu0 %v4718
      %5143 = vmatprep.subr.mxu0 0.0
      %5144 = vmatpush1.msra.mxu0 0.0
      %5145 = vmatprep.subr.mxu0 0.0
      %5146 = vmatpush1.msra.mxu0 0.0
      %5147 = vmatprep.subr.mxu0 0.0
      %5148 = vmatpush1.msra.mxu0 0.0
      %5149 = vmatprep.subr.mxu0 0.0
      %5150 = vmatpush1.msra.mxu0 0.0
      %5151 = vmatprep.subr.mxu0 0.0
      %5152 = vmatpush1.msra.mxu0 0.0
      %5153 = vmatprep.subr.mxu0 0.0
      %5154 = vmatpush1.msra.mxu0 0.0
      %5155 = vmatprep.subr.mxu0 0.0
      %5156 = vmatpush1.msra.mxu0 0.0
      %5157 = vmatprep.subr.mxu0 0.0
      %5158 = vmatpush1.msra.mxu0 0.0
      %5159 = vmatprep.subr.mxu0 0.0
      %5160 = vmatpush1.msra.mxu0 0.0
      %5161 = vmatprep.subr.mxu0 0.0
      %5162 = vmatpush1.msra.mxu0 0.0
      %5163 = vmatprep.subr.mxu0 0.0
      %5164 = vmatpush1.msra.mxu0 0.0
      %5165 = vmatprep.subr.mxu0 0.0
      %5166 = vmatpush1.msra.mxu0 0.0
      %5167 = vmatprep.subr.mxu0 0.0
      %5168 = vmatpush1.msra.mxu0 0.0
      %5169 = vmatprep.subr.mxu0 0.0
      %5170 = vmatpush1.msra.mxu0 0.0
      %5171 = vmatprep.subr.mxu0 0.0
      %5172 = vmatpush1.msra.mxu0 0.0
      %5173 = vmatprep.subr.mxu0 0.0
      %5174 = vmatpush1.msra.mxu0 0.0
      %5175 = vmatprep.subr.mxu0 0.0
      %5176 = vmatpush1.msra.mxu0 0.0
      %5177 = vmatprep.subr.mxu0 0.0
      %5178 = vmatpush1.msra.mxu0 0.0
      %5179 = vmatprep.subr.mxu0 0.0
      %5180 = vmatpush1.msra.mxu0 0.0
      %5181 = vmatprep.subr.mxu0 0.0
      %5182 = vmatpush1.msra.mxu0 0.0
      %5183 = vmatprep.subr.mxu0 0.0
      %5184 = vmatpush1.msra.mxu0 0.0
      %5185 = vmatprep.subr.mxu0 0.0
      %5186 = vmatpush1.msra.mxu0 0.0
      %5187 = vmatprep.subr.mxu0 0.0
      %5188 = vmatpush1.msra.mxu0 0.0
      %5189 = vmatprep.subr.mxu0 0.0
      %5190 = vmatpush1.msra.mxu0 0.0
      %5191 = vmatprep.subr.mxu0 0.0
      %5192 = vmatpush1.msra.mxu0 0.0
      %5193 = vmatprep.subr.mxu0 0.0
      %5194 = vmatpush1.msra.mxu0 0.0
      %5195 = vmatprep.subr.mxu0 0.0
      %5196 = vmatpush1.msra.mxu0 0.0
      %5197 = vmatprep.subr.mxu0 0.0
      %5198 = vmatpush1.msra.mxu0 0.0
      %5199 = vmatprep.mubr.f32.mxu0 0.0
      %5200 = vmatmul.mubr.f32.gmra.mrb[0].mxu0 %v4731
      %v5201 = vpop.f32.mrb[0].mxu0
      %v5202 = vadd.f32 0.0, %v5201
      %v5203 = vpop.f32.mrb[0].mxu0
      %5204 = vmatprep.mubr.f32.mxu0 0.0
      %5205 = vmatmul.mubr.f32.gmra.mrb[0].mxu0 %v4734
      %v5206 = vpop.f32.mrb[0].mxu0
      %v5207 = vadd.f32 0.0, %v5206
      %v5208 = vpop.f32.mrb[0].mxu0
      %5209 = vmatprep.mubr.f32.mxu0 0.0
      %5210 = vmatmul.mubr.f32.gmra.mrb[0].mxu0 %v4737
      %v5211 = vpop.f32.mrb[0].mxu0
      %v5212 = vadd.f32 0.0, %v5211
      %v5213 = vpop.f32.mrb[0].mxu0
      %5214 = vmatprep.mubr.f32.mxu0 0.0
      %5215 = vmatmul.mubr.f32.gmra.mrb[0].mxu0 %v4740
      %v5216 = vpop.f32.mrb[0].mxu0
      %v5217 = vadd.f32 0.0, %v5216
      %v5218 = vpop.f32.mrb[0].mxu0
      %5219 = vmatprep.mubr.f32.mxu0 0.0
      %5220 = vmatmul.mubr.f32.gmra.mrb[0].mxu0 %v4743
      %v5221 = vpop.f32.mrb[0].mxu0
      %v5222 = vadd.f32 0.0, %v5221
      %v5223 = vpop.f32.mrb[0].mxu0
      %5224 = vdwg.mxu0
      %v5226 = vsel %vm250, %v5202, 0
      %v5229 = vsel %vm250, %v5207, 0
      %v5232 = vsel %vm250, %v5212, 0
      %v5235 = vsel %vm250, %v5217, 0
      %v5238 = vsel %vm250, %v5222, 0
      %5240 = vmatprep.subr.mxu0 0.0
      %5241 = vmatpush1.msra.mxu0 %v4726
      %5242 = vmatprep.subr.mxu0 0.0
      %5243 = vmatpush1.msra.mxu0 %v4727
      %5244 = vmatprep.subr.mxu0 0.0
      %5245 = vmatpush1.msra.mxu0 %v4728
      %5246 = vmatprep.subr.mxu0 0.0
      %5247 = vmatpush1.msra.mxu0 %v4729
      %5248 = vmatprep.subr.mxu0 0.0
      %5249 = vmatpush1.msra.mxu0 0.0
      %5250 = vmatprep.subr.mxu0 0.0
      %5251 = vmatpush1.msra.mxu0 0.0
      %5252 = vmatprep.subr.mxu0 0.0
      %5253 = vmatpush1.msra.mxu0 0.0
      %5254 = vmatprep.subr.mxu0 0.0
      %5255 = vmatpush1.msra.mxu0 0.0
      %5256 = vmatprep.subr.mxu0 0.0
      %5257 = vmatpush1.msra.mxu0 0.0
      %5258 = vmatprep.subr.mxu0 0.0
      %5259 = vmatpush1.msra.mxu0 0.0
      %5260 = vmatprep.subr.mxu0 0.0
      %5261 = vmatpush1.msra.mxu0 0.0
      %5262 = vmatprep.subr.mxu0 0.0
      %5263 = vmatpush1.msra.mxu0 0.0
      %5264 = vmatprep.subr.mxu0 0.0
      %5265 = vmatpush1.msra.mxu0 0.0
      %5266 = vmatprep.subr.mxu0 0.0
      %5267 = vmatpush1.msra.mxu0 0.0
      %5268 = vmatprep.subr.mxu0 0.0
      %5269 = vmatpush1.msra.mxu0 0.0
      %5270 = vmatprep.subr.mxu0 0.0
      %5271 = vmatpush1.msra.mxu0 0.0
      %5272 = vmatprep.subr.mxu0 0.0
      %5273 = vmatpush1.msra.mxu0 0.0
      %5274 = vmatprep.subr.mxu0 0.0
      %5275 = vmatpush1.msra.mxu0 0.0
      %5276 = vmatprep.subr.mxu0 0.0
      %5277 = vmatpush1.msra.mxu0 0.0
      %5278 = vmatprep.subr.mxu0 0.0
      %5279 = vmatpush1.msra.mxu0 0.0
      %5280 = vmatprep.subr.mxu0 0.0
      %5281 = vmatpush1.msra.mxu0 0.0
      %5282 = vmatprep.subr.mxu0 0.0
      %5283 = vmatpush1.msra.mxu0 0.0
      %5284 = vmatprep.subr.mxu0 0.0
      %5285 = vmatpush1.msra.mxu0 0.0
      %5286 = vmatprep.subr.mxu0 0.0
      %5287 = vmatpush1.msra.mxu0 0.0
      %5288 = vmatprep.subr.mxu0 0.0
      %5289 = vmatpush1.msra.mxu0 0.0
      %5290 = vmatprep.subr.mxu0 0.0
      %5291 = vmatpush1.msra.mxu0 0.0
      %5292 = vmatprep.subr.mxu0 0.0
      %5293 = vmatpush1.msra.mxu0 0.0
      %5294 = vmatprep.subr.mxu0 0.0
      %5295 = vmatpush1.msra.mxu0 0.0
      %5296 = vmatprep.subr.mxu0 0.0
      %5297 = vmatpush1.msra.mxu0 0.0
      %5298 = vmatprep.subr.mxu0 0.0
      %5299 = vmatpush1.msra.mxu0 0.0
      %5300 = vmatprep.subr.mxu0 0.0
      %5301 = vmatpush1.msra.mxu0 0.0
      %5302 = vmatprep.subr.mxu0 0.0
      %5303 = vmatpush1.msra.mxu0 0.0
      %5304 = vmatprep.mubr.f32.mxu0 0.0
      %5305 = vmatmul.mubr.f32.gmra.mrb[0].mxu0 %v5226
      %v5306 = vpop.f32.mrb[0].mxu0
      %v5307 = vadd.f32 0.0, %v5306
      %v5308 = vpop.f32.mrb[0].mxu0
      %5309 = vmatprep.mubr.f32.mxu0 0.0
      %5310 = vmatmul.mubr.f32.gmra.mrb[0].mxu0 %v5229
      %v5311 = vpop.f32.mrb[0].mxu0
      %v5312 = vadd.f32 0.0, %v5311
      %v5313 = vpop.f32.mrb[0].mxu0
      %5314 = vmatprep.mubr.f32.mxu0 0.0
      %5315 = vmatmul.mubr.f32.gmra.mrb[0].mxu0 %v5232
      %v5316 = vpop.f32.mrb[0].mxu0
      %v5317 = vadd.f32 0.0, %v5316
      %v5318 = vpop.f32.mrb[0].mxu0
      %5319 = vmatprep.mubr.f32.mxu0 0.0
      %5320 = vmatmul.mubr.f32.gmra.mrb[0].mxu0 %v5235
      %v5321 = vpop.f32.mrb[0].mxu0
      %v5322 = vadd.f32 0.0, %v5321
      %v5323 = vpop.f32.mrb[0].mxu0
      %5324 = vmatprep.mubr.f32.mxu0 0.0
      %5325 = vmatmul.mubr.f32.gmra.mrb[0].mxu0 %v5238
      %v5326 = vpop.f32.mrb[0].mxu0
      %v5327 = vadd.f32 0.0, %v5326
      %v5328 = vpop.f32.mrb[0].mxu0
      %5329 = vdwg.mxu0
      %s5330 = scalar_lea.vmem %s227, 840
      %5331 = vst [vmem:[%s5330] sm:$0xff] %v4917
      %5332 = vst [vmem:[%s5330 + $0x8] sm:$0xff] %v4922
      %5333 = vst [vmem:[%s5330 + $0x10] sm:$0xff] %v4927
      %5334 = vst [vmem:[%s5330 + $0x18] sm:$0xff] %v4932
      %5335 = vst [vmem:[%s5330 + $0x20] sm:$0xff] %v4937
      %5336 = vst [vmem:[%s5330 + $0x28] sm:$0xff] %v5112
      %5337 = vst [vmem:[%s5330 + $0x30] sm:$0xff] %v5117
      %5338 = vst [vmem:[%s5330 + $0x38] sm:$0xff] %v5122
      %5339 = vst [vmem:[%s5330 + $0x40] sm:$0xff] %v5127
      %5340 = vst [vmem:[%s5330 + $0x48] sm:$0xff] %v5132
      %5341 = vst [vmem:[%s5330 + $0x50] sm:$0xff] %v5307
      %5342 = vst [vmem:[%s5330 + $0x58] sm:$0xff] %v5312
      %5343 = vst [vmem:[%s5330 + $0x60] sm:$0xff] %v5317
      %5344 = vst [vmem:[%s5330 + $0x68] sm:$0xff] %v5322
      %5345 = vst [vmem:[%s5330 + $0x70] sm:$0xff] %v5327
      %s5346 = smul.u32 8, %s14
      %p5347 = scmp.lt.s32.totalorder %s5346, 15
      %s5348 = scalar_select %p5347, %s5346, 15
      %s5349 = smul.addr %s5348, 15
      %s5350 = smul.addr %s5349, 8
      %s5351 = scalar_lea.vmem %s3, %s5350
      // Predicated region
      $region33: #{upsampler_forward.1} parent=31 // pred_check
        %p5352 = pneg %p110
      $region34: #{upsampler_forward.1} parent=31 // pred_check_branch
        %5354 = sbr.rel (%p5352) target = $region36
      $region35: #{upsampler_forward.1} parent=31 // pred_region
        %s5355 = smul.u32 8, %s14
      $region36: #{upsampler_forward.1} parent=31 // pred_fallthru
        _
    $region32: #{upsampler_forward.1} parent=5 // pred_fallthru
      _
    %p5356 = scmp.le.s32.totalorder 2, %s9
    // Predicated region
    $region37: #{upsampler_forward.1} parent=5 // pred_check
      %p5357 = pneg %p5356
    $region38: #{upsampler_forward.1} parent=5 // pred_check_branch
      %5359 = sbr.rel (%p5357) target = $region40
    $region39: #{upsampler_forward.1} parent=5 // pred_region
      %s5360 = ssub.s32 %s9, 2
      // Predicated region
      $region41: #{upsampler_forward.1} parent=39 // pred_check
        %p5361 = pneg %p116
      $region42: #{upsampler_forward.1} parent=39 // pred_check_branch
        %5363 = sbr.rel (%p5361) target = $region44
      $region43: #{upsampler_forward.1} parent=39 // pred_region
        %s5364 = smul.u32 8, %s15
        %p5365 = scmp.lt.s32.totalorder %s5364, 15
        %s5366 = scalar_select %p5365, %s5364, 15
        %s5367 = smul.addr %s5366, 15
        %s5368 = smul.addr %s5367, 8
        %s5369 = scalar_lea.vmem %s3, %s5368
      $region44: #{upsampler_forward.1} parent=39 // pred_fallthru
        _
    $region40: #{upsampler_forward.1} parent=5 // pred_fallthru
      _
  $region6: #{upsampler_forward.1} parent=0 // loop_footer
    %s13 = sadd.s32 1, %s9
  $region7: #{upsampler_forward.1} parent=0 // loop_footer_branch
    %8 = sbr.rel target = $region3
  $region8: #{upsampler_forward.1} parent=0 // loop_exit
    _

</llo_original>
